<compile_context>
chip_gen: v5e
topology: v5e:2x2
jax: 0.10.0
libtpu: 0.0.40
codegen_flags: <defaults>
</compile_context>

<pallas_src>
import numpy as np
import jax
import jax.numpy as jnp
from jax.experimental import pallas as pl
from jax.experimental.pallas import tpu as pltpu

# efficient-KAN defaults
GRID_SIZE = 5
SPLINE_ORDER = 3
N_BASES = GRID_SIZE + SPLINE_ORDER            # 8 cubic B-spline bases per input feature
N_KNOTS = GRID_SIZE + 2 * SPLINE_ORDER + 1    # 12 knots
GRID_RANGE = (-1.0, 1.0)
H = (GRID_RANGE[1] - GRID_RANGE[0]) / GRID_SIZE

# Uniform knot vector -> compile-time constants (no grid tensor shipped to the kernel;
# Cox-de Boor denominators are exactly k*H, so divisions become constant multiplies).
KNOTS = (np.arange(-SPLINE_ORDER, GRID_SIZE + SPLINE_ORDER + 1, dtype=np.float32)
         * np.float32(H) + np.float32(GRID_RANGE[0]))                    # (12,)
INV_DENOM = [None] + [np.float32(1.0 / (k * H)) for k in range(1, SPLINE_ORDER + 1)]


# ----------------------------- kernel ---------------------------------------
def _silu_and_spline_slab(x):
    """Feature-major x: (In, B) -> (9*In, B) slab [SiLU(x); B_0(x); ...; B_7(x)]."""
    silu_x = x * jax.nn.sigmoid(x)                      # sigmoid -> EUP (free slot)
    # Order-0 indicator bases: 12 compares total; ge is element-wise monotone in i,
    # so (x>=K[i]) & (x<K[i+1]) == ge[i] - ge[i+1].
    ge = [(x >= float(KNOTS[i])).astype(jnp.float32) for i in range(N_KNOTS)]
    bases = [ge[i] - ge[i + 1] for i in range(N_KNOTS - 1)]
    # Cox-de Boor recursion; uniform grid -> hoist xi = x*inv, fold knot*inv constants.
    for k in range(1, SPLINE_ORDER + 1):
        inv = float(INV_DENOM[k])
        xi = x * inv
        c = [float(KNOTS[i]) * inv for i in range(N_KNOTS)]
        bases = [(xi - c[i]) * bases[i] + (c[i + k + 1] - xi) * bases[i + 1]
                 for i in range(len(bases) - 1)]
    # Concat along axis 0: every block height (In) is a multiple of 8 sublanes.
    return jnp.concatenate([silu_x] + bases, axis=0)


def kan_critic_kernel(x_ref, w0_ref, w1_ref, w2_ref, w3_ref, out_ref):
    """All 4 KANLinear layers fused; activations stay feature-major (In, B) in VMEM/vregs."""
    x = x_ref[...]                                                    # (In, Bb) f32
    for w_ref in (w0_ref, w1_ref, w2_ref, w3_ref):
        slab = _silu_and_spline_slab(x).astype(jnp.bfloat16)          # (9*In, Bb) bf16
        x = jnp.dot(w_ref[...], slab, preferred_element_type=jnp.float32)  # (Out, Bb) f32
    out_ref[...] = x                                                  # (1, Bb) lane-dense


# ----------------------------- wrapper ---------------------------------------
def _round_up(x, m):
    return -(-x // m) * m


def kan_critic_forward(state, packed_weights, *, block_b=1024):
    """Critic value for `state` (B, input_dims) -> (B, 1)."""
    w0, w1, w2, w3 = packed_weights
    xt = state.astype(jnp.float32).T                  # feature-major (In, B), batch in lanes
    in_f, b = xt.shape

    vmem = pl.BlockSpec(memory_space=pltpu.MemorySpace.VMEM)

    if b <= 256:
        # Toy / small batch: single body invocation, everything fully VMEM-resident.
        out = pl.pallas_call(
            kan_critic_kernel,
            out_shape=jax.ShapeDtypeStruct((1, b), jnp.float32),
            in_specs=[vmem, vmem, vmem, vmem, vmem],
            out_specs=vmem,
        )(xt, w0, w1, w2, w3)
        return out.T                                   # (B, 1)

    # Realistic PPO batch: tile the batch (lane) axis.  Cap block_b so the grid has
    # >= 2 blocks (v7x: "parallel" axis shards across its 2 TensorCores).  Weights map
    # to block (0, 0): DMA'd once, VMEM-resident across grid steps.
    block_b = int(min(block_b, max(128, _round_up(-(-b // 2), 128))))
    n_blocks = -(-b // block_b)
    bp = n_blocks * block_b
    if bp != b:
        xt = jnp.pad(xt, ((0, 0), (0, bp - b)))

    out = pl.pallas_call(
        kan_critic_kernel,
        out_shape=jax.ShapeDtypeStruct((1, bp), jnp.float32),
        grid=(n_blocks,),
        in_specs=[
            pl.BlockSpec((in_f, block_b), lambda i: (0, i)),
            pl.BlockSpec(w0.shape, lambda i: (0, 0)),
            pl.BlockSpec(w1.shape, lambda i: (0, 0)),
            pl.BlockSpec(w2.shape, lambda i: (0, 0)),
            pl.BlockSpec(w3.shape, lambda i: (0, 0)),
        ],
        out_specs=pl.BlockSpec((1, block_b), lambda i: (0, i)),
        compiler_params=pltpu.CompilerParams(
            dimension_semantics=("parallel",),
            vmem_limit_bytes=32 * 1024 * 1024,   # explicit headroom (v5e default is 16 MiB)
        ),
    )(xt, w0, w1, w2, w3)
    return out[:, :b].T                               # (B, 1)


kan_critic_forward_jit = jax.jit(kan_critic_forward)


# ----------------------------- parameters ------------------------------------
def init_kan_linear_params(key, in_f, out_f):
    """Deterministic synthetic KANLinear parameters in torch-like layout."""
    k1, k2, k3 = jax.random.split(key, 3)
    scale = np.float32(1.0 / np.sqrt(in_f))
    base_w = jax.random.uniform(k1, (out_f, in_f), jnp.float32, -1.0, 1.0) * scale
    spline_w = jax.random.normal(k2, (out_f, in_f, N_BASES), jnp.float32) * 0.1
    spline_scaler = jax.random.uniform(k3, (out_f, in_f), jnp.float32, -1.0, 1.0) * scale
    return {"base_w": base_w, "spline_w": spline_w, "spline_scaler": spline_scaler}


def init_kan_critic_params(key, input_dims, fc1_dims, fc2_dims):
    # critic = KANLayer([input_dims, fc1, fc2]) ; KANLayer([fc2, 64, 1])
    dims = [(input_dims, fc1_dims), (fc1_dims, fc2_dims), (fc2_dims, 64), (64, 1)]
    keys = jax.random.split(key, len(dims))
    return [init_kan_linear_params(k, i, o) for k, (i, o) in zip(keys, dims)]


def pack_layer(p):
    """Pack base + scaled-spline weights into one (Out, 9*In) bf16 MXU operand."""
    scaled = p["spline_w"] * p["spline_scaler"][:, :, None]             # (Out, In, J)
    blocks = [p["base_w"]] + [scaled[:, :, j] for j in range(N_BASES)]  # 9 x (Out, In)
    return jnp.concatenate(blocks, axis=1).astype(jnp.bfloat16)         # (Out, 9*In)


def pack_critic_params(raw_params):
    return tuple(pack_layer(p) for p in raw_params)


# ------------------------- pure-JAX reference (sanity only) -------------------
def _ref_kan_linear(x, p):
    grid = jnp.broadcast_to(jnp.asarray(KNOTS)[None, :], (x.shape[1], N_KNOTS))  # (In, 12)
    base_out = (x * jax.nn.sigmoid(x)) @ p["base_w"].T
    xe = x[:, :, None]
    bases = ((xe >= grid[None, :, :-1]) & (xe < grid[None, :, 1:])).astype(jnp.float32)
    for k in range(1, SPLINE_ORDER + 1):
        bases = ((xe - grid[None, :, :-(k + 1)])
                 / (grid[None, :, k:-1] - grid[None, :, :-(k + 1)]) * bases[:, :, :-1]
                 + (grid[None, :, k + 1:] - xe)
                 / (grid[None, :, k + 1:] - grid[None, :, 1:-k]) * bases[:, :, 1:])
    scaled = p["spline_w"] * p["spline_scaler"][:, :, None]             # (Out, In, J)
    spline_out = bases.reshape(x.shape[0], -1) @ scaled.reshape(scaled.shape[0], -1).T
    return base_out + spline_out


def _ref_forward(state, raw_params):
    x = state.astype(jnp.float32)
    for p in raw_params:
        x = _ref_kan_linear(x, p)
    return x


# ----------------------------------- main -------------------------------------
if __name__ == "__main__":
    key = jax.random.PRNGKey(0)
    k_param, k_state, k_state_big = jax.random.split(key, 3)

    batch, input_dims, fc1_dims, fc2_dims = 4, 8, 64, 32
    raw_params = init_kan_critic_params(k_param, input_dims, fc1_dims, fc2_dims)
    packed = pack_critic_params(raw_params)

    # Small batch: single-block, no-grid path.
    state = jax.random.normal(k_state, (batch, input_dims), dtype=jnp.float32)
    value = kan_critic_forward_jit(state, packed)
    jax.block_until_ready(value)
    assert value.shape == (batch, 1) and value.dtype == jnp.float32
    ref = _ref_forward(state, raw_params)
    assert jnp.allclose(value, ref, atol=5e-2, rtol=5e-2), (value, ref)

    # Larger batch: exercises the batch-tiled ("parallel") grid path with padding
    # (block_b capped so n_blocks >= 2).
    big_state = jax.random.normal(k_state_big, (600, input_dims), dtype=jnp.float32)
    big_value = kan_critic_forward_jit(big_state, packed)
    jax.block_until_ready(big_value)
    assert big_value.shape == (600, 1)
    ref_big = _ref_forward(big_state, raw_params)
    assert jnp.allclose(big_value, ref_big, atol=5e-2, rtol=5e-2)

    print("KERNEL_OK")
</pallas_src>

<mosaic_0001>
module attributes {stable_mosaic.version = 11 : i64} {
  func.func @kan_critic_kernel(%arg0: memref<8x4xf32, #tpu.memory_space<vmem>>, %arg1: memref<64x72xbf16, #tpu.memory_space<vmem>>, %arg2: memref<32x576xbf16, #tpu.memory_space<vmem>>, %arg3: memref<64x288xbf16, #tpu.memory_space<vmem>>, %arg4: memref<1x576xbf16, #tpu.memory_space<vmem>>, %arg5: memref<1x4xf32, #tpu.memory_space<vmem>>) attributes {dimension_semantics = [], scalar_prefetch = 0 : i64, scratch_operands = 0 : i64, tpu.core_type = #tpu.core_type<tc>} {
    %c0 = arith.constant 0 : index
    %c0_0 = arith.constant 0 : index
    %0 = vector.load %arg0[%c0, %c0_0] : memref<8x4xf32, #tpu.memory_space<vmem>>, vector<8x4xf32>
    %1 = arith.negf %0 : vector<8x4xf32>
    %2 = math.exp %1 : vector<8x4xf32>
    %cst = arith.constant 1.000000e+00 : f32
    %3 = vector.broadcast %cst : f32 to vector<8x4xf32>
    %4 = arith.addf %3, %2 : vector<8x4xf32>
    %5 = arith.divf %3, %4 : vector<8x4xf32>
    %6 = arith.mulf %0, %5 : vector<8x4xf32>
    %cst_1 = arith.constant -2.200000e+00 : f32
    %7 = vector.broadcast %cst_1 : f32 to vector<8x4xf32>
    %8 = arith.cmpf oge, %0, %7 : vector<8x4xf32>
    %9 = arith.extui %8 : vector<8x4xi1> to vector<8x4xi32>
    %10 = arith.sitofp %9 : vector<8x4xi32> to vector<8x4xf32>
    %cst_2 = arith.constant -1.800000e+00 : f32
    %11 = vector.broadcast %cst_2 : f32 to vector<8x4xf32>
    %12 = arith.cmpf oge, %0, %11 : vector<8x4xf32>
    %13 = arith.extui %12 : vector<8x4xi1> to vector<8x4xi32>
    %14 = arith.sitofp %13 : vector<8x4xi32> to vector<8x4xf32>
    %cst_3 = arith.constant -1.400000e+00 : f32
    %15 = vector.broadcast %cst_3 : f32 to vector<8x4xf32>
    %16 = arith.cmpf oge, %0, %15 : vector<8x4xf32>
    %17 = arith.extui %16 : vector<8x4xi1> to vector<8x4xi32>
    %18 = arith.sitofp %17 : vector<8x4xi32> to vector<8x4xf32>
    %cst_4 = arith.constant -1.000000e+00 : f32
    %19 = vector.broadcast %cst_4 : f32 to vector<8x4xf32>
    %20 = arith.cmpf oge, %0, %19 : vector<8x4xf32>
    %21 = arith.extui %20 : vector<8x4xi1> to vector<8x4xi32>
    %22 = arith.sitofp %21 : vector<8x4xi32> to vector<8x4xf32>
    %cst_5 = arith.constant -6.000000e-01 : f32
    %23 = vector.broadcast %cst_5 : f32 to vector<8x4xf32>
    %24 = arith.cmpf oge, %0, %23 : vector<8x4xf32>
    %25 = arith.extui %24 : vector<8x4xi1> to vector<8x4xi32>
    %26 = arith.sitofp %25 : vector<8x4xi32> to vector<8x4xf32>
    %cst_6 = arith.constant -0.199999988 : f32
    %27 = vector.broadcast %cst_6 : f32 to vector<8x4xf32>
    %28 = arith.cmpf oge, %0, %27 : vector<8x4xf32>
    %29 = arith.extui %28 : vector<8x4xi1> to vector<8x4xi32>
    %30 = arith.sitofp %29 : vector<8x4xi32> to vector<8x4xf32>
    %cst_7 = arith.constant 0.200000048 : f32
    %31 = vector.broadcast %cst_7 : f32 to vector<8x4xf32>
    %32 = arith.cmpf oge, %0, %31 : vector<8x4xf32>
    %33 = arith.extui %32 : vector<8x4xi1> to vector<8x4xi32>
    %34 = arith.sitofp %33 : vector<8x4xi32> to vector<8x4xf32>
    %cst_8 = arith.constant 6.000000e-01 : f32
    %35 = vector.broadcast %cst_8 : f32 to vector<8x4xf32>
    %36 = arith.cmpf oge, %0, %35 : vector<8x4xf32>
    %37 = arith.extui %36 : vector<8x4xi1> to vector<8x4xi32>
    %38 = arith.sitofp %37 : vector<8x4xi32> to vector<8x4xf32>
    %cst_9 = arith.constant 1.000000e+00 : f32
    %39 = vector.broadcast %cst_9 : f32 to vector<8x4xf32>
    %40 = arith.cmpf oge, %0, %39 : vector<8x4xf32>
    %41 = arith.extui %40 : vector<8x4xi1> to vector<8x4xi32>
    %42 = arith.sitofp %41 : vector<8x4xi32> to vector<8x4xf32>
    %cst_10 = arith.constant 1.4000001 : f32
    %43 = vector.broadcast %cst_10 : f32 to vector<8x4xf32>
    %44 = arith.cmpf oge, %0, %43 : vector<8x4xf32>
    %45 = arith.extui %44 : vector<8x4xi1> to vector<8x4xi32>
    %46 = arith.sitofp %45 : vector<8x4xi32> to vector<8x4xf32>
    %cst_11 = arith.constant 1.800000e+00 : f32
    %47 = vector.broadcast %cst_11 : f32 to vector<8x4xf32>
    %48 = arith.cmpf oge, %0, %47 : vector<8x4xf32>
    %49 = arith.extui %48 : vector<8x4xi1> to vector<8x4xi32>
    %50 = arith.sitofp %49 : vector<8x4xi32> to vector<8x4xf32>
    %cst_12 = arith.constant 2.200000e+00 : f32
    %51 = vector.broadcast %cst_12 : f32 to vector<8x4xf32>
    %52 = arith.cmpf oge, %0, %51 : vector<8x4xf32>
    %53 = arith.extui %52 : vector<8x4xi1> to vector<8x4xi32>
    %54 = arith.sitofp %53 : vector<8x4xi32> to vector<8x4xf32>
    %55 = arith.subf %10, %14 : vector<8x4xf32>
    %56 = arith.subf %14, %18 : vector<8x4xf32>
    %57 = arith.subf %18, %22 : vector<8x4xf32>
    %58 = arith.subf %22, %26 : vector<8x4xf32>
    %59 = arith.subf %26, %30 : vector<8x4xf32>
    %60 = arith.subf %30, %34 : vector<8x4xf32>
    %61 = arith.subf %34, %38 : vector<8x4xf32>
    %62 = arith.subf %38, %42 : vector<8x4xf32>
    %63 = arith.subf %42, %46 : vector<8x4xf32>
    %64 = arith.subf %46, %50 : vector<8x4xf32>
    %65 = arith.subf %50, %54 : vector<8x4xf32>
    %cst_13 = arith.constant 2.500000e+00 : f32
    %66 = vector.broadcast %cst_13 : f32 to vector<8x4xf32>
    %67 = arith.mulf %0, %66 : vector<8x4xf32>
    %cst_14 = arith.constant -5.500000e+00 : f32
    %68 = vector.broadcast %cst_14 : f32 to vector<8x4xf32>
    %69 = arith.subf %67, %68 : vector<8x4xf32>
    %70 = arith.mulf %69, %55 : vector<8x4xf32>
    %cst_15 = arith.constant -3.500000e+00 : f32
    %71 = vector.broadcast %cst_15 : f32 to vector<8x4xf32>
    %72 = arith.subf %71, %67 : vector<8x4xf32>
    %73 = arith.mulf %72, %56 : vector<8x4xf32>
    %74 = arith.addf %70, %73 : vector<8x4xf32>
    %cst_16 = arith.constant -4.500000e+00 : f32
    %75 = vector.broadcast %cst_16 : f32 to vector<8x4xf32>
    %76 = arith.subf %67, %75 : vector<8x4xf32>
    %77 = arith.mulf %76, %56 : vector<8x4xf32>
    %cst_17 = arith.constant -2.500000e+00 : f32
    %78 = vector.broadcast %cst_17 : f32 to vector<8x4xf32>
    %79 = arith.subf %78, %67 : vector<8x4xf32>
    %80 = arith.mulf %79, %57 : vector<8x4xf32>
    %81 = arith.addf %77, %80 : vector<8x4xf32>
    %cst_18 = arith.constant -3.500000e+00 : f32
    %82 = vector.broadcast %cst_18 : f32 to vector<8x4xf32>
    %83 = arith.subf %67, %82 : vector<8x4xf32>
    %84 = arith.mulf %83, %57 : vector<8x4xf32>
    %cst_19 = arith.constant -1.500000e+00 : f32
    %85 = vector.broadcast %cst_19 : f32 to vector<8x4xf32>
    %86 = arith.subf %85, %67 : vector<8x4xf32>
    %87 = arith.mulf %86, %58 : vector<8x4xf32>
    %88 = arith.addf %84, %87 : vector<8x4xf32>
    %cst_20 = arith.constant -2.500000e+00 : f32
    %89 = vector.broadcast %cst_20 : f32 to vector<8x4xf32>
    %90 = arith.subf %67, %89 : vector<8x4xf32>
    %91 = arith.mulf %90, %58 : vector<8x4xf32>
    %cst_21 = arith.constant -0.49999997 : f32
    %92 = vector.broadcast %cst_21 : f32 to vector<8x4xf32>
    %93 = arith.subf %92, %67 : vector<8x4xf32>
    %94 = arith.mulf %93, %59 : vector<8x4xf32>
    %95 = arith.addf %91, %94 : vector<8x4xf32>
    %cst_22 = arith.constant -1.500000e+00 : f32
    %96 = vector.broadcast %cst_22 : f32 to vector<8x4xf32>
    %97 = arith.subf %67, %96 : vector<8x4xf32>
    %98 = arith.mulf %97, %59 : vector<8x4xf32>
    %cst_23 = arith.constant 0.500000119 : f32
    %99 = vector.broadcast %cst_23 : f32 to vector<8x4xf32>
    %100 = arith.subf %99, %67 : vector<8x4xf32>
    %101 = arith.mulf %100, %60 : vector<8x4xf32>
    %102 = arith.addf %98, %101 : vector<8x4xf32>
    %cst_24 = arith.constant -0.49999997 : f32
    %103 = vector.broadcast %cst_24 : f32 to vector<8x4xf32>
    %104 = arith.subf %67, %103 : vector<8x4xf32>
    %105 = arith.mulf %104, %60 : vector<8x4xf32>
    %cst_25 = arith.constant 1.500000e+00 : f32
    %106 = vector.broadcast %cst_25 : f32 to vector<8x4xf32>
    %107 = arith.subf %106, %67 : vector<8x4xf32>
    %108 = arith.mulf %107, %61 : vector<8x4xf32>
    %109 = arith.addf %105, %108 : vector<8x4xf32>
    %cst_26 = arith.constant 0.500000119 : f32
    %110 = vector.broadcast %cst_26 : f32 to vector<8x4xf32>
    %111 = arith.subf %67, %110 : vector<8x4xf32>
    %112 = arith.mulf %111, %61 : vector<8x4xf32>
    %cst_27 = arith.constant 2.500000e+00 : f32
    %113 = vector.broadcast %cst_27 : f32 to vector<8x4xf32>
    %114 = arith.subf %113, %67 : vector<8x4xf32>
    %115 = arith.mulf %114, %62 : vector<8x4xf32>
    %116 = arith.addf %112, %115 : vector<8x4xf32>
    %cst_28 = arith.constant 1.500000e+00 : f32
    %117 = vector.broadcast %cst_28 : f32 to vector<8x4xf32>
    %118 = arith.subf %67, %117 : vector<8x4xf32>
    %119 = arith.mulf %118, %62 : vector<8x4xf32>
    %cst_29 = arith.constant 3.50000024 : f32
    %120 = vector.broadcast %cst_29 : f32 to vector<8x4xf32>
    %121 = arith.subf %120, %67 : vector<8x4xf32>
    %122 = arith.mulf %121, %63 : vector<8x4xf32>
    %123 = arith.addf %119, %122 : vector<8x4xf32>
    %cst_30 = arith.constant 2.500000e+00 : f32
    %124 = vector.broadcast %cst_30 : f32 to vector<8x4xf32>
    %125 = arith.subf %67, %124 : vector<8x4xf32>
    %126 = arith.mulf %125, %63 : vector<8x4xf32>
    %cst_31 = arith.constant 4.500000e+00 : f32
    %127 = vector.broadcast %cst_31 : f32 to vector<8x4xf32>
    %128 = arith.subf %127, %67 : vector<8x4xf32>
    %129 = arith.mulf %128, %64 : vector<8x4xf32>
    %130 = arith.addf %126, %129 : vector<8x4xf32>
    %cst_32 = arith.constant 3.50000024 : f32
    %131 = vector.broadcast %cst_32 : f32 to vector<8x4xf32>
    %132 = arith.subf %67, %131 : vector<8x4xf32>
    %133 = arith.mulf %132, %64 : vector<8x4xf32>
    %cst_33 = arith.constant 5.500000e+00 : f32
    %134 = vector.broadcast %cst_33 : f32 to vector<8x4xf32>
    %135 = arith.subf %134, %67 : vector<8x4xf32>
    %136 = arith.mulf %135, %65 : vector<8x4xf32>
    %137 = arith.addf %133, %136 : vector<8x4xf32>
    %cst_34 = arith.constant 1.250000e+00 : f32
    %138 = vector.broadcast %cst_34 : f32 to vector<8x4xf32>
    %139 = arith.mulf %0, %138 : vector<8x4xf32>
    %cst_35 = arith.constant -2.750000e+00 : f32
    %140 = vector.broadcast %cst_35 : f32 to vector<8x4xf32>
    %141 = arith.subf %139, %140 : vector<8x4xf32>
    %142 = arith.mulf %141, %74 : vector<8x4xf32>
    %cst_36 = arith.constant -1.250000e+00 : f32
    %143 = vector.broadcast %cst_36 : f32 to vector<8x4xf32>
    %144 = arith.subf %143, %139 : vector<8x4xf32>
    %145 = arith.mulf %144, %81 : vector<8x4xf32>
    %146 = arith.addf %142, %145 : vector<8x4xf32>
    %cst_37 = arith.constant -2.250000e+00 : f32
    %147 = vector.broadcast %cst_37 : f32 to vector<8x4xf32>
    %148 = arith.subf %139, %147 : vector<8x4xf32>
    %149 = arith.mulf %148, %81 : vector<8x4xf32>
    %cst_38 = arith.constant -7.500000e-01 : f32
    %150 = vector.broadcast %cst_38 : f32 to vector<8x4xf32>
    %151 = arith.subf %150, %139 : vector<8x4xf32>
    %152 = arith.mulf %151, %88 : vector<8x4xf32>
    %153 = arith.addf %149, %152 : vector<8x4xf32>
    %cst_39 = arith.constant -1.750000e+00 : f32
    %154 = vector.broadcast %cst_39 : f32 to vector<8x4xf32>
    %155 = arith.subf %139, %154 : vector<8x4xf32>
    %156 = arith.mulf %155, %88 : vector<8x4xf32>
    %cst_40 = arith.constant -0.249999985 : f32
    %157 = vector.broadcast %cst_40 : f32 to vector<8x4xf32>
    %158 = arith.subf %157, %139 : vector<8x4xf32>
    %159 = arith.mulf %158, %95 : vector<8x4xf32>
    %160 = arith.addf %156, %159 : vector<8x4xf32>
    %cst_41 = arith.constant -1.250000e+00 : f32
    %161 = vector.broadcast %cst_41 : f32 to vector<8x4xf32>
    %162 = arith.subf %139, %161 : vector<8x4xf32>
    %163 = arith.mulf %162, %95 : vector<8x4xf32>
    %cst_42 = arith.constant 0.25000006 : f32
    %164 = vector.broadcast %cst_42 : f32 to vector<8x4xf32>
    %165 = arith.subf %164, %139 : vector<8x4xf32>
    %166 = arith.mulf %165, %102 : vector<8x4xf32>
    %167 = arith.addf %163, %166 : vector<8x4xf32>
    %cst_43 = arith.constant -7.500000e-01 : f32
    %168 = vector.broadcast %cst_43 : f32 to vector<8x4xf32>
    %169 = arith.subf %139, %168 : vector<8x4xf32>
    %170 = arith.mulf %169, %102 : vector<8x4xf32>
    %cst_44 = arith.constant 7.500000e-01 : f32
    %171 = vector.broadcast %cst_44 : f32 to vector<8x4xf32>
    %172 = arith.subf %171, %139 : vector<8x4xf32>
    %173 = arith.mulf %172, %109 : vector<8x4xf32>
    %174 = arith.addf %170, %173 : vector<8x4xf32>
    %cst_45 = arith.constant -0.249999985 : f32
    %175 = vector.broadcast %cst_45 : f32 to vector<8x4xf32>
    %176 = arith.subf %139, %175 : vector<8x4xf32>
    %177 = arith.mulf %176, %109 : vector<8x4xf32>
    %cst_46 = arith.constant 1.250000e+00 : f32
    %178 = vector.broadcast %cst_46 : f32 to vector<8x4xf32>
    %179 = arith.subf %178, %139 : vector<8x4xf32>
    %180 = arith.mulf %179, %116 : vector<8x4xf32>
    %181 = arith.addf %177, %180 : vector<8x4xf32>
    %cst_47 = arith.constant 0.25000006 : f32
    %182 = vector.broadcast %cst_47 : f32 to vector<8x4xf32>
    %183 = arith.subf %139, %182 : vector<8x4xf32>
    %184 = arith.mulf %183, %116 : vector<8x4xf32>
    %cst_48 = arith.constant 1.75000012 : f32
    %185 = vector.broadcast %cst_48 : f32 to vector<8x4xf32>
    %186 = arith.subf %185, %139 : vector<8x4xf32>
    %187 = arith.mulf %186, %123 : vector<8x4xf32>
    %188 = arith.addf %184, %187 : vector<8x4xf32>
    %cst_49 = arith.constant 7.500000e-01 : f32
    %189 = vector.broadcast %cst_49 : f32 to vector<8x4xf32>
    %190 = arith.subf %139, %189 : vector<8x4xf32>
    %191 = arith.mulf %190, %123 : vector<8x4xf32>
    %cst_50 = arith.constant 2.250000e+00 : f32
    %192 = vector.broadcast %cst_50 : f32 to vector<8x4xf32>
    %193 = arith.subf %192, %139 : vector<8x4xf32>
    %194 = arith.mulf %193, %130 : vector<8x4xf32>
    %195 = arith.addf %191, %194 : vector<8x4xf32>
    %cst_51 = arith.constant 1.250000e+00 : f32
    %196 = vector.broadcast %cst_51 : f32 to vector<8x4xf32>
    %197 = arith.subf %139, %196 : vector<8x4xf32>
    %198 = arith.mulf %197, %130 : vector<8x4xf32>
    %cst_52 = arith.constant 2.750000e+00 : f32
    %199 = vector.broadcast %cst_52 : f32 to vector<8x4xf32>
    %200 = arith.subf %199, %139 : vector<8x4xf32>
    %201 = arith.mulf %200, %137 : vector<8x4xf32>
    %202 = arith.addf %198, %201 : vector<8x4xf32>
    %cst_53 = arith.constant 0.833333313 : f32
    %203 = vector.broadcast %cst_53 : f32 to vector<8x4xf32>
    %204 = arith.mulf %0, %203 : vector<8x4xf32>
    %cst_54 = arith.constant -1.83333337 : f32
    %205 = vector.broadcast %cst_54 : f32 to vector<8x4xf32>
    %206 = arith.subf %204, %205 : vector<8x4xf32>
    %207 = arith.mulf %206, %146 : vector<8x4xf32>
    %cst_55 = arith.constant -5.000000e-01 : f32
    %208 = vector.broadcast %cst_55 : f32 to vector<8x4xf32>
    %209 = arith.subf %208, %204 : vector<8x4xf32>
    %210 = arith.mulf %209, %153 : vector<8x4xf32>
    %211 = arith.addf %207, %210 : vector<8x4xf32>
    %cst_56 = arith.constant -1.49999988 : f32
    %212 = vector.broadcast %cst_56 : f32 to vector<8x4xf32>
    %213 = arith.subf %204, %212 : vector<8x4xf32>
    %214 = arith.mulf %213, %153 : vector<8x4xf32>
    %cst_57 = arith.constant -0.166666657 : f32
    %215 = vector.broadcast %cst_57 : f32 to vector<8x4xf32>
    %216 = arith.subf %215, %204 : vector<8x4xf32>
    %217 = arith.mulf %216, %160 : vector<8x4xf32>
    %218 = arith.addf %214, %217 : vector<8x4xf32>
    %cst_58 = arith.constant -1.16666663 : f32
    %219 = vector.broadcast %cst_58 : f32 to vector<8x4xf32>
    %220 = arith.subf %204, %219 : vector<8x4xf32>
    %221 = arith.mulf %220, %160 : vector<8x4xf32>
    %cst_59 = arith.constant 0.166666701 : f32
    %222 = vector.broadcast %cst_59 : f32 to vector<8x4xf32>
    %223 = arith.subf %222, %204 : vector<8x4xf32>
    %224 = arith.mulf %223, %167 : vector<8x4xf32>
    %225 = arith.addf %221, %224 : vector<8x4xf32>
    %cst_60 = arith.constant -0.833333313 : f32
    %226 = vector.broadcast %cst_60 : f32 to vector<8x4xf32>
    %227 = arith.subf %204, %226 : vector<8x4xf32>
    %228 = arith.mulf %227, %167 : vector<8x4xf32>
    %cst_61 = arith.constant 5.000000e-01 : f32
    %229 = vector.broadcast %cst_61 : f32 to vector<8x4xf32>
    %230 = arith.subf %229, %204 : vector<8x4xf32>
    %231 = arith.mulf %230, %174 : vector<8x4xf32>
    %232 = arith.addf %228, %231 : vector<8x4xf32>
    %cst_62 = arith.constant -5.000000e-01 : f32
    %233 = vector.broadcast %cst_62 : f32 to vector<8x4xf32>
    %234 = arith.subf %204, %233 : vector<8x4xf32>
    %235 = arith.mulf %234, %174 : vector<8x4xf32>
    %cst_63 = arith.constant 0.833333313 : f32
    %236 = vector.broadcast %cst_63 : f32 to vector<8x4xf32>
    %237 = arith.subf %236, %204 : vector<8x4xf32>
    %238 = arith.mulf %237, %181 : vector<8x4xf32>
    %239 = arith.addf %235, %238 : vector<8x4xf32>
    %cst_64 = arith.constant -0.166666657 : f32
    %240 = vector.broadcast %cst_64 : f32 to vector<8x4xf32>
    %241 = arith.subf %204, %240 : vector<8x4xf32>
    %242 = arith.mulf %241, %181 : vector<8x4xf32>
    %cst_65 = arith.constant 1.16666675 : f32
    %243 = vector.broadcast %cst_65 : f32 to vector<8x4xf32>
    %244 = arith.subf %243, %204 : vector<8x4xf32>
    %245 = arith.mulf %244, %188 : vector<8x4xf32>
    %246 = arith.addf %242, %245 : vector<8x4xf32>
    %cst_66 = arith.constant 0.166666701 : f32
    %247 = vector.broadcast %cst_66 : f32 to vector<8x4xf32>
    %248 = arith.subf %204, %247 : vector<8x4xf32>
    %249 = arith.mulf %248, %188 : vector<8x4xf32>
    %cst_67 = arith.constant 1.49999988 : f32
    %250 = vector.broadcast %cst_67 : f32 to vector<8x4xf32>
    %251 = arith.subf %250, %204 : vector<8x4xf32>
    %252 = arith.mulf %251, %195 : vector<8x4xf32>
    %253 = arith.addf %249, %252 : vector<8x4xf32>
    %cst_68 = arith.constant 5.000000e-01 : f32
    %254 = vector.broadcast %cst_68 : f32 to vector<8x4xf32>
    %255 = arith.subf %204, %254 : vector<8x4xf32>
    %256 = arith.mulf %255, %195 : vector<8x4xf32>
    %cst_69 = arith.constant 1.83333337 : f32
    %257 = vector.broadcast %cst_69 : f32 to vector<8x4xf32>
    %258 = arith.subf %257, %204 : vector<8x4xf32>
    %259 = arith.mulf %258, %202 : vector<8x4xf32>
    %260 = arith.addf %256, %259 : vector<8x4xf32>
    %261 = tpu.concatenate %6, %211, %218, %225, %232, %239, %246, %253, %260 in 0 : vector<8x4xf32>, vector<8x4xf32>, vector<8x4xf32>, vector<8x4xf32>, vector<8x4xf32>, vector<8x4xf32>, vector<8x4xf32>, vector<8x4xf32>, vector<8x4xf32> -> vector<72x4xf32>
    %262 = arith.truncf %261 : vector<72x4xf32> to vector<72x4xbf16>
    %c0_70 = arith.constant 0 : index
    %c0_71 = arith.constant 0 : index
    %263 = vector.load %arg1[%c0_70, %c0_71] : memref<64x72xbf16, #tpu.memory_space<vmem>>, vector<64x72xbf16>
    %cst_72 = arith.constant dense<0.000000e+00> : vector<64x4xf32>
    %264 = tpu.matmul %263, %262, %cst_72 {dimension_numbers = #tpu.dot_dimension_numbers<[1], [0], [0], [1], [0, 0, 1, 1], [], []>} : vector<64x72xbf16>, vector<72x4xbf16>, vector<64x4xf32> -> vector<64x4xf32>
    %265 = arith.negf %264 : vector<64x4xf32>
    %266 = math.exp %265 : vector<64x4xf32>
    %cst_73 = arith.constant 1.000000e+00 : f32
    %267 = vector.broadcast %cst_73 : f32 to vector<64x4xf32>
    %268 = arith.addf %267, %266 : vector<64x4xf32>
    %269 = arith.divf %267, %268 : vector<64x4xf32>
    %270 = arith.mulf %264, %269 : vector<64x4xf32>
    %cst_74 = arith.constant -2.200000e+00 : f32
    %271 = vector.broadcast %cst_74 : f32 to vector<64x4xf32>
    %272 = arith.cmpf oge, %264, %271 : vector<64x4xf32>
    %273 = arith.extui %272 : vector<64x4xi1> to vector<64x4xi32>
    %274 = arith.sitofp %273 : vector<64x4xi32> to vector<64x4xf32>
    %cst_75 = arith.constant -1.800000e+00 : f32
    %275 = vector.broadcast %cst_75 : f32 to vector<64x4xf32>
    %276 = arith.cmpf oge, %264, %275 : vector<64x4xf32>
    %277 = arith.extui %276 : vector<64x4xi1> to vector<64x4xi32>
    %278 = arith.sitofp %277 : vector<64x4xi32> to vector<64x4xf32>
    %cst_76 = arith.constant -1.400000e+00 : f32
    %279 = vector.broadcast %cst_76 : f32 to vector<64x4xf32>
    %280 = arith.cmpf oge, %264, %279 : vector<64x4xf32>
    %281 = arith.extui %280 : vector<64x4xi1> to vector<64x4xi32>
    %282 = arith.sitofp %281 : vector<64x4xi32> to vector<64x4xf32>
    %cst_77 = arith.constant -1.000000e+00 : f32
    %283 = vector.broadcast %cst_77 : f32 to vector<64x4xf32>
    %284 = arith.cmpf oge, %264, %283 : vector<64x4xf32>
    %285 = arith.extui %284 : vector<64x4xi1> to vector<64x4xi32>
    %286 = arith.sitofp %285 : vector<64x4xi32> to vector<64x4xf32>
    %cst_78 = arith.constant -6.000000e-01 : f32
    %287 = vector.broadcast %cst_78 : f32 to vector<64x4xf32>
    %288 = arith.cmpf oge, %264, %287 : vector<64x4xf32>
    %289 = arith.extui %288 : vector<64x4xi1> to vector<64x4xi32>
    %290 = arith.sitofp %289 : vector<64x4xi32> to vector<64x4xf32>
    %cst_79 = arith.constant -0.199999988 : f32
    %291 = vector.broadcast %cst_79 : f32 to vector<64x4xf32>
    %292 = arith.cmpf oge, %264, %291 : vector<64x4xf32>
    %293 = arith.extui %292 : vector<64x4xi1> to vector<64x4xi32>
    %294 = arith.sitofp %293 : vector<64x4xi32> to vector<64x4xf32>
    %cst_80 = arith.constant 0.200000048 : f32
    %295 = vector.broadcast %cst_80 : f32 to vector<64x4xf32>
    %296 = arith.cmpf oge, %264, %295 : vector<64x4xf32>
    %297 = arith.extui %296 : vector<64x4xi1> to vector<64x4xi32>
    %298 = arith.sitofp %297 : vector<64x4xi32> to vector<64x4xf32>
    %cst_81 = arith.constant 6.000000e-01 : f32
    %299 = vector.broadcast %cst_81 : f32 to vector<64x4xf32>
    %300 = arith.cmpf oge, %264, %299 : vector<64x4xf32>
    %301 = arith.extui %300 : vector<64x4xi1> to vector<64x4xi32>
    %302 = arith.sitofp %301 : vector<64x4xi32> to vector<64x4xf32>
    %cst_82 = arith.constant 1.000000e+00 : f32
    %303 = vector.broadcast %cst_82 : f32 to vector<64x4xf32>
    %304 = arith.cmpf oge, %264, %303 : vector<64x4xf32>
    %305 = arith.extui %304 : vector<64x4xi1> to vector<64x4xi32>
    %306 = arith.sitofp %305 : vector<64x4xi32> to vector<64x4xf32>
    %cst_83 = arith.constant 1.4000001 : f32
    %307 = vector.broadcast %cst_83 : f32 to vector<64x4xf32>
    %308 = arith.cmpf oge, %264, %307 : vector<64x4xf32>
    %309 = arith.extui %308 : vector<64x4xi1> to vector<64x4xi32>
    %310 = arith.sitofp %309 : vector<64x4xi32> to vector<64x4xf32>
    %cst_84 = arith.constant 1.800000e+00 : f32
    %311 = vector.broadcast %cst_84 : f32 to vector<64x4xf32>
    %312 = arith.cmpf oge, %264, %311 : vector<64x4xf32>
    %313 = arith.extui %312 : vector<64x4xi1> to vector<64x4xi32>
    %314 = arith.sitofp %313 : vector<64x4xi32> to vector<64x4xf32>
    %cst_85 = arith.constant 2.200000e+00 : f32
    %315 = vector.broadcast %cst_85 : f32 to vector<64x4xf32>
    %316 = arith.cmpf oge, %264, %315 : vector<64x4xf32>
    %317 = arith.extui %316 : vector<64x4xi1> to vector<64x4xi32>
    %318 = arith.sitofp %317 : vector<64x4xi32> to vector<64x4xf32>
    %319 = arith.subf %274, %278 : vector<64x4xf32>
    %320 = arith.subf %278, %282 : vector<64x4xf32>
    %321 = arith.subf %282, %286 : vector<64x4xf32>
    %322 = arith.subf %286, %290 : vector<64x4xf32>
    %323 = arith.subf %290, %294 : vector<64x4xf32>
    %324 = arith.subf %294, %298 : vector<64x4xf32>
    %325 = arith.subf %298, %302 : vector<64x4xf32>
    %326 = arith.subf %302, %306 : vector<64x4xf32>
    %327 = arith.subf %306, %310 : vector<64x4xf32>
    %328 = arith.subf %310, %314 : vector<64x4xf32>
    %329 = arith.subf %314, %318 : vector<64x4xf32>
    %cst_86 = arith.constant 2.500000e+00 : f32
    %330 = vector.broadcast %cst_86 : f32 to vector<64x4xf32>
    %331 = arith.mulf %264, %330 : vector<64x4xf32>
    %cst_87 = arith.constant -5.500000e+00 : f32
    %332 = vector.broadcast %cst_87 : f32 to vector<64x4xf32>
    %333 = arith.subf %331, %332 : vector<64x4xf32>
    %334 = arith.mulf %333, %319 : vector<64x4xf32>
    %cst_88 = arith.constant -3.500000e+00 : f32
    %335 = vector.broadcast %cst_88 : f32 to vector<64x4xf32>
    %336 = arith.subf %335, %331 : vector<64x4xf32>
    %337 = arith.mulf %336, %320 : vector<64x4xf32>
    %338 = arith.addf %334, %337 : vector<64x4xf32>
    %cst_89 = arith.constant -4.500000e+00 : f32
    %339 = vector.broadcast %cst_89 : f32 to vector<64x4xf32>
    %340 = arith.subf %331, %339 : vector<64x4xf32>
    %341 = arith.mulf %340, %320 : vector<64x4xf32>
    %cst_90 = arith.constant -2.500000e+00 : f32
    %342 = vector.broadcast %cst_90 : f32 to vector<64x4xf32>
    %343 = arith.subf %342, %331 : vector<64x4xf32>
    %344 = arith.mulf %343, %321 : vector<64x4xf32>
    %345 = arith.addf %341, %344 : vector<64x4xf32>
    %cst_91 = arith.constant -3.500000e+00 : f32
    %346 = vector.broadcast %cst_91 : f32 to vector<64x4xf32>
    %347 = arith.subf %331, %346 : vector<64x4xf32>
    %348 = arith.mulf %347, %321 : vector<64x4xf32>
    %cst_92 = arith.constant -1.500000e+00 : f32
    %349 = vector.broadcast %cst_92 : f32 to vector<64x4xf32>
    %350 = arith.subf %349, %331 : vector<64x4xf32>
    %351 = arith.mulf %350, %322 : vector<64x4xf32>
    %352 = arith.addf %348, %351 : vector<64x4xf32>
    %cst_93 = arith.constant -2.500000e+00 : f32
    %353 = vector.broadcast %cst_93 : f32 to vector<64x4xf32>
    %354 = arith.subf %331, %353 : vector<64x4xf32>
    %355 = arith.mulf %354, %322 : vector<64x4xf32>
    %cst_94 = arith.constant -0.49999997 : f32
    %356 = vector.broadcast %cst_94 : f32 to vector<64x4xf32>
    %357 = arith.subf %356, %331 : vector<64x4xf32>
    %358 = arith.mulf %357, %323 : vector<64x4xf32>
    %359 = arith.addf %355, %358 : vector<64x4xf32>
    %cst_95 = arith.constant -1.500000e+00 : f32
    %360 = vector.broadcast %cst_95 : f32 to vector<64x4xf32>
    %361 = arith.subf %331, %360 : vector<64x4xf32>
    %362 = arith.mulf %361, %323 : vector<64x4xf32>
    %cst_96 = arith.constant 0.500000119 : f32
    %363 = vector.broadcast %cst_96 : f32 to vector<64x4xf32>
    %364 = arith.subf %363, %331 : vector<64x4xf32>
    %365 = arith.mulf %364, %324 : vector<64x4xf32>
    %366 = arith.addf %362, %365 : vector<64x4xf32>
    %cst_97 = arith.constant -0.49999997 : f32
    %367 = vector.broadcast %cst_97 : f32 to vector<64x4xf32>
    %368 = arith.subf %331, %367 : vector<64x4xf32>
    %369 = arith.mulf %368, %324 : vector<64x4xf32>
    %cst_98 = arith.constant 1.500000e+00 : f32
    %370 = vector.broadcast %cst_98 : f32 to vector<64x4xf32>
    %371 = arith.subf %370, %331 : vector<64x4xf32>
    %372 = arith.mulf %371, %325 : vector<64x4xf32>
    %373 = arith.addf %369, %372 : vector<64x4xf32>
    %cst_99 = arith.constant 0.500000119 : f32
    %374 = vector.broadcast %cst_99 : f32 to vector<64x4xf32>
    %375 = arith.subf %331, %374 : vector<64x4xf32>
    %376 = arith.mulf %375, %325 : vector<64x4xf32>
    %cst_100 = arith.constant 2.500000e+00 : f32
    %377 = vector.broadcast %cst_100 : f32 to vector<64x4xf32>
    %378 = arith.subf %377, %331 : vector<64x4xf32>
    %379 = arith.mulf %378, %326 : vector<64x4xf32>
    %380 = arith.addf %376, %379 : vector<64x4xf32>
    %cst_101 = arith.constant 1.500000e+00 : f32
    %381 = vector.broadcast %cst_101 : f32 to vector<64x4xf32>
    %382 = arith.subf %331, %381 : vector<64x4xf32>
    %383 = arith.mulf %382, %326 : vector<64x4xf32>
    %cst_102 = arith.constant 3.50000024 : f32
    %384 = vector.broadcast %cst_102 : f32 to vector<64x4xf32>
    %385 = arith.subf %384, %331 : vector<64x4xf32>
    %386 = arith.mulf %385, %327 : vector<64x4xf32>
    %387 = arith.addf %383, %386 : vector<64x4xf32>
    %cst_103 = arith.constant 2.500000e+00 : f32
    %388 = vector.broadcast %cst_103 : f32 to vector<64x4xf32>
    %389 = arith.subf %331, %388 : vector<64x4xf32>
    %390 = arith.mulf %389, %327 : vector<64x4xf32>
    %cst_104 = arith.constant 4.500000e+00 : f32
    %391 = vector.broadcast %cst_104 : f32 to vector<64x4xf32>
    %392 = arith.subf %391, %331 : vector<64x4xf32>
    %393 = arith.mulf %392, %328 : vector<64x4xf32>
    %394 = arith.addf %390, %393 : vector<64x4xf32>
    %cst_105 = arith.constant 3.50000024 : f32
    %395 = vector.broadcast %cst_105 : f32 to vector<64x4xf32>
    %396 = arith.subf %331, %395 : vector<64x4xf32>
    %397 = arith.mulf %396, %328 : vector<64x4xf32>
    %cst_106 = arith.constant 5.500000e+00 : f32
    %398 = vector.broadcast %cst_106 : f32 to vector<64x4xf32>
    %399 = arith.subf %398, %331 : vector<64x4xf32>
    %400 = arith.mulf %399, %329 : vector<64x4xf32>
    %401 = arith.addf %397, %400 : vector<64x4xf32>
    %cst_107 = arith.constant 1.250000e+00 : f32
    %402 = vector.broadcast %cst_107 : f32 to vector<64x4xf32>
    %403 = arith.mulf %264, %402 : vector<64x4xf32>
    %cst_108 = arith.constant -2.750000e+00 : f32
    %404 = vector.broadcast %cst_108 : f32 to vector<64x4xf32>
    %405 = arith.subf %403, %404 : vector<64x4xf32>
    %406 = arith.mulf %405, %338 : vector<64x4xf32>
    %cst_109 = arith.constant -1.250000e+00 : f32
    %407 = vector.broadcast %cst_109 : f32 to vector<64x4xf32>
    %408 = arith.subf %407, %403 : vector<64x4xf32>
    %409 = arith.mulf %408, %345 : vector<64x4xf32>
    %410 = arith.addf %406, %409 : vector<64x4xf32>
    %cst_110 = arith.constant -2.250000e+00 : f32
    %411 = vector.broadcast %cst_110 : f32 to vector<64x4xf32>
    %412 = arith.subf %403, %411 : vector<64x4xf32>
    %413 = arith.mulf %412, %345 : vector<64x4xf32>
    %cst_111 = arith.constant -7.500000e-01 : f32
    %414 = vector.broadcast %cst_111 : f32 to vector<64x4xf32>
    %415 = arith.subf %414, %403 : vector<64x4xf32>
    %416 = arith.mulf %415, %352 : vector<64x4xf32>
    %417 = arith.addf %413, %416 : vector<64x4xf32>
    %cst_112 = arith.constant -1.750000e+00 : f32
    %418 = vector.broadcast %cst_112 : f32 to vector<64x4xf32>
    %419 = arith.subf %403, %418 : vector<64x4xf32>
    %420 = arith.mulf %419, %352 : vector<64x4xf32>
    %cst_113 = arith.constant -0.249999985 : f32
    %421 = vector.broadcast %cst_113 : f32 to vector<64x4xf32>
    %422 = arith.subf %421, %403 : vector<64x4xf32>
    %423 = arith.mulf %422, %359 : vector<64x4xf32>
    %424 = arith.addf %420, %423 : vector<64x4xf32>
    %cst_114 = arith.constant -1.250000e+00 : f32
    %425 = vector.broadcast %cst_114 : f32 to vector<64x4xf32>
    %426 = arith.subf %403, %425 : vector<64x4xf32>
    %427 = arith.mulf %426, %359 : vector<64x4xf32>
    %cst_115 = arith.constant 0.25000006 : f32
    %428 = vector.broadcast %cst_115 : f32 to vector<64x4xf32>
    %429 = arith.subf %428, %403 : vector<64x4xf32>
    %430 = arith.mulf %429, %366 : vector<64x4xf32>
    %431 = arith.addf %427, %430 : vector<64x4xf32>
    %cst_116 = arith.constant -7.500000e-01 : f32
    %432 = vector.broadcast %cst_116 : f32 to vector<64x4xf32>
    %433 = arith.subf %403, %432 : vector<64x4xf32>
    %434 = arith.mulf %433, %366 : vector<64x4xf32>
    %cst_117 = arith.constant 7.500000e-01 : f32
    %435 = vector.broadcast %cst_117 : f32 to vector<64x4xf32>
    %436 = arith.subf %435, %403 : vector<64x4xf32>
    %437 = arith.mulf %436, %373 : vector<64x4xf32>
    %438 = arith.addf %434, %437 : vector<64x4xf32>
    %cst_118 = arith.constant -0.249999985 : f32
    %439 = vector.broadcast %cst_118 : f32 to vector<64x4xf32>
    %440 = arith.subf %403, %439 : vector<64x4xf32>
    %441 = arith.mulf %440, %373 : vector<64x4xf32>
    %cst_119 = arith.constant 1.250000e+00 : f32
    %442 = vector.broadcast %cst_119 : f32 to vector<64x4xf32>
    %443 = arith.subf %442, %403 : vector<64x4xf32>
    %444 = arith.mulf %443, %380 : vector<64x4xf32>
    %445 = arith.addf %441, %444 : vector<64x4xf32>
    %cst_120 = arith.constant 0.25000006 : f32
    %446 = vector.broadcast %cst_120 : f32 to vector<64x4xf32>
    %447 = arith.subf %403, %446 : vector<64x4xf32>
    %448 = arith.mulf %447, %380 : vector<64x4xf32>
    %cst_121 = arith.constant 1.75000012 : f32
    %449 = vector.broadcast %cst_121 : f32 to vector<64x4xf32>
    %450 = arith.subf %449, %403 : vector<64x4xf32>
    %451 = arith.mulf %450, %387 : vector<64x4xf32>
    %452 = arith.addf %448, %451 : vector<64x4xf32>
    %cst_122 = arith.constant 7.500000e-01 : f32
    %453 = vector.broadcast %cst_122 : f32 to vector<64x4xf32>
    %454 = arith.subf %403, %453 : vector<64x4xf32>
    %455 = arith.mulf %454, %387 : vector<64x4xf32>
    %cst_123 = arith.constant 2.250000e+00 : f32
    %456 = vector.broadcast %cst_123 : f32 to vector<64x4xf32>
    %457 = arith.subf %456, %403 : vector<64x4xf32>
    %458 = arith.mulf %457, %394 : vector<64x4xf32>
    %459 = arith.addf %455, %458 : vector<64x4xf32>
    %cst_124 = arith.constant 1.250000e+00 : f32
    %460 = vector.broadcast %cst_124 : f32 to vector<64x4xf32>
    %461 = arith.subf %403, %460 : vector<64x4xf32>
    %462 = arith.mulf %461, %394 : vector<64x4xf32>
    %cst_125 = arith.constant 2.750000e+00 : f32
    %463 = vector.broadcast %cst_125 : f32 to vector<64x4xf32>
    %464 = arith.subf %463, %403 : vector<64x4xf32>
    %465 = arith.mulf %464, %401 : vector<64x4xf32>
    %466 = arith.addf %462, %465 : vector<64x4xf32>
    %cst_126 = arith.constant 0.833333313 : f32
    %467 = vector.broadcast %cst_126 : f32 to vector<64x4xf32>
    %468 = arith.mulf %264, %467 : vector<64x4xf32>
    %cst_127 = arith.constant -1.83333337 : f32
    %469 = vector.broadcast %cst_127 : f32 to vector<64x4xf32>
    %470 = arith.subf %468, %469 : vector<64x4xf32>
    %471 = arith.mulf %470, %410 : vector<64x4xf32>
    %cst_128 = arith.constant -5.000000e-01 : f32
    %472 = vector.broadcast %cst_128 : f32 to vector<64x4xf32>
    %473 = arith.subf %472, %468 : vector<64x4xf32>
    %474 = arith.mulf %473, %417 : vector<64x4xf32>
    %475 = arith.addf %471, %474 : vector<64x4xf32>
    %cst_129 = arith.constant -1.49999988 : f32
    %476 = vector.broadcast %cst_129 : f32 to vector<64x4xf32>
    %477 = arith.subf %468, %476 : vector<64x4xf32>
    %478 = arith.mulf %477, %417 : vector<64x4xf32>
    %cst_130 = arith.constant -0.166666657 : f32
    %479 = vector.broadcast %cst_130 : f32 to vector<64x4xf32>
    %480 = arith.subf %479, %468 : vector<64x4xf32>
    %481 = arith.mulf %480, %424 : vector<64x4xf32>
    %482 = arith.addf %478, %481 : vector<64x4xf32>
    %cst_131 = arith.constant -1.16666663 : f32
    %483 = vector.broadcast %cst_131 : f32 to vector<64x4xf32>
    %484 = arith.subf %468, %483 : vector<64x4xf32>
    %485 = arith.mulf %484, %424 : vector<64x4xf32>
    %cst_132 = arith.constant 0.166666701 : f32
    %486 = vector.broadcast %cst_132 : f32 to vector<64x4xf32>
    %487 = arith.subf %486, %468 : vector<64x4xf32>
    %488 = arith.mulf %487, %431 : vector<64x4xf32>
    %489 = arith.addf %485, %488 : vector<64x4xf32>
    %cst_133 = arith.constant -0.833333313 : f32
    %490 = vector.broadcast %cst_133 : f32 to vector<64x4xf32>
    %491 = arith.subf %468, %490 : vector<64x4xf32>
    %492 = arith.mulf %491, %431 : vector<64x4xf32>
    %cst_134 = arith.constant 5.000000e-01 : f32
    %493 = vector.broadcast %cst_134 : f32 to vector<64x4xf32>
    %494 = arith.subf %493, %468 : vector<64x4xf32>
    %495 = arith.mulf %494, %438 : vector<64x4xf32>
    %496 = arith.addf %492, %495 : vector<64x4xf32>
    %cst_135 = arith.constant -5.000000e-01 : f32
    %497 = vector.broadcast %cst_135 : f32 to vector<64x4xf32>
    %498 = arith.subf %468, %497 : vector<64x4xf32>
    %499 = arith.mulf %498, %438 : vector<64x4xf32>
    %cst_136 = arith.constant 0.833333313 : f32
    %500 = vector.broadcast %cst_136 : f32 to vector<64x4xf32>
    %501 = arith.subf %500, %468 : vector<64x4xf32>
    %502 = arith.mulf %501, %445 : vector<64x4xf32>
    %503 = arith.addf %499, %502 : vector<64x4xf32>
    %cst_137 = arith.constant -0.166666657 : f32
    %504 = vector.broadcast %cst_137 : f32 to vector<64x4xf32>
    %505 = arith.subf %468, %504 : vector<64x4xf32>
    %506 = arith.mulf %505, %445 : vector<64x4xf32>
    %cst_138 = arith.constant 1.16666675 : f32
    %507 = vector.broadcast %cst_138 : f32 to vector<64x4xf32>
    %508 = arith.subf %507, %468 : vector<64x4xf32>
    %509 = arith.mulf %508, %452 : vector<64x4xf32>
    %510 = arith.addf %506, %509 : vector<64x4xf32>
    %cst_139 = arith.constant 0.166666701 : f32
    %511 = vector.broadcast %cst_139 : f32 to vector<64x4xf32>
    %512 = arith.subf %468, %511 : vector<64x4xf32>
    %513 = arith.mulf %512, %452 : vector<64x4xf32>
    %cst_140 = arith.constant 1.49999988 : f32
    %514 = vector.broadcast %cst_140 : f32 to vector<64x4xf32>
    %515 = arith.subf %514, %468 : vector<64x4xf32>
    %516 = arith.mulf %515, %459 : vector<64x4xf32>
    %517 = arith.addf %513, %516 : vector<64x4xf32>
    %cst_141 = arith.constant 5.000000e-01 : f32
    %518 = vector.broadcast %cst_141 : f32 to vector<64x4xf32>
    %519 = arith.subf %468, %518 : vector<64x4xf32>
    %520 = arith.mulf %519, %459 : vector<64x4xf32>
    %cst_142 = arith.constant 1.83333337 : f32
    %521 = vector.broadcast %cst_142 : f32 to vector<64x4xf32>
    %522 = arith.subf %521, %468 : vector<64x4xf32>
    %523 = arith.mulf %522, %466 : vector<64x4xf32>
    %524 = arith.addf %520, %523 : vector<64x4xf32>
    %525 = tpu.concatenate %270, %475, %482, %489, %496, %503, %510, %517, %524 in 0 : vector<64x4xf32>, vector<64x4xf32>, vector<64x4xf32>, vector<64x4xf32>, vector<64x4xf32>, vector<64x4xf32>, vector<64x4xf32>, vector<64x4xf32>, vector<64x4xf32> -> vector<576x4xf32>
    %526 = arith.truncf %525 : vector<576x4xf32> to vector<576x4xbf16>
    %c0_143 = arith.constant 0 : index
    %c0_144 = arith.constant 0 : index
    %527 = vector.load %arg2[%c0_143, %c0_144] : memref<32x576xbf16, #tpu.memory_space<vmem>>, vector<32x576xbf16>
    %cst_145 = arith.constant dense<0.000000e+00> : vector<32x4xf32>
    %528 = tpu.matmul %527, %526, %cst_145 {dimension_numbers = #tpu.dot_dimension_numbers<[1], [0], [0], [1], [0, 0, 1, 1], [], []>} : vector<32x576xbf16>, vector<576x4xbf16>, vector<32x4xf32> -> vector<32x4xf32>
    %529 = arith.negf %528 : vector<32x4xf32>
    %530 = math.exp %529 : vector<32x4xf32>
    %cst_146 = arith.constant 1.000000e+00 : f32
    %531 = vector.broadcast %cst_146 : f32 to vector<32x4xf32>
    %532 = arith.addf %531, %530 : vector<32x4xf32>
    %533 = arith.divf %531, %532 : vector<32x4xf32>
    %534 = arith.mulf %528, %533 : vector<32x4xf32>
    %cst_147 = arith.constant -2.200000e+00 : f32
    %535 = vector.broadcast %cst_147 : f32 to vector<32x4xf32>
    %536 = arith.cmpf oge, %528, %535 : vector<32x4xf32>
    %537 = arith.extui %536 : vector<32x4xi1> to vector<32x4xi32>
    %538 = arith.sitofp %537 : vector<32x4xi32> to vector<32x4xf32>
    %cst_148 = arith.constant -1.800000e+00 : f32
    %539 = vector.broadcast %cst_148 : f32 to vector<32x4xf32>
    %540 = arith.cmpf oge, %528, %539 : vector<32x4xf32>
    %541 = arith.extui %540 : vector<32x4xi1> to vector<32x4xi32>
    %542 = arith.sitofp %541 : vector<32x4xi32> to vector<32x4xf32>
    %cst_149 = arith.constant -1.400000e+00 : f32
    %543 = vector.broadcast %cst_149 : f32 to vector<32x4xf32>
    %544 = arith.cmpf oge, %528, %543 : vector<32x4xf32>
    %545 = arith.extui %544 : vector<32x4xi1> to vector<32x4xi32>
    %546 = arith.sitofp %545 : vector<32x4xi32> to vector<32x4xf32>
    %cst_150 = arith.constant -1.000000e+00 : f32
    %547 = vector.broadcast %cst_150 : f32 to vector<32x4xf32>
    %548 = arith.cmpf oge, %528, %547 : vector<32x4xf32>
    %549 = arith.extui %548 : vector<32x4xi1> to vector<32x4xi32>
    %550 = arith.sitofp %549 : vector<32x4xi32> to vector<32x4xf32>
    %cst_151 = arith.constant -6.000000e-01 : f32
    %551 = vector.broadcast %cst_151 : f32 to vector<32x4xf32>
    %552 = arith.cmpf oge, %528, %551 : vector<32x4xf32>
    %553 = arith.extui %552 : vector<32x4xi1> to vector<32x4xi32>
    %554 = arith.sitofp %553 : vector<32x4xi32> to vector<32x4xf32>
    %cst_152 = arith.constant -0.199999988 : f32
    %555 = vector.broadcast %cst_152 : f32 to vector<32x4xf32>
    %556 = arith.cmpf oge, %528, %555 : vector<32x4xf32>
    %557 = arith.extui %556 : vector<32x4xi1> to vector<32x4xi32>
    %558 = arith.sitofp %557 : vector<32x4xi32> to vector<32x4xf32>
    %cst_153 = arith.constant 0.200000048 : f32
    %559 = vector.broadcast %cst_153 : f32 to vector<32x4xf32>
    %560 = arith.cmpf oge, %528, %559 : vector<32x4xf32>
    %561 = arith.extui %560 : vector<32x4xi1> to vector<32x4xi32>
    %562 = arith.sitofp %561 : vector<32x4xi32> to vector<32x4xf32>
    %cst_154 = arith.constant 6.000000e-01 : f32
    %563 = vector.broadcast %cst_154 : f32 to vector<32x4xf32>
    %564 = arith.cmpf oge, %528, %563 : vector<32x4xf32>
    %565 = arith.extui %564 : vector<32x4xi1> to vector<32x4xi32>
    %566 = arith.sitofp %565 : vector<32x4xi32> to vector<32x4xf32>
    %cst_155 = arith.constant 1.000000e+00 : f32
    %567 = vector.broadcast %cst_155 : f32 to vector<32x4xf32>
    %568 = arith.cmpf oge, %528, %567 : vector<32x4xf32>
    %569 = arith.extui %568 : vector<32x4xi1> to vector<32x4xi32>
    %570 = arith.sitofp %569 : vector<32x4xi32> to vector<32x4xf32>
    %cst_156 = arith.constant 1.4000001 : f32
    %571 = vector.broadcast %cst_156 : f32 to vector<32x4xf32>
    %572 = arith.cmpf oge, %528, %571 : vector<32x4xf32>
    %573 = arith.extui %572 : vector<32x4xi1> to vector<32x4xi32>
    %574 = arith.sitofp %573 : vector<32x4xi32> to vector<32x4xf32>
    %cst_157 = arith.constant 1.800000e+00 : f32
    %575 = vector.broadcast %cst_157 : f32 to vector<32x4xf32>
    %576 = arith.cmpf oge, %528, %575 : vector<32x4xf32>
    %577 = arith.extui %576 : vector<32x4xi1> to vector<32x4xi32>
    %578 = arith.sitofp %577 : vector<32x4xi32> to vector<32x4xf32>
    %cst_158 = arith.constant 2.200000e+00 : f32
    %579 = vector.broadcast %cst_158 : f32 to vector<32x4xf32>
    %580 = arith.cmpf oge, %528, %579 : vector<32x4xf32>
    %581 = arith.extui %580 : vector<32x4xi1> to vector<32x4xi32>
    %582 = arith.sitofp %581 : vector<32x4xi32> to vector<32x4xf32>
    %583 = arith.subf %538, %542 : vector<32x4xf32>
    %584 = arith.subf %542, %546 : vector<32x4xf32>
    %585 = arith.subf %546, %550 : vector<32x4xf32>
    %586 = arith.subf %550, %554 : vector<32x4xf32>
    %587 = arith.subf %554, %558 : vector<32x4xf32>
    %588 = arith.subf %558, %562 : vector<32x4xf32>
    %589 = arith.subf %562, %566 : vector<32x4xf32>
    %590 = arith.subf %566, %570 : vector<32x4xf32>
    %591 = arith.subf %570, %574 : vector<32x4xf32>
    %592 = arith.subf %574, %578 : vector<32x4xf32>
    %593 = arith.subf %578, %582 : vector<32x4xf32>
    %cst_159 = arith.constant 2.500000e+00 : f32
    %594 = vector.broadcast %cst_159 : f32 to vector<32x4xf32>
    %595 = arith.mulf %528, %594 : vector<32x4xf32>
    %cst_160 = arith.constant -5.500000e+00 : f32
    %596 = vector.broadcast %cst_160 : f32 to vector<32x4xf32>
    %597 = arith.subf %595, %596 : vector<32x4xf32>
    %598 = arith.mulf %597, %583 : vector<32x4xf32>
    %cst_161 = arith.constant -3.500000e+00 : f32
    %599 = vector.broadcast %cst_161 : f32 to vector<32x4xf32>
    %600 = arith.subf %599, %595 : vector<32x4xf32>
    %601 = arith.mulf %600, %584 : vector<32x4xf32>
    %602 = arith.addf %598, %601 : vector<32x4xf32>
    %cst_162 = arith.constant -4.500000e+00 : f32
    %603 = vector.broadcast %cst_162 : f32 to vector<32x4xf32>
    %604 = arith.subf %595, %603 : vector<32x4xf32>
    %605 = arith.mulf %604, %584 : vector<32x4xf32>
    %cst_163 = arith.constant -2.500000e+00 : f32
    %606 = vector.broadcast %cst_163 : f32 to vector<32x4xf32>
    %607 = arith.subf %606, %595 : vector<32x4xf32>
    %608 = arith.mulf %607, %585 : vector<32x4xf32>
    %609 = arith.addf %605, %608 : vector<32x4xf32>
    %cst_164 = arith.constant -3.500000e+00 : f32
    %610 = vector.broadcast %cst_164 : f32 to vector<32x4xf32>
    %611 = arith.subf %595, %610 : vector<32x4xf32>
    %612 = arith.mulf %611, %585 : vector<32x4xf32>
    %cst_165 = arith.constant -1.500000e+00 : f32
    %613 = vector.broadcast %cst_165 : f32 to vector<32x4xf32>
    %614 = arith.subf %613, %595 : vector<32x4xf32>
    %615 = arith.mulf %614, %586 : vector<32x4xf32>
    %616 = arith.addf %612, %615 : vector<32x4xf32>
    %cst_166 = arith.constant -2.500000e+00 : f32
    %617 = vector.broadcast %cst_166 : f32 to vector<32x4xf32>
    %618 = arith.subf %595, %617 : vector<32x4xf32>
    %619 = arith.mulf %618, %586 : vector<32x4xf32>
    %cst_167 = arith.constant -0.49999997 : f32
    %620 = vector.broadcast %cst_167 : f32 to vector<32x4xf32>
    %621 = arith.subf %620, %595 : vector<32x4xf32>
    %622 = arith.mulf %621, %587 : vector<32x4xf32>
    %623 = arith.addf %619, %622 : vector<32x4xf32>
    %cst_168 = arith.constant -1.500000e+00 : f32
    %624 = vector.broadcast %cst_168 : f32 to vector<32x4xf32>
    %625 = arith.subf %595, %624 : vector<32x4xf32>
    %626 = arith.mulf %625, %587 : vector<32x4xf32>
    %cst_169 = arith.constant 0.500000119 : f32
    %627 = vector.broadcast %cst_169 : f32 to vector<32x4xf32>
    %628 = arith.subf %627, %595 : vector<32x4xf32>
    %629 = arith.mulf %628, %588 : vector<32x4xf32>
    %630 = arith.addf %626, %629 : vector<32x4xf32>
    %cst_170 = arith.constant -0.49999997 : f32
    %631 = vector.broadcast %cst_170 : f32 to vector<32x4xf32>
    %632 = arith.subf %595, %631 : vector<32x4xf32>
    %633 = arith.mulf %632, %588 : vector<32x4xf32>
    %cst_171 = arith.constant 1.500000e+00 : f32
    %634 = vector.broadcast %cst_171 : f32 to vector<32x4xf32>
    %635 = arith.subf %634, %595 : vector<32x4xf32>
    %636 = arith.mulf %635, %589 : vector<32x4xf32>
    %637 = arith.addf %633, %636 : vector<32x4xf32>
    %cst_172 = arith.constant 0.500000119 : f32
    %638 = vector.broadcast %cst_172 : f32 to vector<32x4xf32>
    %639 = arith.subf %595, %638 : vector<32x4xf32>
    %640 = arith.mulf %639, %589 : vector<32x4xf32>
    %cst_173 = arith.constant 2.500000e+00 : f32
    %641 = vector.broadcast %cst_173 : f32 to vector<32x4xf32>
    %642 = arith.subf %641, %595 : vector<32x4xf32>
    %643 = arith.mulf %642, %590 : vector<32x4xf32>
    %644 = arith.addf %640, %643 : vector<32x4xf32>
    %cst_174 = arith.constant 1.500000e+00 : f32
    %645 = vector.broadcast %cst_174 : f32 to vector<32x4xf32>
    %646 = arith.subf %595, %645 : vector<32x4xf32>
    %647 = arith.mulf %646, %590 : vector<32x4xf32>
    %cst_175 = arith.constant 3.50000024 : f32
    %648 = vector.broadcast %cst_175 : f32 to vector<32x4xf32>
    %649 = arith.subf %648, %595 : vector<32x4xf32>
    %650 = arith.mulf %649, %591 : vector<32x4xf32>
    %651 = arith.addf %647, %650 : vector<32x4xf32>
    %cst_176 = arith.constant 2.500000e+00 : f32
    %652 = vector.broadcast %cst_176 : f32 to vector<32x4xf32>
    %653 = arith.subf %595, %652 : vector<32x4xf32>
    %654 = arith.mulf %653, %591 : vector<32x4xf32>
    %cst_177 = arith.constant 4.500000e+00 : f32
    %655 = vector.broadcast %cst_177 : f32 to vector<32x4xf32>
    %656 = arith.subf %655, %595 : vector<32x4xf32>
    %657 = arith.mulf %656, %592 : vector<32x4xf32>
    %658 = arith.addf %654, %657 : vector<32x4xf32>
    %cst_178 = arith.constant 3.50000024 : f32
    %659 = vector.broadcast %cst_178 : f32 to vector<32x4xf32>
    %660 = arith.subf %595, %659 : vector<32x4xf32>
    %661 = arith.mulf %660, %592 : vector<32x4xf32>
    %cst_179 = arith.constant 5.500000e+00 : f32
    %662 = vector.broadcast %cst_179 : f32 to vector<32x4xf32>
    %663 = arith.subf %662, %595 : vector<32x4xf32>
    %664 = arith.mulf %663, %593 : vector<32x4xf32>
    %665 = arith.addf %661, %664 : vector<32x4xf32>
    %cst_180 = arith.constant 1.250000e+00 : f32
    %666 = vector.broadcast %cst_180 : f32 to vector<32x4xf32>
    %667 = arith.mulf %528, %666 : vector<32x4xf32>
    %cst_181 = arith.constant -2.750000e+00 : f32
    %668 = vector.broadcast %cst_181 : f32 to vector<32x4xf32>
    %669 = arith.subf %667, %668 : vector<32x4xf32>
    %670 = arith.mulf %669, %602 : vector<32x4xf32>
    %cst_182 = arith.constant -1.250000e+00 : f32
    %671 = vector.broadcast %cst_182 : f32 to vector<32x4xf32>
    %672 = arith.subf %671, %667 : vector<32x4xf32>
    %673 = arith.mulf %672, %609 : vector<32x4xf32>
    %674 = arith.addf %670, %673 : vector<32x4xf32>
    %cst_183 = arith.constant -2.250000e+00 : f32
    %675 = vector.broadcast %cst_183 : f32 to vector<32x4xf32>
    %676 = arith.subf %667, %675 : vector<32x4xf32>
    %677 = arith.mulf %676, %609 : vector<32x4xf32>
    %cst_184 = arith.constant -7.500000e-01 : f32
    %678 = vector.broadcast %cst_184 : f32 to vector<32x4xf32>
    %679 = arith.subf %678, %667 : vector<32x4xf32>
    %680 = arith.mulf %679, %616 : vector<32x4xf32>
    %681 = arith.addf %677, %680 : vector<32x4xf32>
    %cst_185 = arith.constant -1.750000e+00 : f32
    %682 = vector.broadcast %cst_185 : f32 to vector<32x4xf32>
    %683 = arith.subf %667, %682 : vector<32x4xf32>
    %684 = arith.mulf %683, %616 : vector<32x4xf32>
    %cst_186 = arith.constant -0.249999985 : f32
    %685 = vector.broadcast %cst_186 : f32 to vector<32x4xf32>
    %686 = arith.subf %685, %667 : vector<32x4xf32>
    %687 = arith.mulf %686, %623 : vector<32x4xf32>
    %688 = arith.addf %684, %687 : vector<32x4xf32>
    %cst_187 = arith.constant -1.250000e+00 : f32
    %689 = vector.broadcast %cst_187 : f32 to vector<32x4xf32>
    %690 = arith.subf %667, %689 : vector<32x4xf32>
    %691 = arith.mulf %690, %623 : vector<32x4xf32>
    %cst_188 = arith.constant 0.25000006 : f32
    %692 = vector.broadcast %cst_188 : f32 to vector<32x4xf32>
    %693 = arith.subf %692, %667 : vector<32x4xf32>
    %694 = arith.mulf %693, %630 : vector<32x4xf32>
    %695 = arith.addf %691, %694 : vector<32x4xf32>
    %cst_189 = arith.constant -7.500000e-01 : f32
    %696 = vector.broadcast %cst_189 : f32 to vector<32x4xf32>
    %697 = arith.subf %667, %696 : vector<32x4xf32>
    %698 = arith.mulf %697, %630 : vector<32x4xf32>
    %cst_190 = arith.constant 7.500000e-01 : f32
    %699 = vector.broadcast %cst_190 : f32 to vector<32x4xf32>
    %700 = arith.subf %699, %667 : vector<32x4xf32>
    %701 = arith.mulf %700, %637 : vector<32x4xf32>
    %702 = arith.addf %698, %701 : vector<32x4xf32>
    %cst_191 = arith.constant -0.249999985 : f32
    %703 = vector.broadcast %cst_191 : f32 to vector<32x4xf32>
    %704 = arith.subf %667, %703 : vector<32x4xf32>
    %705 = arith.mulf %704, %637 : vector<32x4xf32>
    %cst_192 = arith.constant 1.250000e+00 : f32
    %706 = vector.broadcast %cst_192 : f32 to vector<32x4xf32>
    %707 = arith.subf %706, %667 : vector<32x4xf32>
    %708 = arith.mulf %707, %644 : vector<32x4xf32>
    %709 = arith.addf %705, %708 : vector<32x4xf32>
    %cst_193 = arith.constant 0.25000006 : f32
    %710 = vector.broadcast %cst_193 : f32 to vector<32x4xf32>
    %711 = arith.subf %667, %710 : vector<32x4xf32>
    %712 = arith.mulf %711, %644 : vector<32x4xf32>
    %cst_194 = arith.constant 1.75000012 : f32
    %713 = vector.broadcast %cst_194 : f32 to vector<32x4xf32>
    %714 = arith.subf %713, %667 : vector<32x4xf32>
    %715 = arith.mulf %714, %651 : vector<32x4xf32>
    %716 = arith.addf %712, %715 : vector<32x4xf32>
    %cst_195 = arith.constant 7.500000e-01 : f32
    %717 = vector.broadcast %cst_195 : f32 to vector<32x4xf32>
    %718 = arith.subf %667, %717 : vector<32x4xf32>
    %719 = arith.mulf %718, %651 : vector<32x4xf32>
    %cst_196 = arith.constant 2.250000e+00 : f32
    %720 = vector.broadcast %cst_196 : f32 to vector<32x4xf32>
    %721 = arith.subf %720, %667 : vector<32x4xf32>
    %722 = arith.mulf %721, %658 : vector<32x4xf32>
    %723 = arith.addf %719, %722 : vector<32x4xf32>
    %cst_197 = arith.constant 1.250000e+00 : f32
    %724 = vector.broadcast %cst_197 : f32 to vector<32x4xf32>
    %725 = arith.subf %667, %724 : vector<32x4xf32>
    %726 = arith.mulf %725, %658 : vector<32x4xf32>
    %cst_198 = arith.constant 2.750000e+00 : f32
    %727 = vector.broadcast %cst_198 : f32 to vector<32x4xf32>
    %728 = arith.subf %727, %667 : vector<32x4xf32>
    %729 = arith.mulf %728, %665 : vector<32x4xf32>
    %730 = arith.addf %726, %729 : vector<32x4xf32>
    %cst_199 = arith.constant 0.833333313 : f32
    %731 = vector.broadcast %cst_199 : f32 to vector<32x4xf32>
    %732 = arith.mulf %528, %731 : vector<32x4xf32>
    %cst_200 = arith.constant -1.83333337 : f32
    %733 = vector.broadcast %cst_200 : f32 to vector<32x4xf32>
    %734 = arith.subf %732, %733 : vector<32x4xf32>
    %735 = arith.mulf %734, %674 : vector<32x4xf32>
    %cst_201 = arith.constant -5.000000e-01 : f32
    %736 = vector.broadcast %cst_201 : f32 to vector<32x4xf32>
    %737 = arith.subf %736, %732 : vector<32x4xf32>
    %738 = arith.mulf %737, %681 : vector<32x4xf32>
    %739 = arith.addf %735, %738 : vector<32x4xf32>
    %cst_202 = arith.constant -1.49999988 : f32
    %740 = vector.broadcast %cst_202 : f32 to vector<32x4xf32>
    %741 = arith.subf %732, %740 : vector<32x4xf32>
    %742 = arith.mulf %741, %681 : vector<32x4xf32>
    %cst_203 = arith.constant -0.166666657 : f32
    %743 = vector.broadcast %cst_203 : f32 to vector<32x4xf32>
    %744 = arith.subf %743, %732 : vector<32x4xf32>
    %745 = arith.mulf %744, %688 : vector<32x4xf32>
    %746 = arith.addf %742, %745 : vector<32x4xf32>
    %cst_204 = arith.constant -1.16666663 : f32
    %747 = vector.broadcast %cst_204 : f32 to vector<32x4xf32>
    %748 = arith.subf %732, %747 : vector<32x4xf32>
    %749 = arith.mulf %748, %688 : vector<32x4xf32>
    %cst_205 = arith.constant 0.166666701 : f32
    %750 = vector.broadcast %cst_205 : f32 to vector<32x4xf32>
    %751 = arith.subf %750, %732 : vector<32x4xf32>
    %752 = arith.mulf %751, %695 : vector<32x4xf32>
    %753 = arith.addf %749, %752 : vector<32x4xf32>
    %cst_206 = arith.constant -0.833333313 : f32
    %754 = vector.broadcast %cst_206 : f32 to vector<32x4xf32>
    %755 = arith.subf %732, %754 : vector<32x4xf32>
    %756 = arith.mulf %755, %695 : vector<32x4xf32>
    %cst_207 = arith.constant 5.000000e-01 : f32
    %757 = vector.broadcast %cst_207 : f32 to vector<32x4xf32>
    %758 = arith.subf %757, %732 : vector<32x4xf32>
    %759 = arith.mulf %758, %702 : vector<32x4xf32>
    %760 = arith.addf %756, %759 : vector<32x4xf32>
    %cst_208 = arith.constant -5.000000e-01 : f32
    %761 = vector.broadcast %cst_208 : f32 to vector<32x4xf32>
    %762 = arith.subf %732, %761 : vector<32x4xf32>
    %763 = arith.mulf %762, %702 : vector<32x4xf32>
    %cst_209 = arith.constant 0.833333313 : f32
    %764 = vector.broadcast %cst_209 : f32 to vector<32x4xf32>
    %765 = arith.subf %764, %732 : vector<32x4xf32>
    %766 = arith.mulf %765, %709 : vector<32x4xf32>
    %767 = arith.addf %763, %766 : vector<32x4xf32>
    %cst_210 = arith.constant -0.166666657 : f32
    %768 = vector.broadcast %cst_210 : f32 to vector<32x4xf32>
    %769 = arith.subf %732, %768 : vector<32x4xf32>
    %770 = arith.mulf %769, %709 : vector<32x4xf32>
    %cst_211 = arith.constant 1.16666675 : f32
    %771 = vector.broadcast %cst_211 : f32 to vector<32x4xf32>
    %772 = arith.subf %771, %732 : vector<32x4xf32>
    %773 = arith.mulf %772, %716 : vector<32x4xf32>
    %774 = arith.addf %770, %773 : vector<32x4xf32>
    %cst_212 = arith.constant 0.166666701 : f32
    %775 = vector.broadcast %cst_212 : f32 to vector<32x4xf32>
    %776 = arith.subf %732, %775 : vector<32x4xf32>
    %777 = arith.mulf %776, %716 : vector<32x4xf32>
    %cst_213 = arith.constant 1.49999988 : f32
    %778 = vector.broadcast %cst_213 : f32 to vector<32x4xf32>
    %779 = arith.subf %778, %732 : vector<32x4xf32>
    %780 = arith.mulf %779, %723 : vector<32x4xf32>
    %781 = arith.addf %777, %780 : vector<32x4xf32>
    %cst_214 = arith.constant 5.000000e-01 : f32
    %782 = vector.broadcast %cst_214 : f32 to vector<32x4xf32>
    %783 = arith.subf %732, %782 : vector<32x4xf32>
    %784 = arith.mulf %783, %723 : vector<32x4xf32>
    %cst_215 = arith.constant 1.83333337 : f32
    %785 = vector.broadcast %cst_215 : f32 to vector<32x4xf32>
    %786 = arith.subf %785, %732 : vector<32x4xf32>
    %787 = arith.mulf %786, %730 : vector<32x4xf32>
    %788 = arith.addf %784, %787 : vector<32x4xf32>
    %789 = tpu.concatenate %534, %739, %746, %753, %760, %767, %774, %781, %788 in 0 : vector<32x4xf32>, vector<32x4xf32>, vector<32x4xf32>, vector<32x4xf32>, vector<32x4xf32>, vector<32x4xf32>, vector<32x4xf32>, vector<32x4xf32>, vector<32x4xf32> -> vector<288x4xf32>
    %790 = arith.truncf %789 : vector<288x4xf32> to vector<288x4xbf16>
    %c0_216 = arith.constant 0 : index
    %c0_217 = arith.constant 0 : index
    %791 = vector.load %arg3[%c0_216, %c0_217] : memref<64x288xbf16, #tpu.memory_space<vmem>>, vector<64x288xbf16>
    %cst_218 = arith.constant dense<0.000000e+00> : vector<64x4xf32>
    %792 = tpu.matmul %791, %790, %cst_218 {dimension_numbers = #tpu.dot_dimension_numbers<[1], [0], [0], [1], [0, 0, 1, 1], [], []>} : vector<64x288xbf16>, vector<288x4xbf16>, vector<64x4xf32> -> vector<64x4xf32>
    %793 = arith.negf %792 : vector<64x4xf32>
    %794 = math.exp %793 : vector<64x4xf32>
    %cst_219 = arith.constant 1.000000e+00 : f32
    %795 = vector.broadcast %cst_219 : f32 to vector<64x4xf32>
    %796 = arith.addf %795, %794 : vector<64x4xf32>
    %797 = arith.divf %795, %796 : vector<64x4xf32>
    %798 = arith.mulf %792, %797 : vector<64x4xf32>
    %cst_220 = arith.constant -2.200000e+00 : f32
    %799 = vector.broadcast %cst_220 : f32 to vector<64x4xf32>
    %800 = arith.cmpf oge, %792, %799 : vector<64x4xf32>
    %801 = arith.extui %800 : vector<64x4xi1> to vector<64x4xi32>
    %802 = arith.sitofp %801 : vector<64x4xi32> to vector<64x4xf32>
    %cst_221 = arith.constant -1.800000e+00 : f32
    %803 = vector.broadcast %cst_221 : f32 to vector<64x4xf32>
    %804 = arith.cmpf oge, %792, %803 : vector<64x4xf32>
    %805 = arith.extui %804 : vector<64x4xi1> to vector<64x4xi32>
    %806 = arith.sitofp %805 : vector<64x4xi32> to vector<64x4xf32>
    %cst_222 = arith.constant -1.400000e+00 : f32
    %807 = vector.broadcast %cst_222 : f32 to vector<64x4xf32>
    %808 = arith.cmpf oge, %792, %807 : vector<64x4xf32>
    %809 = arith.extui %808 : vector<64x4xi1> to vector<64x4xi32>
    %810 = arith.sitofp %809 : vector<64x4xi32> to vector<64x4xf32>
    %cst_223 = arith.constant -1.000000e+00 : f32
    %811 = vector.broadcast %cst_223 : f32 to vector<64x4xf32>
    %812 = arith.cmpf oge, %792, %811 : vector<64x4xf32>
    %813 = arith.extui %812 : vector<64x4xi1> to vector<64x4xi32>
    %814 = arith.sitofp %813 : vector<64x4xi32> to vector<64x4xf32>
    %cst_224 = arith.constant -6.000000e-01 : f32
    %815 = vector.broadcast %cst_224 : f32 to vector<64x4xf32>
    %816 = arith.cmpf oge, %792, %815 : vector<64x4xf32>
    %817 = arith.extui %816 : vector<64x4xi1> to vector<64x4xi32>
    %818 = arith.sitofp %817 : vector<64x4xi32> to vector<64x4xf32>
    %cst_225 = arith.constant -0.199999988 : f32
    %819 = vector.broadcast %cst_225 : f32 to vector<64x4xf32>
    %820 = arith.cmpf oge, %792, %819 : vector<64x4xf32>
    %821 = arith.extui %820 : vector<64x4xi1> to vector<64x4xi32>
    %822 = arith.sitofp %821 : vector<64x4xi32> to vector<64x4xf32>
    %cst_226 = arith.constant 0.200000048 : f32
    %823 = vector.broadcast %cst_226 : f32 to vector<64x4xf32>
    %824 = arith.cmpf oge, %792, %823 : vector<64x4xf32>
    %825 = arith.extui %824 : vector<64x4xi1> to vector<64x4xi32>
    %826 = arith.sitofp %825 : vector<64x4xi32> to vector<64x4xf32>
    %cst_227 = arith.constant 6.000000e-01 : f32
    %827 = vector.broadcast %cst_227 : f32 to vector<64x4xf32>
    %828 = arith.cmpf oge, %792, %827 : vector<64x4xf32>
    %829 = arith.extui %828 : vector<64x4xi1> to vector<64x4xi32>
    %830 = arith.sitofp %829 : vector<64x4xi32> to vector<64x4xf32>
    %cst_228 = arith.constant 1.000000e+00 : f32
    %831 = vector.broadcast %cst_228 : f32 to vector<64x4xf32>
    %832 = arith.cmpf oge, %792, %831 : vector<64x4xf32>
    %833 = arith.extui %832 : vector<64x4xi1> to vector<64x4xi32>
    %834 = arith.sitofp %833 : vector<64x4xi32> to vector<64x4xf32>
    %cst_229 = arith.constant 1.4000001 : f32
    %835 = vector.broadcast %cst_229 : f32 to vector<64x4xf32>
    %836 = arith.cmpf oge, %792, %835 : vector<64x4xf32>
    %837 = arith.extui %836 : vector<64x4xi1> to vector<64x4xi32>
    %838 = arith.sitofp %837 : vector<64x4xi32> to vector<64x4xf32>
    %cst_230 = arith.constant 1.800000e+00 : f32
    %839 = vector.broadcast %cst_230 : f32 to vector<64x4xf32>
    %840 = arith.cmpf oge, %792, %839 : vector<64x4xf32>
    %841 = arith.extui %840 : vector<64x4xi1> to vector<64x4xi32>
    %842 = arith.sitofp %841 : vector<64x4xi32> to vector<64x4xf32>
    %cst_231 = arith.constant 2.200000e+00 : f32
    %843 = vector.broadcast %cst_231 : f32 to vector<64x4xf32>
    %844 = arith.cmpf oge, %792, %843 : vector<64x4xf32>
    %845 = arith.extui %844 : vector<64x4xi1> to vector<64x4xi32>
    %846 = arith.sitofp %845 : vector<64x4xi32> to vector<64x4xf32>
    %847 = arith.subf %802, %806 : vector<64x4xf32>
    %848 = arith.subf %806, %810 : vector<64x4xf32>
    %849 = arith.subf %810, %814 : vector<64x4xf32>
    %850 = arith.subf %814, %818 : vector<64x4xf32>
    %851 = arith.subf %818, %822 : vector<64x4xf32>
    %852 = arith.subf %822, %826 : vector<64x4xf32>
    %853 = arith.subf %826, %830 : vector<64x4xf32>
    %854 = arith.subf %830, %834 : vector<64x4xf32>
    %855 = arith.subf %834, %838 : vector<64x4xf32>
    %856 = arith.subf %838, %842 : vector<64x4xf32>
    %857 = arith.subf %842, %846 : vector<64x4xf32>
    %cst_232 = arith.constant 2.500000e+00 : f32
    %858 = vector.broadcast %cst_232 : f32 to vector<64x4xf32>
    %859 = arith.mulf %792, %858 : vector<64x4xf32>
    %cst_233 = arith.constant -5.500000e+00 : f32
    %860 = vector.broadcast %cst_233 : f32 to vector<64x4xf32>
    %861 = arith.subf %859, %860 : vector<64x4xf32>
    %862 = arith.mulf %861, %847 : vector<64x4xf32>
    %cst_234 = arith.constant -3.500000e+00 : f32
    %863 = vector.broadcast %cst_234 : f32 to vector<64x4xf32>
    %864 = arith.subf %863, %859 : vector<64x4xf32>
    %865 = arith.mulf %864, %848 : vector<64x4xf32>
    %866 = arith.addf %862, %865 : vector<64x4xf32>
    %cst_235 = arith.constant -4.500000e+00 : f32
    %867 = vector.broadcast %cst_235 : f32 to vector<64x4xf32>
    %868 = arith.subf %859, %867 : vector<64x4xf32>
    %869 = arith.mulf %868, %848 : vector<64x4xf32>
    %cst_236 = arith.constant -2.500000e+00 : f32
    %870 = vector.broadcast %cst_236 : f32 to vector<64x4xf32>
    %871 = arith.subf %870, %859 : vector<64x4xf32>
    %872 = arith.mulf %871, %849 : vector<64x4xf32>
    %873 = arith.addf %869, %872 : vector<64x4xf32>
    %cst_237 = arith.constant -3.500000e+00 : f32
    %874 = vector.broadcast %cst_237 : f32 to vector<64x4xf32>
    %875 = arith.subf %859, %874 : vector<64x4xf32>
    %876 = arith.mulf %875, %849 : vector<64x4xf32>
    %cst_238 = arith.constant -1.500000e+00 : f32
    %877 = vector.broadcast %cst_238 : f32 to vector<64x4xf32>
    %878 = arith.subf %877, %859 : vector<64x4xf32>
    %879 = arith.mulf %878, %850 : vector<64x4xf32>
    %880 = arith.addf %876, %879 : vector<64x4xf32>
    %cst_239 = arith.constant -2.500000e+00 : f32
    %881 = vector.broadcast %cst_239 : f32 to vector<64x4xf32>
    %882 = arith.subf %859, %881 : vector<64x4xf32>
    %883 = arith.mulf %882, %850 : vector<64x4xf32>
    %cst_240 = arith.constant -0.49999997 : f32
    %884 = vector.broadcast %cst_240 : f32 to vector<64x4xf32>
    %885 = arith.subf %884, %859 : vector<64x4xf32>
    %886 = arith.mulf %885, %851 : vector<64x4xf32>
    %887 = arith.addf %883, %886 : vector<64x4xf32>
    %cst_241 = arith.constant -1.500000e+00 : f32
    %888 = vector.broadcast %cst_241 : f32 to vector<64x4xf32>
    %889 = arith.subf %859, %888 : vector<64x4xf32>
    %890 = arith.mulf %889, %851 : vector<64x4xf32>
    %cst_242 = arith.constant 0.500000119 : f32
    %891 = vector.broadcast %cst_242 : f32 to vector<64x4xf32>
    %892 = arith.subf %891, %859 : vector<64x4xf32>
    %893 = arith.mulf %892, %852 : vector<64x4xf32>
    %894 = arith.addf %890, %893 : vector<64x4xf32>
    %cst_243 = arith.constant -0.49999997 : f32
    %895 = vector.broadcast %cst_243 : f32 to vector<64x4xf32>
    %896 = arith.subf %859, %895 : vector<64x4xf32>
    %897 = arith.mulf %896, %852 : vector<64x4xf32>
    %cst_244 = arith.constant 1.500000e+00 : f32
    %898 = vector.broadcast %cst_244 : f32 to vector<64x4xf32>
    %899 = arith.subf %898, %859 : vector<64x4xf32>
    %900 = arith.mulf %899, %853 : vector<64x4xf32>
    %901 = arith.addf %897, %900 : vector<64x4xf32>
    %cst_245 = arith.constant 0.500000119 : f32
    %902 = vector.broadcast %cst_245 : f32 to vector<64x4xf32>
    %903 = arith.subf %859, %902 : vector<64x4xf32>
    %904 = arith.mulf %903, %853 : vector<64x4xf32>
    %cst_246 = arith.constant 2.500000e+00 : f32
    %905 = vector.broadcast %cst_246 : f32 to vector<64x4xf32>
    %906 = arith.subf %905, %859 : vector<64x4xf32>
    %907 = arith.mulf %906, %854 : vector<64x4xf32>
    %908 = arith.addf %904, %907 : vector<64x4xf32>
    %cst_247 = arith.constant 1.500000e+00 : f32
    %909 = vector.broadcast %cst_247 : f32 to vector<64x4xf32>
    %910 = arith.subf %859, %909 : vector<64x4xf32>
    %911 = arith.mulf %910, %854 : vector<64x4xf32>
    %cst_248 = arith.constant 3.50000024 : f32
    %912 = vector.broadcast %cst_248 : f32 to vector<64x4xf32>
    %913 = arith.subf %912, %859 : vector<64x4xf32>
    %914 = arith.mulf %913, %855 : vector<64x4xf32>
    %915 = arith.addf %911, %914 : vector<64x4xf32>
    %cst_249 = arith.constant 2.500000e+00 : f32
    %916 = vector.broadcast %cst_249 : f32 to vector<64x4xf32>
    %917 = arith.subf %859, %916 : vector<64x4xf32>
    %918 = arith.mulf %917, %855 : vector<64x4xf32>
    %cst_250 = arith.constant 4.500000e+00 : f32
    %919 = vector.broadcast %cst_250 : f32 to vector<64x4xf32>
    %920 = arith.subf %919, %859 : vector<64x4xf32>
    %921 = arith.mulf %920, %856 : vector<64x4xf32>
    %922 = arith.addf %918, %921 : vector<64x4xf32>
    %cst_251 = arith.constant 3.50000024 : f32
    %923 = vector.broadcast %cst_251 : f32 to vector<64x4xf32>
    %924 = arith.subf %859, %923 : vector<64x4xf32>
    %925 = arith.mulf %924, %856 : vector<64x4xf32>
    %cst_252 = arith.constant 5.500000e+00 : f32
    %926 = vector.broadcast %cst_252 : f32 to vector<64x4xf32>
    %927 = arith.subf %926, %859 : vector<64x4xf32>
    %928 = arith.mulf %927, %857 : vector<64x4xf32>
    %929 = arith.addf %925, %928 : vector<64x4xf32>
    %cst_253 = arith.constant 1.250000e+00 : f32
    %930 = vector.broadcast %cst_253 : f32 to vector<64x4xf32>
    %931 = arith.mulf %792, %930 : vector<64x4xf32>
    %cst_254 = arith.constant -2.750000e+00 : f32
    %932 = vector.broadcast %cst_254 : f32 to vector<64x4xf32>
    %933 = arith.subf %931, %932 : vector<64x4xf32>
    %934 = arith.mulf %933, %866 : vector<64x4xf32>
    %cst_255 = arith.constant -1.250000e+00 : f32
    %935 = vector.broadcast %cst_255 : f32 to vector<64x4xf32>
    %936 = arith.subf %935, %931 : vector<64x4xf32>
    %937 = arith.mulf %936, %873 : vector<64x4xf32>
    %938 = arith.addf %934, %937 : vector<64x4xf32>
    %cst_256 = arith.constant -2.250000e+00 : f32
    %939 = vector.broadcast %cst_256 : f32 to vector<64x4xf32>
    %940 = arith.subf %931, %939 : vector<64x4xf32>
    %941 = arith.mulf %940, %873 : vector<64x4xf32>
    %cst_257 = arith.constant -7.500000e-01 : f32
    %942 = vector.broadcast %cst_257 : f32 to vector<64x4xf32>
    %943 = arith.subf %942, %931 : vector<64x4xf32>
    %944 = arith.mulf %943, %880 : vector<64x4xf32>
    %945 = arith.addf %941, %944 : vector<64x4xf32>
    %cst_258 = arith.constant -1.750000e+00 : f32
    %946 = vector.broadcast %cst_258 : f32 to vector<64x4xf32>
    %947 = arith.subf %931, %946 : vector<64x4xf32>
    %948 = arith.mulf %947, %880 : vector<64x4xf32>
    %cst_259 = arith.constant -0.249999985 : f32
    %949 = vector.broadcast %cst_259 : f32 to vector<64x4xf32>
    %950 = arith.subf %949, %931 : vector<64x4xf32>
    %951 = arith.mulf %950, %887 : vector<64x4xf32>
    %952 = arith.addf %948, %951 : vector<64x4xf32>
    %cst_260 = arith.constant -1.250000e+00 : f32
    %953 = vector.broadcast %cst_260 : f32 to vector<64x4xf32>
    %954 = arith.subf %931, %953 : vector<64x4xf32>
    %955 = arith.mulf %954, %887 : vector<64x4xf32>
    %cst_261 = arith.constant 0.25000006 : f32
    %956 = vector.broadcast %cst_261 : f32 to vector<64x4xf32>
    %957 = arith.subf %956, %931 : vector<64x4xf32>
    %958 = arith.mulf %957, %894 : vector<64x4xf32>
    %959 = arith.addf %955, %958 : vector<64x4xf32>
    %cst_262 = arith.constant -7.500000e-01 : f32
    %960 = vector.broadcast %cst_262 : f32 to vector<64x4xf32>
    %961 = arith.subf %931, %960 : vector<64x4xf32>
    %962 = arith.mulf %961, %894 : vector<64x4xf32>
    %cst_263 = arith.constant 7.500000e-01 : f32
    %963 = vector.broadcast %cst_263 : f32 to vector<64x4xf32>
    %964 = arith.subf %963, %931 : vector<64x4xf32>
    %965 = arith.mulf %964, %901 : vector<64x4xf32>
    %966 = arith.addf %962, %965 : vector<64x4xf32>
    %cst_264 = arith.constant -0.249999985 : f32
    %967 = vector.broadcast %cst_264 : f32 to vector<64x4xf32>
    %968 = arith.subf %931, %967 : vector<64x4xf32>
    %969 = arith.mulf %968, %901 : vector<64x4xf32>
    %cst_265 = arith.constant 1.250000e+00 : f32
    %970 = vector.broadcast %cst_265 : f32 to vector<64x4xf32>
    %971 = arith.subf %970, %931 : vector<64x4xf32>
    %972 = arith.mulf %971, %908 : vector<64x4xf32>
    %973 = arith.addf %969, %972 : vector<64x4xf32>
    %cst_266 = arith.constant 0.25000006 : f32
    %974 = vector.broadcast %cst_266 : f32 to vector<64x4xf32>
    %975 = arith.subf %931, %974 : vector<64x4xf32>
    %976 = arith.mulf %975, %908 : vector<64x4xf32>
    %cst_267 = arith.constant 1.75000012 : f32
    %977 = vector.broadcast %cst_267 : f32 to vector<64x4xf32>
    %978 = arith.subf %977, %931 : vector<64x4xf32>
    %979 = arith.mulf %978, %915 : vector<64x4xf32>
    %980 = arith.addf %976, %979 : vector<64x4xf32>
    %cst_268 = arith.constant 7.500000e-01 : f32
    %981 = vector.broadcast %cst_268 : f32 to vector<64x4xf32>
    %982 = arith.subf %931, %981 : vector<64x4xf32>
    %983 = arith.mulf %982, %915 : vector<64x4xf32>
    %cst_269 = arith.constant 2.250000e+00 : f32
    %984 = vector.broadcast %cst_269 : f32 to vector<64x4xf32>
    %985 = arith.subf %984, %931 : vector<64x4xf32>
    %986 = arith.mulf %985, %922 : vector<64x4xf32>
    %987 = arith.addf %983, %986 : vector<64x4xf32>
    %cst_270 = arith.constant 1.250000e+00 : f32
    %988 = vector.broadcast %cst_270 : f32 to vector<64x4xf32>
    %989 = arith.subf %931, %988 : vector<64x4xf32>
    %990 = arith.mulf %989, %922 : vector<64x4xf32>
    %cst_271 = arith.constant 2.750000e+00 : f32
    %991 = vector.broadcast %cst_271 : f32 to vector<64x4xf32>
    %992 = arith.subf %991, %931 : vector<64x4xf32>
    %993 = arith.mulf %992, %929 : vector<64x4xf32>
    %994 = arith.addf %990, %993 : vector<64x4xf32>
    %cst_272 = arith.constant 0.833333313 : f32
    %995 = vector.broadcast %cst_272 : f32 to vector<64x4xf32>
    %996 = arith.mulf %792, %995 : vector<64x4xf32>
    %cst_273 = arith.constant -1.83333337 : f32
    %997 = vector.broadcast %cst_273 : f32 to vector<64x4xf32>
    %998 = arith.subf %996, %997 : vector<64x4xf32>
    %999 = arith.mulf %998, %938 : vector<64x4xf32>
    %cst_274 = arith.constant -5.000000e-01 : f32
    %1000 = vector.broadcast %cst_274 : f32 to vector<64x4xf32>
    %1001 = arith.subf %1000, %996 : vector<64x4xf32>
    %1002 = arith.mulf %1001, %945 : vector<64x4xf32>
    %1003 = arith.addf %999, %1002 : vector<64x4xf32>
    %cst_275 = arith.constant -1.49999988 : f32
    %1004 = vector.broadcast %cst_275 : f32 to vector<64x4xf32>
    %1005 = arith.subf %996, %1004 : vector<64x4xf32>
    %1006 = arith.mulf %1005, %945 : vector<64x4xf32>
    %cst_276 = arith.constant -0.166666657 : f32
    %1007 = vector.broadcast %cst_276 : f32 to vector<64x4xf32>
    %1008 = arith.subf %1007, %996 : vector<64x4xf32>
    %1009 = arith.mulf %1008, %952 : vector<64x4xf32>
    %1010 = arith.addf %1006, %1009 : vector<64x4xf32>
    %cst_277 = arith.constant -1.16666663 : f32
    %1011 = vector.broadcast %cst_277 : f32 to vector<64x4xf32>
    %1012 = arith.subf %996, %1011 : vector<64x4xf32>
    %1013 = arith.mulf %1012, %952 : vector<64x4xf32>
    %cst_278 = arith.constant 0.166666701 : f32
    %1014 = vector.broadcast %cst_278 : f32 to vector<64x4xf32>
    %1015 = arith.subf %1014, %996 : vector<64x4xf32>
    %1016 = arith.mulf %1015, %959 : vector<64x4xf32>
    %1017 = arith.addf %1013, %1016 : vector<64x4xf32>
    %cst_279 = arith.constant -0.833333313 : f32
    %1018 = vector.broadcast %cst_279 : f32 to vector<64x4xf32>
    %1019 = arith.subf %996, %1018 : vector<64x4xf32>
    %1020 = arith.mulf %1019, %959 : vector<64x4xf32>
    %cst_280 = arith.constant 5.000000e-01 : f32
    %1021 = vector.broadcast %cst_280 : f32 to vector<64x4xf32>
    %1022 = arith.subf %1021, %996 : vector<64x4xf32>
    %1023 = arith.mulf %1022, %966 : vector<64x4xf32>
    %1024 = arith.addf %1020, %1023 : vector<64x4xf32>
    %cst_281 = arith.constant -5.000000e-01 : f32
    %1025 = vector.broadcast %cst_281 : f32 to vector<64x4xf32>
    %1026 = arith.subf %996, %1025 : vector<64x4xf32>
    %1027 = arith.mulf %1026, %966 : vector<64x4xf32>
    %cst_282 = arith.constant 0.833333313 : f32
    %1028 = vector.broadcast %cst_282 : f32 to vector<64x4xf32>
    %1029 = arith.subf %1028, %996 : vector<64x4xf32>
    %1030 = arith.mulf %1029, %973 : vector<64x4xf32>
    %1031 = arith.addf %1027, %1030 : vector<64x4xf32>
    %cst_283 = arith.constant -0.166666657 : f32
    %1032 = vector.broadcast %cst_283 : f32 to vector<64x4xf32>
    %1033 = arith.subf %996, %1032 : vector<64x4xf32>
    %1034 = arith.mulf %1033, %973 : vector<64x4xf32>
    %cst_284 = arith.constant 1.16666675 : f32
    %1035 = vector.broadcast %cst_284 : f32 to vector<64x4xf32>
    %1036 = arith.subf %1035, %996 : vector<64x4xf32>
    %1037 = arith.mulf %1036, %980 : vector<64x4xf32>
    %1038 = arith.addf %1034, %1037 : vector<64x4xf32>
    %cst_285 = arith.constant 0.166666701 : f32
    %1039 = vector.broadcast %cst_285 : f32 to vector<64x4xf32>
    %1040 = arith.subf %996, %1039 : vector<64x4xf32>
    %1041 = arith.mulf %1040, %980 : vector<64x4xf32>
    %cst_286 = arith.constant 1.49999988 : f32
    %1042 = vector.broadcast %cst_286 : f32 to vector<64x4xf32>
    %1043 = arith.subf %1042, %996 : vector<64x4xf32>
    %1044 = arith.mulf %1043, %987 : vector<64x4xf32>
    %1045 = arith.addf %1041, %1044 : vector<64x4xf32>
    %cst_287 = arith.constant 5.000000e-01 : f32
    %1046 = vector.broadcast %cst_287 : f32 to vector<64x4xf32>
    %1047 = arith.subf %996, %1046 : vector<64x4xf32>
    %1048 = arith.mulf %1047, %987 : vector<64x4xf32>
    %cst_288 = arith.constant 1.83333337 : f32
    %1049 = vector.broadcast %cst_288 : f32 to vector<64x4xf32>
    %1050 = arith.subf %1049, %996 : vector<64x4xf32>
    %1051 = arith.mulf %1050, %994 : vector<64x4xf32>
    %1052 = arith.addf %1048, %1051 : vector<64x4xf32>
    %1053 = tpu.concatenate %798, %1003, %1010, %1017, %1024, %1031, %1038, %1045, %1052 in 0 : vector<64x4xf32>, vector<64x4xf32>, vector<64x4xf32>, vector<64x4xf32>, vector<64x4xf32>, vector<64x4xf32>, vector<64x4xf32>, vector<64x4xf32>, vector<64x4xf32> -> vector<576x4xf32>
    %1054 = arith.truncf %1053 : vector<576x4xf32> to vector<576x4xbf16>
    %c0_289 = arith.constant 0 : index
    %c0_290 = arith.constant 0 : index
    %1055 = vector.load %arg4[%c0_289, %c0_290] : memref<1x576xbf16, #tpu.memory_space<vmem>>, vector<1x576xbf16>
    %cst_291 = arith.constant dense<0.000000e+00> : vector<1x4xf32>
    %1056 = tpu.matmul %1055, %1054, %cst_291 {dimension_numbers = #tpu.dot_dimension_numbers<[1], [0], [0], [1], [0, 0, 1, 1], [], []>} : vector<1x576xbf16>, vector<576x4xbf16>, vector<1x4xf32> -> vector<1x4xf32>
    %c0_292 = arith.constant 0 : index
    %c0_293 = arith.constant 0 : index
    %1057 = vector.load %arg5[%c0_292, %c0_293] : memref<1x4xf32, #tpu.memory_space<vmem>>, vector<1x4xf32>
    tpu.vector_store %arg5[%c0_292, %c0_293], %1056 {strides = array<i32>} : memref<1x4xf32, #tpu.memory_space<vmem>>, vector<1x4xf32>,
    return
  }
}

</mosaic_0001>

<llo_original>
// kernel: kan_critic_forward.1
$region0: #{kan_critic_forward.1}
  #allocation0 [shape = 'u32[]', space=smem, size = 0x4, offset = 0x4, fixed_abs, tag = 'smem constant byte address 0x4 - core index']
  #allocation1 [shape = 'u32[72,128]{1,0:T(1,128)}', space=vmem, size = 0x9000, scoped, tag = 'internal scratch']
  %s0 = inlined_call_operand.vmem [shape: f32[8,4], index: 0, kind: input, shape index: {}]
  %s1 = inlined_call_operand.hbm [shape: bf16[64,72], index: 1, kind: input, shape index: {}]
  %s2 = inlined_call_operand.hbm [shape: bf16[32,576], index: 2, kind: input, shape index: {}]
  %s3 = inlined_call_operand.hbm [shape: bf16[64,288], index: 3, kind: input, shape index: {}]
  %s4 = inlined_call_operand.vmem [shape: bf16[1,576], index: 4, kind: input, shape index: {}]
  %s5 = inlined_call_operand.hbm [shape: f32[1,4], index: 5, kind: output, shape index: {}]
  %s6 = sld [smem:[#allocation0]]
  $region42: #{kan_critic_forward.1} parent=0
    _
  %s8 = ssub.s32 1, %s6
  %s9 = scalar_select 0, %s8, %s6
  $region1: #{kan_critic_forward.1} parent=0
    #allocation2 [shape = 'u8[16384]{0}', space=vmem, size = 0x4000, scoped, tag = 'input window, operand 1, single buffered']
    #allocation3 [shape = 's32[1]{0}', space=sflag, size = 0x4, scoped, tag = 'scoped memory for kan_critic_forward.1']
    #allocation4 [shape = 's32[1]{0}', space=sflag, size = 0x4, scoped, tag = 'scoped memory for kan_critic_forward.1']
    #allocation5 [shape = 'u8[40960]{0}', space=vmem, size = 0xa000, scoped, tag = 'input window, operand 2, single buffered']
    #allocation6 [shape = 's32[1]{0}', space=sflag, size = 0x4, scoped, tag = 'scoped memory for kan_critic_forward.1']
    #allocation7 [shape = 'u8[49152]{0}', space=vmem, size = 0xc000, scoped, tag = 'input window, operand 3, single buffered']
    #allocation8 [shape = 'u8[512]{0}', space=vmem, size = 0x400, scoped, tag = 'output window, operand 0, single buffered']
    %10 = vsyncpa [#allocation3], 0
    %11 = vsyncpa [#allocation6], 0
    %12 = vsyncpa [#allocation4], 0
    // Predicated region
    $region2: #{kan_critic_forward.1} parent=1 // pred_check
      _
    $region3: #{kan_critic_forward.1} parent=1 // pred_check_branch
      %14 = sbr.rel (0) target = $region5
    $region4: #{kan_critic_forward.1} parent=1 // pred_region
      _
    $region5: #{kan_critic_forward.1} parent=1 // pred_fallthru
      _
    // Predicated region
    $region6: #{kan_critic_forward.1} parent=1 // pred_check
      _
    $region7: #{kan_critic_forward.1} parent=1 // pred_check_branch
      %16 = sbr.rel (0) target = $region9
    $region8: #{kan_critic_forward.1} parent=1 // pred_region
      %18 = vsyncadd [#allocation3], 0
      %s19 = sshll.u32 %s1, 4
      %s20 = int_to_ptr.hbm [resolvable:$true] %s19
      %s21 = sshll.u32 [#allocation2], 4
      %s22 = int_to_ptr.vmem [resolvable:$true] %s21
      %27 = dma.hbm_to_vmem [thread:$0]  %s20, 512, %s22, [#allocation3], 64, 64, 4
    $region9: #{kan_critic_forward.1} parent=1 // pred_fallthru
      _
    // Predicated region
    $region10: #{kan_critic_forward.1} parent=1 // pred_check
      _
    $region11: #{kan_critic_forward.1} parent=1 // pred_check_branch
      %29 = sbr.rel (0) target = $region13
    $region12: #{kan_critic_forward.1} parent=1 // pred_region
      %31 = vsyncadd [#allocation6], 0
      %s32 = sshll.u32 %s2, 4
      %s33 = int_to_ptr.hbm [resolvable:$true] %s32
      %s34 = sshll.u32 [#allocation5], 4
      %s35 = int_to_ptr.vmem [resolvable:$true] %s34
      %40 = dma.hbm_to_vmem [thread:$0]  %s33, 1280, %s35, [#allocation6], 320, 320, 20
    $region13: #{kan_critic_forward.1} parent=1 // pred_fallthru
      _
    // Predicated region
    $region14: #{kan_critic_forward.1} parent=1 // pred_check
      _
    $region15: #{kan_critic_forward.1} parent=1 // pred_check_branch
      %42 = sbr.rel (0) target = $region17
    $region16: #{kan_critic_forward.1} parent=1 // pred_region
      %44 = vsyncadd [#allocation6], 0
      %s45 = sshll.u32 %s3, 4
      %s46 = int_to_ptr.hbm [resolvable:$true] %s45
      %s47 = sshll.u32 [#allocation7], 4
      %s48 = int_to_ptr.vmem [resolvable:$true] %s47
      %53 = dma.hbm_to_vmem [thread:$0]  %s46, 1536, %s48, [#allocation6], 192, 192, 12
    $region17: #{kan_critic_forward.1} parent=1 // pred_fallthru
      _
    // Predicated region
    $region18: #{kan_critic_forward.1} parent=1 // pred_check
      _
    $region19: #{kan_critic_forward.1} parent=1 // pred_check_branch
      %55 = sbr.rel (0) target = $region21
    $region20: #{kan_critic_forward.1} parent=1 // pred_region
      _
    $region21: #{kan_critic_forward.1} parent=1 // pred_fallthru
      _
    // Predicated region
    $region22: #{kan_critic_forward.1} parent=1 // pred_check
      _
    $region23: #{kan_critic_forward.1} parent=1 // pred_check_branch
      %57 = sbr.rel (0) target = $region25
    $region24: #{kan_critic_forward.1} parent=1 // pred_region
      %59 = dma.done [#allocation3], 512
    $region25: #{kan_critic_forward.1} parent=1 // pred_fallthru
      _
    // Predicated region
    $region26: #{kan_critic_forward.1} parent=1 // pred_check
      _
    $region27: #{kan_critic_forward.1} parent=1 // pred_check_branch
      %61 = sbr.rel (0) target = $region29
    $region28: #{kan_critic_forward.1} parent=1 // pred_region
      %63 = dma.done [#allocation6], 1280
    $region29: #{kan_critic_forward.1} parent=1 // pred_fallthru
      _
    // Predicated region
    $region30: #{kan_critic_forward.1} parent=1 // pred_check
      _
    $region31: #{kan_critic_forward.1} parent=1 // pred_check_branch
      %65 = sbr.rel (0) target = $region33
    $region32: #{kan_critic_forward.1} parent=1 // pred_region
      %67 = dma.done [#allocation6], 1536
    $region33: #{kan_critic_forward.1} parent=1 // pred_fallthru
      _
    %v69 = vld [vmem:[%s0] sm:$0xff]
    %v70 = vxor.u32 %v69, 2147483648
    %v71 = vmul.f32 %v70, 1.442695
    %v72 = vpow.pop %v71
    %v73 = vadd.f32 %v72, 1.0
    %v74 = vrcp.pop %v73
    %v75 = vmul.f32 %v73, %v74
    %v76 = vsub.f32 1.0, %v75
    %v77 = vmul.f32 %v74, %v76
    %v78 = vadd.f32 %v74, %v77
    %vm79 = vweird.f32 %v73
    %vm80 = vweird.f32 %v74
    %vm81 = vmor %vm79, %vm80
    %v82 = vsel %vm81, %v74, %v78
    %v83 = vand.u32 2147483647, %v73
    %vm84 = vcmp.eq.f32.partialorder %v83, 8.507059e+37
    %v85 = vand.u32 %v73, 2147483648
    %v86 = vor.u32 1.1754944e-38, %v85
    %v87 = vsel %vm84, %v86, %v82
    %v88 = vmul.f32 1.0, %v87
    %v89 = vmul.f32 %v69, %v88
    %vm90 = vcmp.ge.f32.partialorder %v69, -2.2
    %v91 = vsel %vm90, 1, 0
    %v92 = vcvt.s32.f32 %v91
    %vm93 = vcmp.ge.f32.partialorder %v69, -1.8
    %v94 = vsel %vm93, 1, 0
    %v95 = vcvt.s32.f32 %v94
    %vm96 = vcmp.ge.f32.partialorder %v69, -1.4
    %v97 = vsel %vm96, 1, 0
    %v98 = vcvt.s32.f32 %v97
    %vm99 = vcmp.ge.f32.partialorder %v69, -1.0
    %v100 = vsel %vm99, 1, 0
    %v101 = vcvt.s32.f32 %v100
    %vm102 = vcmp.ge.f32.partialorder %v69, -0.6
    %v103 = vsel %vm102, 1, 0
    %v104 = vcvt.s32.f32 %v103
    %vm105 = vcmp.ge.f32.partialorder %v69, -0.19999999
    %v106 = vsel %vm105, 1, 0
    %v107 = vcvt.s32.f32 %v106
    %vm108 = vcmp.ge.f32.partialorder %v69, 0.20000005
    %v109 = vsel %vm108, 1, 0
    %v110 = vcvt.s32.f32 %v109
    %vm111 = vcmp.ge.f32.partialorder %v69, 0.6
    %v112 = vsel %vm111, 1, 0
    %v113 = vcvt.s32.f32 %v112
    %vm114 = vcmp.ge.f32.partialorder %v69, 1.0
    %v115 = vsel %vm114, 1, 0
    %v116 = vcvt.s32.f32 %v115
    %vm117 = vcmp.ge.f32.partialorder %v69, 1.4000001
    %v118 = vsel %vm117, 1, 0
    %v119 = vcvt.s32.f32 %v118
    %vm120 = vcmp.ge.f32.partialorder %v69, 1.8
    %v121 = vsel %vm120, 1, 0
    %v122 = vcvt.s32.f32 %v121
    %vm123 = vcmp.ge.f32.partialorder %v69, 2.2
    %v124 = vsel %vm123, 1, 0
    %v125 = vcvt.s32.f32 %v124
    %v126 = vsub.f32 %v92, %v95
    %v127 = vsub.f32 %v95, %v98
    %v128 = vsub.f32 %v98, %v101
    %v129 = vsub.f32 %v101, %v104
    %v130 = vsub.f32 %v104, %v107
    %v131 = vsub.f32 %v107, %v110
    %v132 = vsub.f32 %v110, %v113
    %v133 = vsub.f32 %v113, %v116
    %v134 = vsub.f32 %v116, %v119
    %v135 = vsub.f32 %v119, %v122
    %v136 = vsub.f32 %v122, %v125
    %v137 = vmul.f32 %v69, 2.5
    %v138 = vsub.f32 %v137, -5.5
    %v139 = vmul.f32 %v138, %v126
    %v140 = vsub.f32 -3.5, %v137
    %v141 = vmul.f32 %v140, %v127
    %v142 = vadd.f32 %v139, %v141
    %v143 = vsub.f32 %v137, -4.5
    %v144 = vmul.f32 %v143, %v127
    %v145 = vsub.f32 -2.5, %v137
    %v146 = vmul.f32 %v145, %v128
    %v147 = vadd.f32 %v144, %v146
    %v148 = vsub.f32 %v137, -3.5
    %v149 = vmul.f32 %v148, %v128
    %v150 = vsub.f32 -1.5, %v137
    %v151 = vmul.f32 %v150, %v129
    %v152 = vadd.f32 %v149, %v151
    %v153 = vsub.f32 %v137, -2.5
    %v154 = vmul.f32 %v153, %v129
    %v155 = vsub.f32 -0.49999997, %v137
    %v156 = vmul.f32 %v155, %v130
    %v157 = vadd.f32 %v154, %v156
    %v158 = vsub.f32 %v137, -1.5
    %v159 = vmul.f32 %v158, %v130
    %v160 = vsub.f32 0.5000001, %v137
    %v161 = vmul.f32 %v160, %v131
    %v162 = vadd.f32 %v159, %v161
    %v163 = vsub.f32 %v137, -0.49999997
    %v164 = vmul.f32 %v163, %v131
    %v165 = vsub.f32 1.5, %v137
    %v166 = vmul.f32 %v165, %v132
    %v167 = vadd.f32 %v164, %v166
    %v168 = vsub.f32 %v137, 0.5000001
    %v169 = vmul.f32 %v168, %v132
    %v170 = vsub.f32 2.5, %v137
    %v171 = vmul.f32 %v170, %v133
    %v172 = vadd.f32 %v169, %v171
    %v173 = vsub.f32 %v137, 1.5
    %v174 = vmul.f32 %v173, %v133
    %v175 = vsub.f32 3.5000002, %v137
    %v176 = vmul.f32 %v175, %v134
    %v177 = vadd.f32 %v174, %v176
    %v178 = vsub.f32 %v137, 2.5
    %v179 = vmul.f32 %v178, %v134
    %v180 = vsub.f32 4.5, %v137
    %v181 = vmul.f32 %v180, %v135
    %v182 = vadd.f32 %v179, %v181
    %v183 = vsub.f32 %v137, 3.5000002
    %v184 = vmul.f32 %v183, %v135
    %v185 = vsub.f32 5.5, %v137
    %v186 = vmul.f32 %v185, %v136
    %v187 = vadd.f32 %v184, %v186
    %v188 = vmul.f32 %v69, 1.25
    %v189 = vsub.f32 %v188, -2.75
    %v190 = vmul.f32 %v189, %v142
    %v191 = vsub.f32 -1.25, %v188
    %v192 = vmul.f32 %v191, %v147
    %v193 = vadd.f32 %v190, %v192
    %v194 = vsub.f32 %v188, -2.25
    %v195 = vmul.f32 %v194, %v147
    %v196 = vsub.f32 -0.75, %v188
    %v197 = vmul.f32 %v196, %v152
    %v198 = vadd.f32 %v195, %v197
    %v199 = vsub.f32 %v188, -1.75
    %v200 = vmul.f32 %v199, %v152
    %v201 = vsub.f32 -0.24999999, %v188
    %v202 = vmul.f32 %v201, %v157
    %v203 = vadd.f32 %v200, %v202
    %v204 = vsub.f32 %v188, -1.25
    %v205 = vmul.f32 %v204, %v157
    %v206 = vsub.f32 0.25000006, %v188
    %v207 = vmul.f32 %v206, %v162
    %v208 = vadd.f32 %v205, %v207
    %v209 = vsub.f32 %v188, -0.75
    %v210 = vmul.f32 %v209, %v162
    %v211 = vsub.f32 0.75, %v188
    %v212 = vmul.f32 %v211, %v167
    %v213 = vadd.f32 %v210, %v212
    %v214 = vsub.f32 %v188, -0.24999999
    %v215 = vmul.f32 %v214, %v167
    %v216 = vsub.f32 1.25, %v188
    %v217 = vmul.f32 %v216, %v172
    %v218 = vadd.f32 %v215, %v217
    %v219 = vsub.f32 %v188, 0.25000006
    %v220 = vmul.f32 %v219, %v172
    %v221 = vsub.f32 1.7500001, %v188
    %v222 = vmul.f32 %v221, %v177
    %v223 = vadd.f32 %v220, %v222
    %v224 = vsub.f32 %v188, 0.75
    %v225 = vmul.f32 %v224, %v177
    %v226 = vsub.f32 2.25, %v188
    %v227 = vmul.f32 %v226, %v182
    %v228 = vadd.f32 %v225, %v227
    %v229 = vsub.f32 %v188, 1.25
    %v230 = vmul.f32 %v229, %v182
    %v231 = vsub.f32 2.75, %v188
    %v232 = vmul.f32 %v231, %v187
    %v233 = vadd.f32 %v230, %v232
    %v234 = vmul.f32 %v69, 0.8333333
    %v235 = vsub.f32 %v234, -1.8333334
    %v236 = vmul.f32 %v235, %v193
    %v237 = vsub.f32 -0.5, %v234
    %v238 = vmul.f32 %v237, %v198
    %v239 = vadd.f32 %v236, %v238
    %v240 = vsub.f32 %v234, -1.4999999
    %v241 = vmul.f32 %v240, %v198
    %v242 = vsub.f32 -0.16666666, %v234
    %v243 = vmul.f32 %v242, %v203
    %v244 = vadd.f32 %v241, %v243
    %v245 = vsub.f32 %v234, -1.1666666
    %v246 = vmul.f32 %v245, %v203
    %v247 = vsub.f32 0.1666667, %v234
    %v248 = vmul.f32 %v247, %v208
    %v249 = vadd.f32 %v246, %v248
    %v250 = vsub.f32 %v234, -0.8333333
    %v251 = vmul.f32 %v250, %v208
    %v252 = vsub.f32 0.5, %v234
    %v253 = vmul.f32 %v252, %v213
    %v254 = vadd.f32 %v251, %v253
    %v255 = vsub.f32 %v234, -0.5
    %v256 = vmul.f32 %v255, %v213
    %v257 = vsub.f32 0.8333333, %v234
    %v258 = vmul.f32 %v257, %v218
    %v259 = vadd.f32 %v256, %v258
    %v260 = vsub.f32 %v234, -0.16666666
    %v261 = vmul.f32 %v260, %v218
    %v262 = vsub.f32 1.1666667, %v234
    %v263 = vmul.f32 %v262, %v223
    %v264 = vadd.f32 %v261, %v263
    %v265 = vsub.f32 %v234, 0.1666667
    %v266 = vmul.f32 %v265, %v223
    %v267 = vsub.f32 1.4999999, %v234
    %v268 = vmul.f32 %v267, %v228
    %v269 = vadd.f32 %v266, %v268
    %v270 = vsub.f32 %v234, 0.5
    %v271 = vmul.f32 %v270, %v228
    %v272 = vsub.f32 1.8333334, %v234
    %v273 = vmul.f32 %v272, %v233
    %v274 = vadd.f32 %v271, %v273
    %v275 = vpack.c.bf16 %v239, %v89
    %v276 = vpack.c.bf16 %v249, %v244
    %v277 = vpack.c.bf16 %v259, %v254
    %v278 = vpack.c.bf16 %v269, %v264
    %v279 = vpack.c.bf16 %v274, %v274
    %v280 = vld [vmem:[#allocation2] sm:$0xf]
    %v281 = vld [vmem:[#allocation2 + $0x4] sm:$0xf]
    %v282 = vld [vmem:[#allocation2 + $0x8] sm:$0xf]
    %v283 = vld [vmem:[#allocation2 + $0xc] sm:$0xf]
    %v284 = vld [vmem:[#allocation2 + $0x10] sm:$0xf]
    %v285 = vld [vmem:[#allocation2 + $0x14] sm:$0xf]
    %v286 = vld [vmem:[#allocation2 + $0x18] sm:$0xf]
    %v287 = vld [vmem:[#allocation2 + $0x1c] sm:$0xf]
    %v296 = vunpack.c.l.b16 %v280
    %v297 = vunpack.c.l.b16 %v281
    %v298 = vunpack.c.l.b16 %v282
    %v299 = vunpack.c.l.b16 %v283
    %v300 = vunpack.c.l.b16 %v284
    %v301 = vunpack.c.l.b16 %v285
    %v302 = vunpack.c.l.b16 %v286
    %v303 = vunpack.c.l.b16 %v287
    %v304 = vpack.c.b16 %v297, %v296
    %v305 = vpack.c.b16 %v299, %v298
    %v306 = vpack.c.b16 %v301, %v300
    %v307 = vpack.c.b16 %v303, %v302
    %vm308 = vcmask 588800
    %v310 = vsel %vm308, %v304, 0
    %v313 = vsel %vm308, %v305, 0
    %v316 = vsel %vm308, %v306, 0
    %v319 = vsel %vm308, %v307, 0
    %vm321 = vcmask 1043456
    %v323 = vsel %vm321, %v279, 0
    %325 = vmatpush.bf16.msra.mxu0 0
    %326 = vmatpush.bf16.msra.mxu0 0
    %327 = vmatpush.bf16.msra.mxu0 0
    %328 = vmatpush.bf16.msra.mxu0 %v323
    %329 = vmatpush.bf16.msra.mxu0 %v278
    %330 = vmatpush.bf16.msra.mxu0 %v277
    %331 = vmatpush.bf16.msra.mxu0 %v276
    %332 = vmatpush.bf16.msra.mxu0 %v275
    %333 = vmatmul.bf16.gmra.mxu0 %v310
    %v334 = vpop.f32.mrf.mxu0
    %v335 = vadd.f32 0.0, %v334
    %v336 = vpop.f32.mrf.mxu0
    %v337 = vadd.f32 0.0, %v336
    %338 = vmatmul.bf16.gmra.mxu0 %v313
    %v339 = vpop.f32.mrf.mxu0
    %v340 = vadd.f32 0.0, %v339
    %v341 = vpop.f32.mrf.mxu0
    %v342 = vadd.f32 0.0, %v341
    %343 = vmatmul.bf16.gmra.mxu0 %v316
    %v344 = vpop.f32.mrf.mxu0
    %v345 = vadd.f32 0.0, %v344
    %v346 = vpop.f32.mrf.mxu0
    %v347 = vadd.f32 0.0, %v346
    %348 = vmatmul.bf16.gmra.mxu0 %v319
    %v349 = vpop.f32.mrf.mxu0
    %v350 = vadd.f32 0.0, %v349
    %v351 = vpop.f32.mrf.mxu0
    %v352 = vadd.f32 0.0, %v351
    %353 = vdwg.mxu0
    %v354 = vxor.u32 %v335, 2147483648
    %v355 = vxor.u32 %v337, 2147483648
    %v356 = vxor.u32 %v340, 2147483648
    %v357 = vxor.u32 %v342, 2147483648
    %v358 = vxor.u32 %v345, 2147483648
    %v359 = vxor.u32 %v347, 2147483648
    %v360 = vxor.u32 %v350, 2147483648
    %v361 = vxor.u32 %v352, 2147483648
    %v362 = vmul.f32 %v354, 1.442695
    %v363 = vpow.pop %v362
    %v364 = vmul.f32 %v355, 1.442695
    %v365 = vpow.pop %v364
    %v366 = vmul.f32 %v356, 1.442695
    %v367 = vpow.pop %v366
    %v368 = vmul.f32 %v357, 1.442695
    %v369 = vpow.pop %v368
    %v370 = vmul.f32 %v358, 1.442695
    %v371 = vpow.pop %v370
    %v372 = vmul.f32 %v359, 1.442695
    %v373 = vpow.pop %v372
    %v374 = vmul.f32 %v360, 1.442695
    %v375 = vpow.pop %v374
    %v376 = vmul.f32 %v361, 1.442695
    %v377 = vpow.pop %v376
    %v378 = vadd.f32 %v363, 1.0
    %v379 = vadd.f32 %v365, 1.0
    %v380 = vadd.f32 %v367, 1.0
    %v381 = vadd.f32 %v369, 1.0
    %v382 = vadd.f32 %v371, 1.0
    %v383 = vadd.f32 %v373, 1.0
    %v384 = vadd.f32 %v375, 1.0
    %v385 = vadd.f32 %v377, 1.0
    %v386 = vrcp.pop %v378
    %v387 = vmul.f32 %v378, %v386
    %v388 = vsub.f32 1.0, %v387
    %v389 = vmul.f32 %v386, %v388
    %v390 = vadd.f32 %v386, %v389
    %vm391 = vweird.f32 %v378
    %vm392 = vweird.f32 %v386
    %vm393 = vmor %vm391, %vm392
    %v394 = vsel %vm393, %v386, %v390
    %v395 = vand.u32 2147483647, %v378
    %vm396 = vcmp.eq.f32.partialorder %v395, 8.507059e+37
    %v397 = vand.u32 %v378, 2147483648
    %v398 = vor.u32 1.1754944e-38, %v397
    %v399 = vsel %vm396, %v398, %v394
    %v400 = vmul.f32 1.0, %v399
    %v401 = vrcp.pop %v379
    %v402 = vmul.f32 %v379, %v401
    %v403 = vsub.f32 1.0, %v402
    %v404 = vmul.f32 %v401, %v403
    %v405 = vadd.f32 %v401, %v404
    %vm406 = vweird.f32 %v379
    %vm407 = vweird.f32 %v401
    %vm408 = vmor %vm406, %vm407
    %v409 = vsel %vm408, %v401, %v405
    %v410 = vand.u32 2147483647, %v379
    %vm411 = vcmp.eq.f32.partialorder %v410, 8.507059e+37
    %v412 = vand.u32 %v379, 2147483648
    %v413 = vor.u32 1.1754944e-38, %v412
    %v414 = vsel %vm411, %v413, %v409
    %v415 = vmul.f32 1.0, %v414
    %v416 = vrcp.pop %v380
    %v417 = vmul.f32 %v380, %v416
    %v418 = vsub.f32 1.0, %v417
    %v419 = vmul.f32 %v416, %v418
    %v420 = vadd.f32 %v416, %v419
    %vm421 = vweird.f32 %v380
    %vm422 = vweird.f32 %v416
    %vm423 = vmor %vm421, %vm422
    %v424 = vsel %vm423, %v416, %v420
    %v425 = vand.u32 2147483647, %v380
    %vm426 = vcmp.eq.f32.partialorder %v425, 8.507059e+37
    %v427 = vand.u32 %v380, 2147483648
    %v428 = vor.u32 1.1754944e-38, %v427
    %v429 = vsel %vm426, %v428, %v424
    %v430 = vmul.f32 1.0, %v429
    %v431 = vrcp.pop %v381
    %v432 = vmul.f32 %v381, %v431
    %v433 = vsub.f32 1.0, %v432
    %v434 = vmul.f32 %v431, %v433
    %v435 = vadd.f32 %v431, %v434
    %vm436 = vweird.f32 %v381
    %vm437 = vweird.f32 %v431
    %vm438 = vmor %vm436, %vm437
    %v439 = vsel %vm438, %v431, %v435
    %v440 = vand.u32 2147483647, %v381
    %vm441 = vcmp.eq.f32.partialorder %v440, 8.507059e+37
    %v442 = vand.u32 %v381, 2147483648
    %v443 = vor.u32 1.1754944e-38, %v442
    %v444 = vsel %vm441, %v443, %v439
    %v445 = vmul.f32 1.0, %v444
    %v446 = vrcp.pop %v382
    %v447 = vmul.f32 %v382, %v446
    %v448 = vsub.f32 1.0, %v447
    %v449 = vmul.f32 %v446, %v448
    %v450 = vadd.f32 %v446, %v449
    %vm451 = vweird.f32 %v382
    %vm452 = vweird.f32 %v446
    %vm453 = vmor %vm451, %vm452
    %v454 = vsel %vm453, %v446, %v450
    %v455 = vand.u32 2147483647, %v382
    %vm456 = vcmp.eq.f32.partialorder %v455, 8.507059e+37
    %v457 = vand.u32 %v382, 2147483648
    %v458 = vor.u32 1.1754944e-38, %v457
    %v459 = vsel %vm456, %v458, %v454
    %v460 = vmul.f32 1.0, %v459
    %v461 = vrcp.pop %v383
    %v462 = vmul.f32 %v383, %v461
    %v463 = vsub.f32 1.0, %v462
    %v464 = vmul.f32 %v461, %v463
    %v465 = vadd.f32 %v461, %v464
    %vm466 = vweird.f32 %v383
    %vm467 = vweird.f32 %v461
    %vm468 = vmor %vm466, %vm467
    %v469 = vsel %vm468, %v461, %v465
    %v470 = vand.u32 2147483647, %v383
    %vm471 = vcmp.eq.f32.partialorder %v470, 8.507059e+37
    %v472 = vand.u32 %v383, 2147483648
    %v473 = vor.u32 1.1754944e-38, %v472
    %v474 = vsel %vm471, %v473, %v469
    %v475 = vmul.f32 1.0, %v474
    %v476 = vrcp.pop %v384
    %v477 = vmul.f32 %v384, %v476
    %v478 = vsub.f32 1.0, %v477
    %v479 = vmul.f32 %v476, %v478
    %v480 = vadd.f32 %v476, %v479
    %vm481 = vweird.f32 %v384
    %vm482 = vweird.f32 %v476
    %vm483 = vmor %vm481, %vm482
    %v484 = vsel %vm483, %v476, %v480
    %v485 = vand.u32 2147483647, %v384
    %vm486 = vcmp.eq.f32.partialorder %v485, 8.507059e+37
    %v487 = vand.u32 %v384, 2147483648
    %v488 = vor.u32 1.1754944e-38, %v487
    %v489 = vsel %vm486, %v488, %v484
    %v490 = vmul.f32 1.0, %v489
    %v491 = vrcp.pop %v385
    %v492 = vmul.f32 %v385, %v491
    %v493 = vsub.f32 1.0, %v492
    %v494 = vmul.f32 %v491, %v493
    %v495 = vadd.f32 %v491, %v494
    %vm496 = vweird.f32 %v385
    %vm497 = vweird.f32 %v491
    %vm498 = vmor %vm496, %vm497
    %v499 = vsel %vm498, %v491, %v495
    %v500 = vand.u32 2147483647, %v385
    %vm501 = vcmp.eq.f32.partialorder %v500, 8.507059e+37
    %v502 = vand.u32 %v385, 2147483648
    %v503 = vor.u32 1.1754944e-38, %v502
    %v504 = vsel %vm501, %v503, %v499
    %v505 = vmul.f32 1.0, %v504
    %v506 = vmul.f32 %v335, %v400
    %v507 = vmul.f32 %v337, %v415
    %v508 = vmul.f32 %v340, %v430
    %v509 = vmul.f32 %v342, %v445
    %v510 = vmul.f32 %v345, %v460
    %v511 = vmul.f32 %v347, %v475
    %v512 = vmul.f32 %v350, %v490
    %v513 = vmul.f32 %v352, %v505
    %vm514 = vcmp.ge.f32.partialorder %v335, -2.2
    %vm515 = vcmp.ge.f32.partialorder %v337, -2.2
    %vm516 = vcmp.ge.f32.partialorder %v340, -2.2
    %vm517 = vcmp.ge.f32.partialorder %v342, -2.2
    %vm518 = vcmp.ge.f32.partialorder %v345, -2.2
    %vm519 = vcmp.ge.f32.partialorder %v347, -2.2
    %vm520 = vcmp.ge.f32.partialorder %v350, -2.2
    %vm521 = vcmp.ge.f32.partialorder %v352, -2.2
    %v522 = vsel %vm514, 1, 0
    %v523 = vsel %vm515, 1, 0
    %v524 = vsel %vm516, 1, 0
    %v525 = vsel %vm517, 1, 0
    %v526 = vsel %vm518, 1, 0
    %v527 = vsel %vm519, 1, 0
    %v528 = vsel %vm520, 1, 0
    %v529 = vsel %vm521, 1, 0
    %v530 = vcvt.s32.f32 %v522
    %v531 = vcvt.s32.f32 %v523
    %v532 = vcvt.s32.f32 %v524
    %v533 = vcvt.s32.f32 %v525
    %v534 = vcvt.s32.f32 %v526
    %v535 = vcvt.s32.f32 %v527
    %v536 = vcvt.s32.f32 %v528
    %v537 = vcvt.s32.f32 %v529
    %vm538 = vcmp.ge.f32.partialorder %v335, -1.8
    %vm539 = vcmp.ge.f32.partialorder %v337, -1.8
    %vm540 = vcmp.ge.f32.partialorder %v340, -1.8
    %vm541 = vcmp.ge.f32.partialorder %v342, -1.8
    %vm542 = vcmp.ge.f32.partialorder %v345, -1.8
    %vm543 = vcmp.ge.f32.partialorder %v347, -1.8
    %vm544 = vcmp.ge.f32.partialorder %v350, -1.8
    %vm545 = vcmp.ge.f32.partialorder %v352, -1.8
    %v546 = vsel %vm538, 1, 0
    %v547 = vsel %vm539, 1, 0
    %v548 = vsel %vm540, 1, 0
    %v549 = vsel %vm541, 1, 0
    %v550 = vsel %vm542, 1, 0
    %v551 = vsel %vm543, 1, 0
    %v552 = vsel %vm544, 1, 0
    %v553 = vsel %vm545, 1, 0
    %v554 = vcvt.s32.f32 %v546
    %v555 = vcvt.s32.f32 %v547
    %v556 = vcvt.s32.f32 %v548
    %v557 = vcvt.s32.f32 %v549
    %v558 = vcvt.s32.f32 %v550
    %v559 = vcvt.s32.f32 %v551
    %v560 = vcvt.s32.f32 %v552
    %v561 = vcvt.s32.f32 %v553
    %vm562 = vcmp.ge.f32.partialorder %v335, -1.4
    %vm563 = vcmp.ge.f32.partialorder %v337, -1.4
    %vm564 = vcmp.ge.f32.partialorder %v340, -1.4
    %vm565 = vcmp.ge.f32.partialorder %v342, -1.4
    %vm566 = vcmp.ge.f32.partialorder %v345, -1.4
    %vm567 = vcmp.ge.f32.partialorder %v347, -1.4
    %vm568 = vcmp.ge.f32.partialorder %v350, -1.4
    %vm569 = vcmp.ge.f32.partialorder %v352, -1.4
    %v570 = vsel %vm562, 1, 0
    %v571 = vsel %vm563, 1, 0
    %v572 = vsel %vm564, 1, 0
    %v573 = vsel %vm565, 1, 0
    %v574 = vsel %vm566, 1, 0
    %v575 = vsel %vm567, 1, 0
    %v576 = vsel %vm568, 1, 0
    %v577 = vsel %vm569, 1, 0
    %v578 = vcvt.s32.f32 %v570
    %v579 = vcvt.s32.f32 %v571
    %v580 = vcvt.s32.f32 %v572
    %v581 = vcvt.s32.f32 %v573
    %v582 = vcvt.s32.f32 %v574
    %v583 = vcvt.s32.f32 %v575
    %v584 = vcvt.s32.f32 %v576
    %v585 = vcvt.s32.f32 %v577
    %vm586 = vcmp.ge.f32.partialorder %v335, -1.0
    %vm587 = vcmp.ge.f32.partialorder %v337, -1.0
    %vm588 = vcmp.ge.f32.partialorder %v340, -1.0
    %vm589 = vcmp.ge.f32.partialorder %v342, -1.0
    %vm590 = vcmp.ge.f32.partialorder %v345, -1.0
    %vm591 = vcmp.ge.f32.partialorder %v347, -1.0
    %vm592 = vcmp.ge.f32.partialorder %v350, -1.0
    %vm593 = vcmp.ge.f32.partialorder %v352, -1.0
    %v594 = vsel %vm586, 1, 0
    %v595 = vsel %vm587, 1, 0
    %v596 = vsel %vm588, 1, 0
    %v597 = vsel %vm589, 1, 0
    %v598 = vsel %vm590, 1, 0
    %v599 = vsel %vm591, 1, 0
    %v600 = vsel %vm592, 1, 0
    %v601 = vsel %vm593, 1, 0
    %v602 = vcvt.s32.f32 %v594
    %v603 = vcvt.s32.f32 %v595
    %v604 = vcvt.s32.f32 %v596
    %v605 = vcvt.s32.f32 %v597
    %v606 = vcvt.s32.f32 %v598
    %v607 = vcvt.s32.f32 %v599
    %v608 = vcvt.s32.f32 %v600
    %v609 = vcvt.s32.f32 %v601
    %vm610 = vcmp.ge.f32.partialorder %v335, -0.6
    %vm611 = vcmp.ge.f32.partialorder %v337, -0.6
    %vm612 = vcmp.ge.f32.partialorder %v340, -0.6
    %vm613 = vcmp.ge.f32.partialorder %v342, -0.6
    %vm614 = vcmp.ge.f32.partialorder %v345, -0.6
    %vm615 = vcmp.ge.f32.partialorder %v347, -0.6
    %vm616 = vcmp.ge.f32.partialorder %v350, -0.6
    %vm617 = vcmp.ge.f32.partialorder %v352, -0.6
    %v618 = vsel %vm610, 1, 0
    %v619 = vsel %vm611, 1, 0
    %v620 = vsel %vm612, 1, 0
    %v621 = vsel %vm613, 1, 0
    %v622 = vsel %vm614, 1, 0
    %v623 = vsel %vm615, 1, 0
    %v624 = vsel %vm616, 1, 0
    %v625 = vsel %vm617, 1, 0
    %v626 = vcvt.s32.f32 %v618
    %v627 = vcvt.s32.f32 %v619
    %v628 = vcvt.s32.f32 %v620
    %v629 = vcvt.s32.f32 %v621
    %v630 = vcvt.s32.f32 %v622
    %v631 = vcvt.s32.f32 %v623
    %v632 = vcvt.s32.f32 %v624
    %v633 = vcvt.s32.f32 %v625
    %vm634 = vcmp.ge.f32.partialorder %v335, -0.19999999
    %vm635 = vcmp.ge.f32.partialorder %v337, -0.19999999
    %vm636 = vcmp.ge.f32.partialorder %v340, -0.19999999
    %vm637 = vcmp.ge.f32.partialorder %v342, -0.19999999
    %vm638 = vcmp.ge.f32.partialorder %v345, -0.19999999
    %vm639 = vcmp.ge.f32.partialorder %v347, -0.19999999
    %vm640 = vcmp.ge.f32.partialorder %v350, -0.19999999
    %vm641 = vcmp.ge.f32.partialorder %v352, -0.19999999
    %v642 = vsel %vm634, 1, 0
    %v643 = vsel %vm635, 1, 0
    %v644 = vsel %vm636, 1, 0
    %v645 = vsel %vm637, 1, 0
    %v646 = vsel %vm638, 1, 0
    %v647 = vsel %vm639, 1, 0
    %v648 = vsel %vm640, 1, 0
    %v649 = vsel %vm641, 1, 0
    %v650 = vcvt.s32.f32 %v642
    %v651 = vcvt.s32.f32 %v643
    %v652 = vcvt.s32.f32 %v644
    %v653 = vcvt.s32.f32 %v645
    %v654 = vcvt.s32.f32 %v646
    %v655 = vcvt.s32.f32 %v647
    %v656 = vcvt.s32.f32 %v648
    %v657 = vcvt.s32.f32 %v649
    %vm658 = vcmp.ge.f32.partialorder %v335, 0.20000005
    %vm659 = vcmp.ge.f32.partialorder %v337, 0.20000005
    %vm660 = vcmp.ge.f32.partialorder %v340, 0.20000005
    %vm661 = vcmp.ge.f32.partialorder %v342, 0.20000005
    %vm662 = vcmp.ge.f32.partialorder %v345, 0.20000005
    %vm663 = vcmp.ge.f32.partialorder %v347, 0.20000005
    %vm664 = vcmp.ge.f32.partialorder %v350, 0.20000005
    %vm665 = vcmp.ge.f32.partialorder %v352, 0.20000005
    %v666 = vsel %vm658, 1, 0
    %v667 = vsel %vm659, 1, 0
    %v668 = vsel %vm660, 1, 0
    %v669 = vsel %vm661, 1, 0
    %v670 = vsel %vm662, 1, 0
    %v671 = vsel %vm663, 1, 0
    %v672 = vsel %vm664, 1, 0
    %v673 = vsel %vm665, 1, 0
    %v674 = vcvt.s32.f32 %v666
    %v675 = vcvt.s32.f32 %v667
    %v676 = vcvt.s32.f32 %v668
    %v677 = vcvt.s32.f32 %v669
    %v678 = vcvt.s32.f32 %v670
    %v679 = vcvt.s32.f32 %v671
    %v680 = vcvt.s32.f32 %v672
    %v681 = vcvt.s32.f32 %v673
    %vm682 = vcmp.ge.f32.partialorder %v335, 0.6
    %vm683 = vcmp.ge.f32.partialorder %v337, 0.6
    %vm684 = vcmp.ge.f32.partialorder %v340, 0.6
    %vm685 = vcmp.ge.f32.partialorder %v342, 0.6
    %vm686 = vcmp.ge.f32.partialorder %v345, 0.6
    %vm687 = vcmp.ge.f32.partialorder %v347, 0.6
    %vm688 = vcmp.ge.f32.partialorder %v350, 0.6
    %vm689 = vcmp.ge.f32.partialorder %v352, 0.6
    %v690 = vsel %vm682, 1, 0
    %v691 = vsel %vm683, 1, 0
    %v692 = vsel %vm684, 1, 0
    %v693 = vsel %vm685, 1, 0
    %v694 = vsel %vm686, 1, 0
    %v695 = vsel %vm687, 1, 0
    %v696 = vsel %vm688, 1, 0
    %v697 = vsel %vm689, 1, 0
    %v698 = vcvt.s32.f32 %v690
    %v699 = vcvt.s32.f32 %v691
    %v700 = vcvt.s32.f32 %v692
    %v701 = vcvt.s32.f32 %v693
    %v702 = vcvt.s32.f32 %v694
    %v703 = vcvt.s32.f32 %v695
    %v704 = vcvt.s32.f32 %v696
    %v705 = vcvt.s32.f32 %v697
    %vm706 = vcmp.ge.f32.partialorder %v335, 1.0
    %vm707 = vcmp.ge.f32.partialorder %v337, 1.0
    %vm708 = vcmp.ge.f32.partialorder %v340, 1.0
    %vm709 = vcmp.ge.f32.partialorder %v342, 1.0
    %vm710 = vcmp.ge.f32.partialorder %v345, 1.0
    %vm711 = vcmp.ge.f32.partialorder %v347, 1.0
    %vm712 = vcmp.ge.f32.partialorder %v350, 1.0
    %vm713 = vcmp.ge.f32.partialorder %v352, 1.0
    %v714 = vsel %vm706, 1, 0
    %v715 = vsel %vm707, 1, 0
    %v716 = vsel %vm708, 1, 0
    %v717 = vsel %vm709, 1, 0
    %v718 = vsel %vm710, 1, 0
    %v719 = vsel %vm711, 1, 0
    %v720 = vsel %vm712, 1, 0
    %v721 = vsel %vm713, 1, 0
    %v722 = vcvt.s32.f32 %v714
    %v723 = vcvt.s32.f32 %v715
    %v724 = vcvt.s32.f32 %v716
    %v725 = vcvt.s32.f32 %v717
    %v726 = vcvt.s32.f32 %v718
    %v727 = vcvt.s32.f32 %v719
    %v728 = vcvt.s32.f32 %v720
    %v729 = vcvt.s32.f32 %v721
    %vm730 = vcmp.ge.f32.partialorder %v335, 1.4000001
    %vm731 = vcmp.ge.f32.partialorder %v337, 1.4000001
    %vm732 = vcmp.ge.f32.partialorder %v340, 1.4000001
    %vm733 = vcmp.ge.f32.partialorder %v342, 1.4000001
    %vm734 = vcmp.ge.f32.partialorder %v345, 1.4000001
    %vm735 = vcmp.ge.f32.partialorder %v347, 1.4000001
    %vm736 = vcmp.ge.f32.partialorder %v350, 1.4000001
    %vm737 = vcmp.ge.f32.partialorder %v352, 1.4000001
    %v738 = vsel %vm730, 1, 0
    %v739 = vsel %vm731, 1, 0
    %v740 = vsel %vm732, 1, 0
    %v741 = vsel %vm733, 1, 0
    %v742 = vsel %vm734, 1, 0
    %v743 = vsel %vm735, 1, 0
    %v744 = vsel %vm736, 1, 0
    %v745 = vsel %vm737, 1, 0
    %v746 = vcvt.s32.f32 %v738
    %v747 = vcvt.s32.f32 %v739
    %v748 = vcvt.s32.f32 %v740
    %v749 = vcvt.s32.f32 %v741
    %v750 = vcvt.s32.f32 %v742
    %v751 = vcvt.s32.f32 %v743
    %v752 = vcvt.s32.f32 %v744
    %v753 = vcvt.s32.f32 %v745
    %vm754 = vcmp.ge.f32.partialorder %v335, 1.8
    %vm755 = vcmp.ge.f32.partialorder %v337, 1.8
    %vm756 = vcmp.ge.f32.partialorder %v340, 1.8
    %vm757 = vcmp.ge.f32.partialorder %v342, 1.8
    %vm758 = vcmp.ge.f32.partialorder %v345, 1.8
    %vm759 = vcmp.ge.f32.partialorder %v347, 1.8
    %vm760 = vcmp.ge.f32.partialorder %v350, 1.8
    %vm761 = vcmp.ge.f32.partialorder %v352, 1.8
    %v762 = vsel %vm754, 1, 0
    %v763 = vsel %vm755, 1, 0
    %v764 = vsel %vm756, 1, 0
    %v765 = vsel %vm757, 1, 0
    %v766 = vsel %vm758, 1, 0
    %v767 = vsel %vm759, 1, 0
    %v768 = vsel %vm760, 1, 0
    %v769 = vsel %vm761, 1, 0
    %v770 = vcvt.s32.f32 %v762
    %v771 = vcvt.s32.f32 %v763
    %v772 = vcvt.s32.f32 %v764
    %v773 = vcvt.s32.f32 %v765
    %v774 = vcvt.s32.f32 %v766
    %v775 = vcvt.s32.f32 %v767
    %v776 = vcvt.s32.f32 %v768
    %v777 = vcvt.s32.f32 %v769
    %vm778 = vcmp.ge.f32.partialorder %v335, 2.2
    %vm779 = vcmp.ge.f32.partialorder %v337, 2.2
    %vm780 = vcmp.ge.f32.partialorder %v340, 2.2
    %vm781 = vcmp.ge.f32.partialorder %v342, 2.2
    %vm782 = vcmp.ge.f32.partialorder %v345, 2.2
    %vm783 = vcmp.ge.f32.partialorder %v347, 2.2
    %vm784 = vcmp.ge.f32.partialorder %v350, 2.2
    %vm785 = vcmp.ge.f32.partialorder %v352, 2.2
    %v786 = vsel %vm778, 1, 0
    %v787 = vsel %vm779, 1, 0
    %v788 = vsel %vm780, 1, 0
    %v789 = vsel %vm781, 1, 0
    %v790 = vsel %vm782, 1, 0
    %v791 = vsel %vm783, 1, 0
    %v792 = vsel %vm784, 1, 0
    %v793 = vsel %vm785, 1, 0
    %v794 = vcvt.s32.f32 %v786
    %v795 = vcvt.s32.f32 %v787
    %v796 = vcvt.s32.f32 %v788
    %v797 = vcvt.s32.f32 %v789
    %v798 = vcvt.s32.f32 %v790
    %v799 = vcvt.s32.f32 %v791
    %v800 = vcvt.s32.f32 %v792
    %v801 = vcvt.s32.f32 %v793
    %v802 = vsub.f32 %v530, %v554
    %v803 = vsub.f32 %v531, %v555
    %v804 = vsub.f32 %v532, %v556
    %v805 = vsub.f32 %v533, %v557
    %v806 = vsub.f32 %v534, %v558
    %v807 = vsub.f32 %v535, %v559
    %v808 = vsub.f32 %v536, %v560
    %v809 = vsub.f32 %v537, %v561
    %v810 = vsub.f32 %v554, %v578
    %v811 = vsub.f32 %v555, %v579
    %v812 = vsub.f32 %v556, %v580
    %v813 = vsub.f32 %v557, %v581
    %v814 = vsub.f32 %v558, %v582
    %v815 = vsub.f32 %v559, %v583
    %v816 = vsub.f32 %v560, %v584
    %v817 = vsub.f32 %v561, %v585
    %v818 = vsub.f32 %v578, %v602
    %v819 = vsub.f32 %v579, %v603
    %v820 = vsub.f32 %v580, %v604
    %v821 = vsub.f32 %v581, %v605
    %v822 = vsub.f32 %v582, %v606
    %v823 = vsub.f32 %v583, %v607
    %v824 = vsub.f32 %v584, %v608
    %v825 = vsub.f32 %v585, %v609
    %v826 = vsub.f32 %v602, %v626
    %v827 = vsub.f32 %v603, %v627
    %v828 = vsub.f32 %v604, %v628
    %v829 = vsub.f32 %v605, %v629
    %v830 = vsub.f32 %v606, %v630
    %v831 = vsub.f32 %v607, %v631
    %v832 = vsub.f32 %v608, %v632
    %v833 = vsub.f32 %v609, %v633
    %v834 = vsub.f32 %v626, %v650
    %v835 = vsub.f32 %v627, %v651
    %v836 = vsub.f32 %v628, %v652
    %v837 = vsub.f32 %v629, %v653
    %v838 = vsub.f32 %v630, %v654
    %v839 = vsub.f32 %v631, %v655
    %v840 = vsub.f32 %v632, %v656
    %v841 = vsub.f32 %v633, %v657
    %v842 = vsub.f32 %v650, %v674
    %v843 = vsub.f32 %v651, %v675
    %v844 = vsub.f32 %v652, %v676
    %v845 = vsub.f32 %v653, %v677
    %v846 = vsub.f32 %v654, %v678
    %v847 = vsub.f32 %v655, %v679
    %v848 = vsub.f32 %v656, %v680
    %v849 = vsub.f32 %v657, %v681
    %v850 = vsub.f32 %v674, %v698
    %v851 = vsub.f32 %v675, %v699
    %v852 = vsub.f32 %v676, %v700
    %v853 = vsub.f32 %v677, %v701
    %v854 = vsub.f32 %v678, %v702
    %v855 = vsub.f32 %v679, %v703
    %v856 = vsub.f32 %v680, %v704
    %v857 = vsub.f32 %v681, %v705
    %v858 = vsub.f32 %v698, %v722
    %v859 = vsub.f32 %v699, %v723
    %v860 = vsub.f32 %v700, %v724
    %v861 = vsub.f32 %v701, %v725
    %v862 = vsub.f32 %v702, %v726
    %v863 = vsub.f32 %v703, %v727
    %v864 = vsub.f32 %v704, %v728
    %v865 = vsub.f32 %v705, %v729
    %v866 = vsub.f32 %v722, %v746
    %v867 = vsub.f32 %v723, %v747
    %v868 = vsub.f32 %v724, %v748
    %v869 = vsub.f32 %v725, %v749
    %v870 = vsub.f32 %v726, %v750
    %v871 = vsub.f32 %v727, %v751
    %v872 = vsub.f32 %v728, %v752
    %v873 = vsub.f32 %v729, %v753
    %v874 = vsub.f32 %v746, %v770
    %v875 = vsub.f32 %v747, %v771
    %v876 = vsub.f32 %v748, %v772
    %v877 = vsub.f32 %v749, %v773
    %v878 = vsub.f32 %v750, %v774
    %v879 = vsub.f32 %v751, %v775
    %v880 = vsub.f32 %v752, %v776
    %v881 = vsub.f32 %v753, %v777
    %v882 = vsub.f32 %v770, %v794
    %v883 = vsub.f32 %v771, %v795
    %v884 = vsub.f32 %v772, %v796
    %v885 = vsub.f32 %v773, %v797
    %v886 = vsub.f32 %v774, %v798
    %v887 = vsub.f32 %v775, %v799
    %v888 = vsub.f32 %v776, %v800
    %v889 = vsub.f32 %v777, %v801
    %v890 = vmul.f32 %v335, 2.5
    %v891 = vmul.f32 %v337, 2.5
    %v892 = vmul.f32 %v340, 2.5
    %v893 = vmul.f32 %v342, 2.5
    %v894 = vmul.f32 %v345, 2.5
    %v895 = vmul.f32 %v347, 2.5
    %v896 = vmul.f32 %v350, 2.5
    %v897 = vmul.f32 %v352, 2.5
    %v898 = vsub.f32 %v890, -5.5
    %v899 = vsub.f32 %v891, -5.5
    %v900 = vsub.f32 %v892, -5.5
    %v901 = vsub.f32 %v893, -5.5
    %v902 = vsub.f32 %v894, -5.5
    %v903 = vsub.f32 %v895, -5.5
    %v904 = vsub.f32 %v896, -5.5
    %v905 = vsub.f32 %v897, -5.5
    %v906 = vmul.f32 %v898, %v802
    %v907 = vmul.f32 %v899, %v803
    %v908 = vmul.f32 %v900, %v804
    %v909 = vmul.f32 %v901, %v805
    %v910 = vmul.f32 %v902, %v806
    %v911 = vmul.f32 %v903, %v807
    %v912 = vmul.f32 %v904, %v808
    %v913 = vmul.f32 %v905, %v809
    %v914 = vsub.f32 -3.5, %v890
    %v915 = vsub.f32 -3.5, %v891
    %v916 = vsub.f32 -3.5, %v892
    %v917 = vsub.f32 -3.5, %v893
    %v918 = vsub.f32 -3.5, %v894
    %v919 = vsub.f32 -3.5, %v895
    %v920 = vsub.f32 -3.5, %v896
    %v921 = vsub.f32 -3.5, %v897
    %v922 = vmul.f32 %v914, %v810
    %v923 = vmul.f32 %v915, %v811
    %v924 = vmul.f32 %v916, %v812
    %v925 = vmul.f32 %v917, %v813
    %v926 = vmul.f32 %v918, %v814
    %v927 = vmul.f32 %v919, %v815
    %v928 = vmul.f32 %v920, %v816
    %v929 = vmul.f32 %v921, %v817
    %v930 = vadd.f32 %v906, %v922
    %v931 = vadd.f32 %v907, %v923
    %v932 = vadd.f32 %v908, %v924
    %v933 = vadd.f32 %v909, %v925
    %v934 = vadd.f32 %v910, %v926
    %v935 = vadd.f32 %v911, %v927
    %v936 = vadd.f32 %v912, %v928
    %v937 = vadd.f32 %v913, %v929
    %v938 = vsub.f32 %v890, -4.5
    %v939 = vsub.f32 %v891, -4.5
    %v940 = vsub.f32 %v892, -4.5
    %v941 = vsub.f32 %v893, -4.5
    %v942 = vsub.f32 %v894, -4.5
    %v943 = vsub.f32 %v895, -4.5
    %v944 = vsub.f32 %v896, -4.5
    %v945 = vsub.f32 %v897, -4.5
    %v946 = vmul.f32 %v938, %v810
    %v947 = vmul.f32 %v939, %v811
    %v948 = vmul.f32 %v940, %v812
    %v949 = vmul.f32 %v941, %v813
    %v950 = vmul.f32 %v942, %v814
    %v951 = vmul.f32 %v943, %v815
    %v952 = vmul.f32 %v944, %v816
    %v953 = vmul.f32 %v945, %v817
    %v954 = vsub.f32 -2.5, %v890
    %v955 = vsub.f32 -2.5, %v891
    %v956 = vsub.f32 -2.5, %v892
    %v957 = vsub.f32 -2.5, %v893
    %v958 = vsub.f32 -2.5, %v894
    %v959 = vsub.f32 -2.5, %v895
    %v960 = vsub.f32 -2.5, %v896
    %v961 = vsub.f32 -2.5, %v897
    %v962 = vmul.f32 %v954, %v818
    %v963 = vmul.f32 %v955, %v819
    %v964 = vmul.f32 %v956, %v820
    %v965 = vmul.f32 %v957, %v821
    %v966 = vmul.f32 %v958, %v822
    %v967 = vmul.f32 %v959, %v823
    %v968 = vmul.f32 %v960, %v824
    %v969 = vmul.f32 %v961, %v825
    %v970 = vadd.f32 %v946, %v962
    %v971 = vadd.f32 %v947, %v963
    %v972 = vadd.f32 %v948, %v964
    %v973 = vadd.f32 %v949, %v965
    %v974 = vadd.f32 %v950, %v966
    %v975 = vadd.f32 %v951, %v967
    %v976 = vadd.f32 %v952, %v968
    %v977 = vadd.f32 %v953, %v969
    %v978 = vsub.f32 %v890, -3.5
    %v979 = vsub.f32 %v891, -3.5
    %v980 = vsub.f32 %v892, -3.5
    %v981 = vsub.f32 %v893, -3.5
    %v982 = vsub.f32 %v894, -3.5
    %v983 = vsub.f32 %v895, -3.5
    %v984 = vsub.f32 %v896, -3.5
    %v985 = vsub.f32 %v897, -3.5
    %v986 = vmul.f32 %v978, %v818
    %v987 = vmul.f32 %v979, %v819
    %v988 = vmul.f32 %v980, %v820
    %v989 = vmul.f32 %v981, %v821
    %v990 = vmul.f32 %v982, %v822
    %v991 = vmul.f32 %v983, %v823
    %v992 = vmul.f32 %v984, %v824
    %v993 = vmul.f32 %v985, %v825
    %v994 = vsub.f32 -1.5, %v890
    %v995 = vsub.f32 -1.5, %v891
    %v996 = vsub.f32 -1.5, %v892
    %v997 = vsub.f32 -1.5, %v893
    %v998 = vsub.f32 -1.5, %v894
    %v999 = vsub.f32 -1.5, %v895
    %v1000 = vsub.f32 -1.5, %v896
    %v1001 = vsub.f32 -1.5, %v897
    %v1002 = vmul.f32 %v994, %v826
    %v1003 = vmul.f32 %v995, %v827
    %v1004 = vmul.f32 %v996, %v828
    %v1005 = vmul.f32 %v997, %v829
    %v1006 = vmul.f32 %v998, %v830
    %v1007 = vmul.f32 %v999, %v831
    %v1008 = vmul.f32 %v1000, %v832
    %v1009 = vmul.f32 %v1001, %v833
    %v1010 = vadd.f32 %v986, %v1002
    %v1011 = vadd.f32 %v987, %v1003
    %v1012 = vadd.f32 %v988, %v1004
    %v1013 = vadd.f32 %v989, %v1005
    %v1014 = vadd.f32 %v990, %v1006
    %v1015 = vadd.f32 %v991, %v1007
    %v1016 = vadd.f32 %v992, %v1008
    %v1017 = vadd.f32 %v993, %v1009
    %v1018 = vsub.f32 %v890, -2.5
    %v1019 = vsub.f32 %v891, -2.5
    %v1020 = vsub.f32 %v892, -2.5
    %v1021 = vsub.f32 %v893, -2.5
    %v1022 = vsub.f32 %v894, -2.5
    %v1023 = vsub.f32 %v895, -2.5
    %v1024 = vsub.f32 %v896, -2.5
    %v1025 = vsub.f32 %v897, -2.5
    %v1026 = vmul.f32 %v1018, %v826
    %v1027 = vmul.f32 %v1019, %v827
    %v1028 = vmul.f32 %v1020, %v828
    %v1029 = vmul.f32 %v1021, %v829
    %v1030 = vmul.f32 %v1022, %v830
    %v1031 = vmul.f32 %v1023, %v831
    %v1032 = vmul.f32 %v1024, %v832
    %v1033 = vmul.f32 %v1025, %v833
    %v1034 = vsub.f32 -0.49999997, %v890
    %v1035 = vsub.f32 -0.49999997, %v891
    %v1036 = vsub.f32 -0.49999997, %v892
    %v1037 = vsub.f32 -0.49999997, %v893
    %v1038 = vsub.f32 -0.49999997, %v894
    %v1039 = vsub.f32 -0.49999997, %v895
    %v1040 = vsub.f32 -0.49999997, %v896
    %v1041 = vsub.f32 -0.49999997, %v897
    %v1042 = vmul.f32 %v1034, %v834
    %v1043 = vmul.f32 %v1035, %v835
    %v1044 = vmul.f32 %v1036, %v836
    %v1045 = vmul.f32 %v1037, %v837
    %v1046 = vmul.f32 %v1038, %v838
    %v1047 = vmul.f32 %v1039, %v839
    %v1048 = vmul.f32 %v1040, %v840
    %v1049 = vmul.f32 %v1041, %v841
    %v1050 = vadd.f32 %v1026, %v1042
    %v1051 = vadd.f32 %v1027, %v1043
    %v1052 = vadd.f32 %v1028, %v1044
    %v1053 = vadd.f32 %v1029, %v1045
    %v1054 = vadd.f32 %v1030, %v1046
    %v1055 = vadd.f32 %v1031, %v1047
    %v1056 = vadd.f32 %v1032, %v1048
    %v1057 = vadd.f32 %v1033, %v1049
    %v1058 = vsub.f32 %v890, -1.5
    %v1059 = vsub.f32 %v891, -1.5
    %v1060 = vsub.f32 %v892, -1.5
    %v1061 = vsub.f32 %v893, -1.5
    %v1062 = vsub.f32 %v894, -1.5
    %v1063 = vsub.f32 %v895, -1.5
    %v1064 = vsub.f32 %v896, -1.5
    %v1065 = vsub.f32 %v897, -1.5
    %v1066 = vmul.f32 %v1058, %v834
    %v1067 = vmul.f32 %v1059, %v835
    %v1068 = vmul.f32 %v1060, %v836
    %v1069 = vmul.f32 %v1061, %v837
    %v1070 = vmul.f32 %v1062, %v838
    %v1071 = vmul.f32 %v1063, %v839
    %v1072 = vmul.f32 %v1064, %v840
    %v1073 = vmul.f32 %v1065, %v841
    %v1074 = vsub.f32 0.5000001, %v890
    %v1075 = vsub.f32 0.5000001, %v891
    %v1076 = vsub.f32 0.5000001, %v892
    %v1077 = vsub.f32 0.5000001, %v893
    %v1078 = vsub.f32 0.5000001, %v894
    %v1079 = vsub.f32 0.5000001, %v895
    %v1080 = vsub.f32 0.5000001, %v896
    %v1081 = vsub.f32 0.5000001, %v897
    %v1082 = vmul.f32 %v1074, %v842
    %v1083 = vmul.f32 %v1075, %v843
    %v1084 = vmul.f32 %v1076, %v844
    %v1085 = vmul.f32 %v1077, %v845
    %v1086 = vmul.f32 %v1078, %v846
    %v1087 = vmul.f32 %v1079, %v847
    %v1088 = vmul.f32 %v1080, %v848
    %v1089 = vmul.f32 %v1081, %v849
    %v1090 = vadd.f32 %v1066, %v1082
    %v1091 = vadd.f32 %v1067, %v1083
    %v1092 = vadd.f32 %v1068, %v1084
    %v1093 = vadd.f32 %v1069, %v1085
    %v1094 = vadd.f32 %v1070, %v1086
    %v1095 = vadd.f32 %v1071, %v1087
    %v1096 = vadd.f32 %v1072, %v1088
    %v1097 = vadd.f32 %v1073, %v1089
    %v1098 = vsub.f32 %v890, -0.49999997
    %v1099 = vsub.f32 %v891, -0.49999997
    %v1100 = vsub.f32 %v892, -0.49999997
    %v1101 = vsub.f32 %v893, -0.49999997
    %v1102 = vsub.f32 %v894, -0.49999997
    %v1103 = vsub.f32 %v895, -0.49999997
    %v1104 = vsub.f32 %v896, -0.49999997
    %v1105 = vsub.f32 %v897, -0.49999997
    %v1106 = vmul.f32 %v1098, %v842
    %v1107 = vmul.f32 %v1099, %v843
    %v1108 = vmul.f32 %v1100, %v844
    %v1109 = vmul.f32 %v1101, %v845
    %v1110 = vmul.f32 %v1102, %v846
    %v1111 = vmul.f32 %v1103, %v847
    %v1112 = vmul.f32 %v1104, %v848
    %v1113 = vmul.f32 %v1105, %v849
    %v1114 = vsub.f32 1.5, %v890
    %v1115 = vsub.f32 1.5, %v891
    %v1116 = vsub.f32 1.5, %v892
    %v1117 = vsub.f32 1.5, %v893
    %v1118 = vsub.f32 1.5, %v894
    %v1119 = vsub.f32 1.5, %v895
    %v1120 = vsub.f32 1.5, %v896
    %v1121 = vsub.f32 1.5, %v897
    %v1122 = vmul.f32 %v1114, %v850
    %v1123 = vmul.f32 %v1115, %v851
    %v1124 = vmul.f32 %v1116, %v852
    %v1125 = vmul.f32 %v1117, %v853
    %v1126 = vmul.f32 %v1118, %v854
    %v1127 = vmul.f32 %v1119, %v855
    %v1128 = vmul.f32 %v1120, %v856
    %v1129 = vmul.f32 %v1121, %v857
    %v1130 = vadd.f32 %v1106, %v1122
    %v1131 = vadd.f32 %v1107, %v1123
    %v1132 = vadd.f32 %v1108, %v1124
    %v1133 = vadd.f32 %v1109, %v1125
    %v1134 = vadd.f32 %v1110, %v1126
    %v1135 = vadd.f32 %v1111, %v1127
    %v1136 = vadd.f32 %v1112, %v1128
    %v1137 = vadd.f32 %v1113, %v1129
    %v1138 = vsub.f32 %v890, 0.5000001
    %v1139 = vsub.f32 %v891, 0.5000001
    %v1140 = vsub.f32 %v892, 0.5000001
    %v1141 = vsub.f32 %v893, 0.5000001
    %v1142 = vsub.f32 %v894, 0.5000001
    %v1143 = vsub.f32 %v895, 0.5000001
    %v1144 = vsub.f32 %v896, 0.5000001
    %v1145 = vsub.f32 %v897, 0.5000001
    %v1146 = vmul.f32 %v1138, %v850
    %v1147 = vmul.f32 %v1139, %v851
    %v1148 = vmul.f32 %v1140, %v852
    %v1149 = vmul.f32 %v1141, %v853
    %v1150 = vmul.f32 %v1142, %v854
    %v1151 = vmul.f32 %v1143, %v855
    %v1152 = vmul.f32 %v1144, %v856
    %v1153 = vmul.f32 %v1145, %v857
    %v1154 = vsub.f32 2.5, %v890
    %v1155 = vsub.f32 2.5, %v891
    %v1156 = vsub.f32 2.5, %v892
    %v1157 = vsub.f32 2.5, %v893
    %v1158 = vsub.f32 2.5, %v894
    %v1159 = vsub.f32 2.5, %v895
    %v1160 = vsub.f32 2.5, %v896
    %v1161 = vsub.f32 2.5, %v897
    %v1162 = vmul.f32 %v1154, %v858
    %v1163 = vmul.f32 %v1155, %v859
    %v1164 = vmul.f32 %v1156, %v860
    %v1165 = vmul.f32 %v1157, %v861
    %v1166 = vmul.f32 %v1158, %v862
    %v1167 = vmul.f32 %v1159, %v863
    %v1168 = vmul.f32 %v1160, %v864
    %v1169 = vmul.f32 %v1161, %v865
    %v1170 = vadd.f32 %v1146, %v1162
    %v1171 = vadd.f32 %v1147, %v1163
    %v1172 = vadd.f32 %v1148, %v1164
    %v1173 = vadd.f32 %v1149, %v1165
    %v1174 = vadd.f32 %v1150, %v1166
    %v1175 = vadd.f32 %v1151, %v1167
    %v1176 = vadd.f32 %v1152, %v1168
    %v1177 = vadd.f32 %v1153, %v1169
    %v1178 = vsub.f32 %v890, 1.5
    %v1179 = vsub.f32 %v891, 1.5
    %v1180 = vsub.f32 %v892, 1.5
    %v1181 = vsub.f32 %v893, 1.5
    %v1182 = vsub.f32 %v894, 1.5
    %v1183 = vsub.f32 %v895, 1.5
    %v1184 = vsub.f32 %v896, 1.5
    %v1185 = vsub.f32 %v897, 1.5
    %v1186 = vmul.f32 %v1178, %v858
    %v1187 = vmul.f32 %v1179, %v859
    %v1188 = vmul.f32 %v1180, %v860
    %v1189 = vmul.f32 %v1181, %v861
    %v1190 = vmul.f32 %v1182, %v862
    %v1191 = vmul.f32 %v1183, %v863
    %v1192 = vmul.f32 %v1184, %v864
    %v1193 = vmul.f32 %v1185, %v865
    %v1194 = vsub.f32 3.5000002, %v890
    %v1195 = vsub.f32 3.5000002, %v891
    %v1196 = vsub.f32 3.5000002, %v892
    %v1197 = vsub.f32 3.5000002, %v893
    %v1198 = vsub.f32 3.5000002, %v894
    %v1199 = vsub.f32 3.5000002, %v895
    %v1200 = vsub.f32 3.5000002, %v896
    %v1201 = vsub.f32 3.5000002, %v897
    %v1202 = vmul.f32 %v1194, %v866
    %v1203 = vmul.f32 %v1195, %v867
    %v1204 = vmul.f32 %v1196, %v868
    %v1205 = vmul.f32 %v1197, %v869
    %v1206 = vmul.f32 %v1198, %v870
    %v1207 = vmul.f32 %v1199, %v871
    %v1208 = vmul.f32 %v1200, %v872
    %v1209 = vmul.f32 %v1201, %v873
    %v1210 = vadd.f32 %v1186, %v1202
    %v1211 = vadd.f32 %v1187, %v1203
    %v1212 = vadd.f32 %v1188, %v1204
    %v1213 = vadd.f32 %v1189, %v1205
    %v1214 = vadd.f32 %v1190, %v1206
    %v1215 = vadd.f32 %v1191, %v1207
    %v1216 = vadd.f32 %v1192, %v1208
    %v1217 = vadd.f32 %v1193, %v1209
    %v1218 = vsub.f32 %v890, 2.5
    %v1219 = vsub.f32 %v891, 2.5
    %v1220 = vsub.f32 %v892, 2.5
    %v1221 = vsub.f32 %v893, 2.5
    %v1222 = vsub.f32 %v894, 2.5
    %v1223 = vsub.f32 %v895, 2.5
    %v1224 = vsub.f32 %v896, 2.5
    %v1225 = vsub.f32 %v897, 2.5
    %v1226 = vmul.f32 %v1218, %v866
    %v1227 = vmul.f32 %v1219, %v867
    %v1228 = vmul.f32 %v1220, %v868
    %v1229 = vmul.f32 %v1221, %v869
    %v1230 = vmul.f32 %v1222, %v870
    %v1231 = vmul.f32 %v1223, %v871
    %v1232 = vmul.f32 %v1224, %v872
    %v1233 = vmul.f32 %v1225, %v873
    %v1234 = vsub.f32 4.5, %v890
    %v1235 = vsub.f32 4.5, %v891
    %v1236 = vsub.f32 4.5, %v892
    %v1237 = vsub.f32 4.5, %v893
    %v1238 = vsub.f32 4.5, %v894
    %v1239 = vsub.f32 4.5, %v895
    %v1240 = vsub.f32 4.5, %v896
    %v1241 = vsub.f32 4.5, %v897
    %v1242 = vmul.f32 %v1234, %v874
    %v1243 = vmul.f32 %v1235, %v875
    %v1244 = vmul.f32 %v1236, %v876
    %v1245 = vmul.f32 %v1237, %v877
    %v1246 = vmul.f32 %v1238, %v878
    %v1247 = vmul.f32 %v1239, %v879
    %v1248 = vmul.f32 %v1240, %v880
    %v1249 = vmul.f32 %v1241, %v881
    %v1250 = vadd.f32 %v1226, %v1242
    %v1251 = vadd.f32 %v1227, %v1243
    %v1252 = vadd.f32 %v1228, %v1244
    %v1253 = vadd.f32 %v1229, %v1245
    %v1254 = vadd.f32 %v1230, %v1246
    %v1255 = vadd.f32 %v1231, %v1247
    %v1256 = vadd.f32 %v1232, %v1248
    %v1257 = vadd.f32 %v1233, %v1249
    %v1258 = vsub.f32 %v890, 3.5000002
    %v1259 = vsub.f32 %v891, 3.5000002
    %v1260 = vsub.f32 %v892, 3.5000002
    %v1261 = vsub.f32 %v893, 3.5000002
    %v1262 = vsub.f32 %v894, 3.5000002
    %v1263 = vsub.f32 %v895, 3.5000002
    %v1264 = vsub.f32 %v896, 3.5000002
    %v1265 = vsub.f32 %v897, 3.5000002
    %v1266 = vmul.f32 %v1258, %v874
    %v1267 = vmul.f32 %v1259, %v875
    %v1268 = vmul.f32 %v1260, %v876
    %v1269 = vmul.f32 %v1261, %v877
    %v1270 = vmul.f32 %v1262, %v878
    %v1271 = vmul.f32 %v1263, %v879
    %v1272 = vmul.f32 %v1264, %v880
    %v1273 = vmul.f32 %v1265, %v881
    %v1274 = vsub.f32 5.5, %v890
    %v1275 = vsub.f32 5.5, %v891
    %v1276 = vsub.f32 5.5, %v892
    %v1277 = vsub.f32 5.5, %v893
    %v1278 = vsub.f32 5.5, %v894
    %v1279 = vsub.f32 5.5, %v895
    %v1280 = vsub.f32 5.5, %v896
    %v1281 = vsub.f32 5.5, %v897
    %v1282 = vmul.f32 %v1274, %v882
    %v1283 = vmul.f32 %v1275, %v883
    %v1284 = vmul.f32 %v1276, %v884
    %v1285 = vmul.f32 %v1277, %v885
    %v1286 = vmul.f32 %v1278, %v886
    %v1287 = vmul.f32 %v1279, %v887
    %v1288 = vmul.f32 %v1280, %v888
    %v1289 = vmul.f32 %v1281, %v889
    %v1290 = vadd.f32 %v1266, %v1282
    %v1291 = vadd.f32 %v1267, %v1283
    %v1292 = vadd.f32 %v1268, %v1284
    %v1293 = vadd.f32 %v1269, %v1285
    %v1294 = vadd.f32 %v1270, %v1286
    %v1295 = vadd.f32 %v1271, %v1287
    %v1296 = vadd.f32 %v1272, %v1288
    %v1297 = vadd.f32 %v1273, %v1289
    %v1298 = vmul.f32 %v335, 1.25
    %v1299 = vmul.f32 %v337, 1.25
    %v1300 = vmul.f32 %v340, 1.25
    %v1301 = vmul.f32 %v342, 1.25
    %v1302 = vmul.f32 %v345, 1.25
    %v1303 = vmul.f32 %v347, 1.25
    %v1304 = vmul.f32 %v350, 1.25
    %v1305 = vmul.f32 %v352, 1.25
    %v1306 = vsub.f32 %v1298, -2.75
    %v1307 = vsub.f32 %v1299, -2.75
    %v1308 = vsub.f32 %v1300, -2.75
    %v1309 = vsub.f32 %v1301, -2.75
    %v1310 = vsub.f32 %v1302, -2.75
    %v1311 = vsub.f32 %v1303, -2.75
    %v1312 = vsub.f32 %v1304, -2.75
    %v1313 = vsub.f32 %v1305, -2.75
    %v1314 = vmul.f32 %v1306, %v930
    %v1315 = vmul.f32 %v1307, %v931
    %v1316 = vmul.f32 %v1308, %v932
    %v1317 = vmul.f32 %v1309, %v933
    %v1318 = vmul.f32 %v1310, %v934
    %v1319 = vmul.f32 %v1311, %v935
    %v1320 = vmul.f32 %v1312, %v936
    %v1321 = vmul.f32 %v1313, %v937
    %v1322 = vsub.f32 -1.25, %v1298
    %v1323 = vsub.f32 -1.25, %v1299
    %v1324 = vsub.f32 -1.25, %v1300
    %v1325 = vsub.f32 -1.25, %v1301
    %v1326 = vsub.f32 -1.25, %v1302
    %v1327 = vsub.f32 -1.25, %v1303
    %v1328 = vsub.f32 -1.25, %v1304
    %v1329 = vsub.f32 -1.25, %v1305
    %v1330 = vmul.f32 %v1322, %v970
    %v1331 = vmul.f32 %v1323, %v971
    %v1332 = vmul.f32 %v1324, %v972
    %v1333 = vmul.f32 %v1325, %v973
    %v1334 = vmul.f32 %v1326, %v974
    %v1335 = vmul.f32 %v1327, %v975
    %v1336 = vmul.f32 %v1328, %v976
    %v1337 = vmul.f32 %v1329, %v977
    %v1338 = vadd.f32 %v1314, %v1330
    %v1339 = vadd.f32 %v1315, %v1331
    %v1340 = vadd.f32 %v1316, %v1332
    %v1341 = vadd.f32 %v1317, %v1333
    %v1342 = vadd.f32 %v1318, %v1334
    %v1343 = vadd.f32 %v1319, %v1335
    %v1344 = vadd.f32 %v1320, %v1336
    %v1345 = vadd.f32 %v1321, %v1337
    %v1346 = vsub.f32 %v1298, -2.25
    %v1347 = vsub.f32 %v1299, -2.25
    %v1348 = vsub.f32 %v1300, -2.25
    %v1349 = vsub.f32 %v1301, -2.25
    %v1350 = vsub.f32 %v1302, -2.25
    %v1351 = vsub.f32 %v1303, -2.25
    %v1352 = vsub.f32 %v1304, -2.25
    %v1353 = vsub.f32 %v1305, -2.25
    %v1354 = vmul.f32 %v1346, %v970
    %v1355 = vmul.f32 %v1347, %v971
    %v1356 = vmul.f32 %v1348, %v972
    %v1357 = vmul.f32 %v1349, %v973
    %v1358 = vmul.f32 %v1350, %v974
    %v1359 = vmul.f32 %v1351, %v975
    %v1360 = vmul.f32 %v1352, %v976
    %v1361 = vmul.f32 %v1353, %v977
    %v1362 = vsub.f32 -0.75, %v1298
    %v1363 = vsub.f32 -0.75, %v1299
    %v1364 = vsub.f32 -0.75, %v1300
    %v1365 = vsub.f32 -0.75, %v1301
    %v1366 = vsub.f32 -0.75, %v1302
    %v1367 = vsub.f32 -0.75, %v1303
    %v1368 = vsub.f32 -0.75, %v1304
    %v1369 = vsub.f32 -0.75, %v1305
    %v1370 = vmul.f32 %v1362, %v1010
    %v1371 = vmul.f32 %v1363, %v1011
    %v1372 = vmul.f32 %v1364, %v1012
    %v1373 = vmul.f32 %v1365, %v1013
    %v1374 = vmul.f32 %v1366, %v1014
    %v1375 = vmul.f32 %v1367, %v1015
    %v1376 = vmul.f32 %v1368, %v1016
    %v1377 = vmul.f32 %v1369, %v1017
    %v1378 = vadd.f32 %v1354, %v1370
    %v1379 = vadd.f32 %v1355, %v1371
    %v1380 = vadd.f32 %v1356, %v1372
    %v1381 = vadd.f32 %v1357, %v1373
    %v1382 = vadd.f32 %v1358, %v1374
    %v1383 = vadd.f32 %v1359, %v1375
    %v1384 = vadd.f32 %v1360, %v1376
    %v1385 = vadd.f32 %v1361, %v1377
    %v1386 = vsub.f32 %v1298, -1.75
    %v1387 = vsub.f32 %v1299, -1.75
    %v1388 = vsub.f32 %v1300, -1.75
    %v1389 = vsub.f32 %v1301, -1.75
    %v1390 = vsub.f32 %v1302, -1.75
    %v1391 = vsub.f32 %v1303, -1.75
    %v1392 = vsub.f32 %v1304, -1.75
    %v1393 = vsub.f32 %v1305, -1.75
    %v1394 = vmul.f32 %v1386, %v1010
    %v1395 = vmul.f32 %v1387, %v1011
    %v1396 = vmul.f32 %v1388, %v1012
    %v1397 = vmul.f32 %v1389, %v1013
    %v1398 = vmul.f32 %v1390, %v1014
    %v1399 = vmul.f32 %v1391, %v1015
    %v1400 = vmul.f32 %v1392, %v1016
    %v1401 = vmul.f32 %v1393, %v1017
    %v1402 = vsub.f32 -0.24999999, %v1298
    %v1403 = vsub.f32 -0.24999999, %v1299
    %v1404 = vsub.f32 -0.24999999, %v1300
    %v1405 = vsub.f32 -0.24999999, %v1301
    %v1406 = vsub.f32 -0.24999999, %v1302
    %v1407 = vsub.f32 -0.24999999, %v1303
    %v1408 = vsub.f32 -0.24999999, %v1304
    %v1409 = vsub.f32 -0.24999999, %v1305
    %v1410 = vmul.f32 %v1402, %v1050
    %v1411 = vmul.f32 %v1403, %v1051
    %v1412 = vmul.f32 %v1404, %v1052
    %v1413 = vmul.f32 %v1405, %v1053
    %v1414 = vmul.f32 %v1406, %v1054
    %v1415 = vmul.f32 %v1407, %v1055
    %v1416 = vmul.f32 %v1408, %v1056
    %v1417 = vmul.f32 %v1409, %v1057
    %v1418 = vadd.f32 %v1394, %v1410
    %v1419 = vadd.f32 %v1395, %v1411
    %v1420 = vadd.f32 %v1396, %v1412
    %v1421 = vadd.f32 %v1397, %v1413
    %v1422 = vadd.f32 %v1398, %v1414
    %v1423 = vadd.f32 %v1399, %v1415
    %v1424 = vadd.f32 %v1400, %v1416
    %v1425 = vadd.f32 %v1401, %v1417
    %v1426 = vsub.f32 %v1298, -1.25
    %v1427 = vsub.f32 %v1299, -1.25
    %v1428 = vsub.f32 %v1300, -1.25
    %v1429 = vsub.f32 %v1301, -1.25
    %v1430 = vsub.f32 %v1302, -1.25
    %v1431 = vsub.f32 %v1303, -1.25
    %v1432 = vsub.f32 %v1304, -1.25
    %v1433 = vsub.f32 %v1305, -1.25
    %v1434 = vmul.f32 %v1426, %v1050
    %v1435 = vmul.f32 %v1427, %v1051
    %v1436 = vmul.f32 %v1428, %v1052
    %v1437 = vmul.f32 %v1429, %v1053
    %v1438 = vmul.f32 %v1430, %v1054
    %v1439 = vmul.f32 %v1431, %v1055
    %v1440 = vmul.f32 %v1432, %v1056
    %v1441 = vmul.f32 %v1433, %v1057
    %v1442 = vsub.f32 0.25000006, %v1298
    %v1443 = vsub.f32 0.25000006, %v1299
    %v1444 = vsub.f32 0.25000006, %v1300
    %v1445 = vsub.f32 0.25000006, %v1301
    %v1446 = vsub.f32 0.25000006, %v1302
    %v1447 = vsub.f32 0.25000006, %v1303
    %v1448 = vsub.f32 0.25000006, %v1304
    %v1449 = vsub.f32 0.25000006, %v1305
    %v1450 = vmul.f32 %v1442, %v1090
    %v1451 = vmul.f32 %v1443, %v1091
    %v1452 = vmul.f32 %v1444, %v1092
    %v1453 = vmul.f32 %v1445, %v1093
    %v1454 = vmul.f32 %v1446, %v1094
    %v1455 = vmul.f32 %v1447, %v1095
    %v1456 = vmul.f32 %v1448, %v1096
    %v1457 = vmul.f32 %v1449, %v1097
    %v1458 = vadd.f32 %v1434, %v1450
    %v1459 = vadd.f32 %v1435, %v1451
    %v1460 = vadd.f32 %v1436, %v1452
    %v1461 = vadd.f32 %v1437, %v1453
    %v1462 = vadd.f32 %v1438, %v1454
    %v1463 = vadd.f32 %v1439, %v1455
    %v1464 = vadd.f32 %v1440, %v1456
    %v1465 = vadd.f32 %v1441, %v1457
    %v1466 = vsub.f32 %v1298, -0.75
    %v1467 = vsub.f32 %v1299, -0.75
    %v1468 = vsub.f32 %v1300, -0.75
    %v1469 = vsub.f32 %v1301, -0.75
    %v1470 = vsub.f32 %v1302, -0.75
    %v1471 = vsub.f32 %v1303, -0.75
    %v1472 = vsub.f32 %v1304, -0.75
    %v1473 = vsub.f32 %v1305, -0.75
    %v1474 = vmul.f32 %v1466, %v1090
    %v1475 = vmul.f32 %v1467, %v1091
    %v1476 = vmul.f32 %v1468, %v1092
    %v1477 = vmul.f32 %v1469, %v1093
    %v1478 = vmul.f32 %v1470, %v1094
    %v1479 = vmul.f32 %v1471, %v1095
    %v1480 = vmul.f32 %v1472, %v1096
    %v1481 = vmul.f32 %v1473, %v1097
    %v1482 = vsub.f32 0.75, %v1298
    %v1483 = vsub.f32 0.75, %v1299
    %v1484 = vsub.f32 0.75, %v1300
    %v1485 = vsub.f32 0.75, %v1301
    %v1486 = vsub.f32 0.75, %v1302
    %v1487 = vsub.f32 0.75, %v1303
    %v1488 = vsub.f32 0.75, %v1304
    %v1489 = vsub.f32 0.75, %v1305
    %v1490 = vmul.f32 %v1482, %v1130
    %v1491 = vmul.f32 %v1483, %v1131
    %v1492 = vmul.f32 %v1484, %v1132
    %v1493 = vmul.f32 %v1485, %v1133
    %v1494 = vmul.f32 %v1486, %v1134
    %v1495 = vmul.f32 %v1487, %v1135
    %v1496 = vmul.f32 %v1488, %v1136
    %v1497 = vmul.f32 %v1489, %v1137
    %v1498 = vadd.f32 %v1474, %v1490
    %v1499 = vadd.f32 %v1475, %v1491
    %v1500 = vadd.f32 %v1476, %v1492
    %v1501 = vadd.f32 %v1477, %v1493
    %v1502 = vadd.f32 %v1478, %v1494
    %v1503 = vadd.f32 %v1479, %v1495
    %v1504 = vadd.f32 %v1480, %v1496
    %v1505 = vadd.f32 %v1481, %v1497
    %v1506 = vsub.f32 %v1298, -0.24999999
    %v1507 = vsub.f32 %v1299, -0.24999999
    %v1508 = vsub.f32 %v1300, -0.24999999
    %v1509 = vsub.f32 %v1301, -0.24999999
    %v1510 = vsub.f32 %v1302, -0.24999999
    %v1511 = vsub.f32 %v1303, -0.24999999
    %v1512 = vsub.f32 %v1304, -0.24999999
    %v1513 = vsub.f32 %v1305, -0.24999999
    %v1514 = vmul.f32 %v1506, %v1130
    %v1515 = vmul.f32 %v1507, %v1131
    %v1516 = vmul.f32 %v1508, %v1132
    %v1517 = vmul.f32 %v1509, %v1133
    %v1518 = vmul.f32 %v1510, %v1134
    %v1519 = vmul.f32 %v1511, %v1135
    %v1520 = vmul.f32 %v1512, %v1136
    %v1521 = vmul.f32 %v1513, %v1137
    %v1522 = vsub.f32 1.25, %v1298
    %v1523 = vsub.f32 1.25, %v1299
    %v1524 = vsub.f32 1.25, %v1300
    %v1525 = vsub.f32 1.25, %v1301
    %v1526 = vsub.f32 1.25, %v1302
    %v1527 = vsub.f32 1.25, %v1303
    %v1528 = vsub.f32 1.25, %v1304
    %v1529 = vsub.f32 1.25, %v1305
    %v1530 = vmul.f32 %v1522, %v1170
    %v1531 = vmul.f32 %v1523, %v1171
    %v1532 = vmul.f32 %v1524, %v1172
    %v1533 = vmul.f32 %v1525, %v1173
    %v1534 = vmul.f32 %v1526, %v1174
    %v1535 = vmul.f32 %v1527, %v1175
    %v1536 = vmul.f32 %v1528, %v1176
    %v1537 = vmul.f32 %v1529, %v1177
    %v1538 = vadd.f32 %v1514, %v1530
    %v1539 = vadd.f32 %v1515, %v1531
    %v1540 = vadd.f32 %v1516, %v1532
    %v1541 = vadd.f32 %v1517, %v1533
    %v1542 = vadd.f32 %v1518, %v1534
    %v1543 = vadd.f32 %v1519, %v1535
    %v1544 = vadd.f32 %v1520, %v1536
    %v1545 = vadd.f32 %v1521, %v1537
    %v1546 = vsub.f32 %v1298, 0.25000006
    %v1547 = vsub.f32 %v1299, 0.25000006
    %v1548 = vsub.f32 %v1300, 0.25000006
    %v1549 = vsub.f32 %v1301, 0.25000006
    %v1550 = vsub.f32 %v1302, 0.25000006
    %v1551 = vsub.f32 %v1303, 0.25000006
    %v1552 = vsub.f32 %v1304, 0.25000006
    %v1553 = vsub.f32 %v1305, 0.25000006
    %v1554 = vmul.f32 %v1546, %v1170
    %v1555 = vmul.f32 %v1547, %v1171
    %v1556 = vmul.f32 %v1548, %v1172
    %v1557 = vmul.f32 %v1549, %v1173
    %v1558 = vmul.f32 %v1550, %v1174
    %v1559 = vmul.f32 %v1551, %v1175
    %v1560 = vmul.f32 %v1552, %v1176
    %v1561 = vmul.f32 %v1553, %v1177
    %v1562 = vsub.f32 1.7500001, %v1298
    %v1563 = vsub.f32 1.7500001, %v1299
    %v1564 = vsub.f32 1.7500001, %v1300
    %v1565 = vsub.f32 1.7500001, %v1301
    %v1566 = vsub.f32 1.7500001, %v1302
    %v1567 = vsub.f32 1.7500001, %v1303
    %v1568 = vsub.f32 1.7500001, %v1304
    %v1569 = vsub.f32 1.7500001, %v1305
    %v1570 = vmul.f32 %v1562, %v1210
    %v1571 = vmul.f32 %v1563, %v1211
    %v1572 = vmul.f32 %v1564, %v1212
    %v1573 = vmul.f32 %v1565, %v1213
    %v1574 = vmul.f32 %v1566, %v1214
    %v1575 = vmul.f32 %v1567, %v1215
    %v1576 = vmul.f32 %v1568, %v1216
    %v1577 = vmul.f32 %v1569, %v1217
    %v1578 = vadd.f32 %v1554, %v1570
    %v1579 = vadd.f32 %v1555, %v1571
    %v1580 = vadd.f32 %v1556, %v1572
    %v1581 = vadd.f32 %v1557, %v1573
    %v1582 = vadd.f32 %v1558, %v1574
    %v1583 = vadd.f32 %v1559, %v1575
    %v1584 = vadd.f32 %v1560, %v1576
    %v1585 = vadd.f32 %v1561, %v1577
    %v1586 = vsub.f32 %v1298, 0.75
    %v1587 = vsub.f32 %v1299, 0.75
    %v1588 = vsub.f32 %v1300, 0.75
    %v1589 = vsub.f32 %v1301, 0.75
    %v1590 = vsub.f32 %v1302, 0.75
    %v1591 = vsub.f32 %v1303, 0.75
    %v1592 = vsub.f32 %v1304, 0.75
    %v1593 = vsub.f32 %v1305, 0.75
    %v1594 = vmul.f32 %v1586, %v1210
    %v1595 = vmul.f32 %v1587, %v1211
    %v1596 = vmul.f32 %v1588, %v1212
    %v1597 = vmul.f32 %v1589, %v1213
    %v1598 = vmul.f32 %v1590, %v1214
    %v1599 = vmul.f32 %v1591, %v1215
    %v1600 = vmul.f32 %v1592, %v1216
    %v1601 = vmul.f32 %v1593, %v1217
    %v1602 = vsub.f32 2.25, %v1298
    %v1603 = vsub.f32 2.25, %v1299
    %v1604 = vsub.f32 2.25, %v1300
    %v1605 = vsub.f32 2.25, %v1301
    %v1606 = vsub.f32 2.25, %v1302
    %v1607 = vsub.f32 2.25, %v1303
    %v1608 = vsub.f32 2.25, %v1304
    %v1609 = vsub.f32 2.25, %v1305
    %v1610 = vmul.f32 %v1602, %v1250
    %v1611 = vmul.f32 %v1603, %v1251
    %v1612 = vmul.f32 %v1604, %v1252
    %v1613 = vmul.f32 %v1605, %v1253
    %v1614 = vmul.f32 %v1606, %v1254
    %v1615 = vmul.f32 %v1607, %v1255
    %v1616 = vmul.f32 %v1608, %v1256
    %v1617 = vmul.f32 %v1609, %v1257
    %v1618 = vadd.f32 %v1594, %v1610
    %v1619 = vadd.f32 %v1595, %v1611
    %v1620 = vadd.f32 %v1596, %v1612
    %v1621 = vadd.f32 %v1597, %v1613
    %v1622 = vadd.f32 %v1598, %v1614
    %v1623 = vadd.f32 %v1599, %v1615
    %v1624 = vadd.f32 %v1600, %v1616
    %v1625 = vadd.f32 %v1601, %v1617
    %v1626 = vsub.f32 %v1298, 1.25
    %v1627 = vsub.f32 %v1299, 1.25
    %v1628 = vsub.f32 %v1300, 1.25
    %v1629 = vsub.f32 %v1301, 1.25
    %v1630 = vsub.f32 %v1302, 1.25
    %v1631 = vsub.f32 %v1303, 1.25
    %v1632 = vsub.f32 %v1304, 1.25
    %v1633 = vsub.f32 %v1305, 1.25
    %v1634 = vmul.f32 %v1626, %v1250
    %v1635 = vmul.f32 %v1627, %v1251
    %v1636 = vmul.f32 %v1628, %v1252
    %v1637 = vmul.f32 %v1629, %v1253
    %v1638 = vmul.f32 %v1630, %v1254
    %v1639 = vmul.f32 %v1631, %v1255
    %v1640 = vmul.f32 %v1632, %v1256
    %v1641 = vmul.f32 %v1633, %v1257
    %v1642 = vsub.f32 2.75, %v1298
    %v1643 = vsub.f32 2.75, %v1299
    %v1644 = vsub.f32 2.75, %v1300
    %v1645 = vsub.f32 2.75, %v1301
    %v1646 = vsub.f32 2.75, %v1302
    %v1647 = vsub.f32 2.75, %v1303
    %v1648 = vsub.f32 2.75, %v1304
    %v1649 = vsub.f32 2.75, %v1305
    %v1650 = vmul.f32 %v1642, %v1290
    %v1651 = vmul.f32 %v1643, %v1291
    %v1652 = vmul.f32 %v1644, %v1292
    %v1653 = vmul.f32 %v1645, %v1293
    %v1654 = vmul.f32 %v1646, %v1294
    %v1655 = vmul.f32 %v1647, %v1295
    %v1656 = vmul.f32 %v1648, %v1296
    %v1657 = vmul.f32 %v1649, %v1297
    %v1658 = vadd.f32 %v1634, %v1650
    %v1659 = vadd.f32 %v1635, %v1651
    %v1660 = vadd.f32 %v1636, %v1652
    %v1661 = vadd.f32 %v1637, %v1653
    %v1662 = vadd.f32 %v1638, %v1654
    %v1663 = vadd.f32 %v1639, %v1655
    %v1664 = vadd.f32 %v1640, %v1656
    %v1665 = vadd.f32 %v1641, %v1657
    %v1666 = vmul.f32 %v335, 0.8333333
    %v1667 = vmul.f32 %v337, 0.8333333
    %v1668 = vmul.f32 %v340, 0.8333333
    %v1669 = vmul.f32 %v342, 0.8333333
    %v1670 = vmul.f32 %v345, 0.8333333
    %v1671 = vmul.f32 %v347, 0.8333333
    %v1672 = vmul.f32 %v350, 0.8333333
    %v1673 = vmul.f32 %v352, 0.8333333
    %v1674 = vsub.f32 %v1666, -1.8333334
    %v1675 = vsub.f32 %v1667, -1.8333334
    %v1676 = vsub.f32 %v1668, -1.8333334
    %v1677 = vsub.f32 %v1669, -1.8333334
    %v1678 = vsub.f32 %v1670, -1.8333334
    %v1679 = vsub.f32 %v1671, -1.8333334
    %v1680 = vsub.f32 %v1672, -1.8333334
    %v1681 = vsub.f32 %v1673, -1.8333334
    %v1682 = vmul.f32 %v1674, %v1338
    %v1683 = vmul.f32 %v1675, %v1339
    %v1684 = vmul.f32 %v1676, %v1340
    %v1685 = vmul.f32 %v1677, %v1341
    %v1686 = vmul.f32 %v1678, %v1342
    %v1687 = vmul.f32 %v1679, %v1343
    %v1688 = vmul.f32 %v1680, %v1344
    %v1689 = vmul.f32 %v1681, %v1345
    %v1690 = vsub.f32 -0.5, %v1666
    %v1691 = vsub.f32 -0.5, %v1667
    %v1692 = vsub.f32 -0.5, %v1668
    %v1693 = vsub.f32 -0.5, %v1669
    %v1694 = vsub.f32 -0.5, %v1670
    %v1695 = vsub.f32 -0.5, %v1671
    %v1696 = vsub.f32 -0.5, %v1672
    %v1697 = vsub.f32 -0.5, %v1673
    %v1698 = vmul.f32 %v1690, %v1378
    %v1699 = vmul.f32 %v1691, %v1379
    %v1700 = vmul.f32 %v1692, %v1380
    %v1701 = vmul.f32 %v1693, %v1381
    %v1702 = vmul.f32 %v1694, %v1382
    %v1703 = vmul.f32 %v1695, %v1383
    %v1704 = vmul.f32 %v1696, %v1384
    %v1705 = vmul.f32 %v1697, %v1385
    %v1706 = vadd.f32 %v1682, %v1698
    %v1707 = vadd.f32 %v1683, %v1699
    %v1708 = vadd.f32 %v1684, %v1700
    %v1709 = vadd.f32 %v1685, %v1701
    %v1710 = vadd.f32 %v1686, %v1702
    %v1711 = vadd.f32 %v1687, %v1703
    %v1712 = vadd.f32 %v1688, %v1704
    %v1713 = vadd.f32 %v1689, %v1705
    %v1714 = vsub.f32 %v1666, -1.4999999
    %v1715 = vsub.f32 %v1667, -1.4999999
    %v1716 = vsub.f32 %v1668, -1.4999999
    %v1717 = vsub.f32 %v1669, -1.4999999
    %v1718 = vsub.f32 %v1670, -1.4999999
    %v1719 = vsub.f32 %v1671, -1.4999999
    %v1720 = vsub.f32 %v1672, -1.4999999
    %v1721 = vsub.f32 %v1673, -1.4999999
    %v1722 = vmul.f32 %v1714, %v1378
    %v1723 = vmul.f32 %v1715, %v1379
    %v1724 = vmul.f32 %v1716, %v1380
    %v1725 = vmul.f32 %v1717, %v1381
    %v1726 = vmul.f32 %v1718, %v1382
    %v1727 = vmul.f32 %v1719, %v1383
    %v1728 = vmul.f32 %v1720, %v1384
    %v1729 = vmul.f32 %v1721, %v1385
    %v1730 = vsub.f32 -0.16666666, %v1666
    %v1731 = vsub.f32 -0.16666666, %v1667
    %v1732 = vsub.f32 -0.16666666, %v1668
    %v1733 = vsub.f32 -0.16666666, %v1669
    %v1734 = vsub.f32 -0.16666666, %v1670
    %v1735 = vsub.f32 -0.16666666, %v1671
    %v1736 = vsub.f32 -0.16666666, %v1672
    %v1737 = vsub.f32 -0.16666666, %v1673
    %v1738 = vmul.f32 %v1730, %v1418
    %v1739 = vmul.f32 %v1731, %v1419
    %v1740 = vmul.f32 %v1732, %v1420
    %v1741 = vmul.f32 %v1733, %v1421
    %v1742 = vmul.f32 %v1734, %v1422
    %v1743 = vmul.f32 %v1735, %v1423
    %v1744 = vmul.f32 %v1736, %v1424
    %v1745 = vmul.f32 %v1737, %v1425
    %v1746 = vadd.f32 %v1722, %v1738
    %v1747 = vadd.f32 %v1723, %v1739
    %v1748 = vadd.f32 %v1724, %v1740
    %v1749 = vadd.f32 %v1725, %v1741
    %v1750 = vadd.f32 %v1726, %v1742
    %v1751 = vadd.f32 %v1727, %v1743
    %v1752 = vadd.f32 %v1728, %v1744
    %v1753 = vadd.f32 %v1729, %v1745
    %v1754 = vsub.f32 %v1666, -1.1666666
    %v1755 = vsub.f32 %v1667, -1.1666666
    %v1756 = vsub.f32 %v1668, -1.1666666
    %v1757 = vsub.f32 %v1669, -1.1666666
    %v1758 = vsub.f32 %v1670, -1.1666666
    %v1759 = vsub.f32 %v1671, -1.1666666
    %v1760 = vsub.f32 %v1672, -1.1666666
    %v1761 = vsub.f32 %v1673, -1.1666666
    %v1762 = vmul.f32 %v1754, %v1418
    %v1763 = vmul.f32 %v1755, %v1419
    %v1764 = vmul.f32 %v1756, %v1420
    %v1765 = vmul.f32 %v1757, %v1421
    %v1766 = vmul.f32 %v1758, %v1422
    %v1767 = vmul.f32 %v1759, %v1423
    %v1768 = vmul.f32 %v1760, %v1424
    %v1769 = vmul.f32 %v1761, %v1425
    %v1770 = vsub.f32 0.1666667, %v1666
    %v1771 = vsub.f32 0.1666667, %v1667
    %v1772 = vsub.f32 0.1666667, %v1668
    %v1773 = vsub.f32 0.1666667, %v1669
    %v1774 = vsub.f32 0.1666667, %v1670
    %v1775 = vsub.f32 0.1666667, %v1671
    %v1776 = vsub.f32 0.1666667, %v1672
    %v1777 = vsub.f32 0.1666667, %v1673
    %v1778 = vmul.f32 %v1770, %v1458
    %v1779 = vmul.f32 %v1771, %v1459
    %v1780 = vmul.f32 %v1772, %v1460
    %v1781 = vmul.f32 %v1773, %v1461
    %v1782 = vmul.f32 %v1774, %v1462
    %v1783 = vmul.f32 %v1775, %v1463
    %v1784 = vmul.f32 %v1776, %v1464
    %v1785 = vmul.f32 %v1777, %v1465
    %v1786 = vadd.f32 %v1762, %v1778
    %v1787 = vadd.f32 %v1763, %v1779
    %v1788 = vadd.f32 %v1764, %v1780
    %v1789 = vadd.f32 %v1765, %v1781
    %v1790 = vadd.f32 %v1766, %v1782
    %v1791 = vadd.f32 %v1767, %v1783
    %v1792 = vadd.f32 %v1768, %v1784
    %v1793 = vadd.f32 %v1769, %v1785
    %v1794 = vsub.f32 %v1666, -0.8333333
    %v1795 = vsub.f32 %v1667, -0.8333333
    %v1796 = vsub.f32 %v1668, -0.8333333
    %v1797 = vsub.f32 %v1669, -0.8333333
    %v1798 = vsub.f32 %v1670, -0.8333333
    %v1799 = vsub.f32 %v1671, -0.8333333
    %v1800 = vsub.f32 %v1672, -0.8333333
    %v1801 = vsub.f32 %v1673, -0.8333333
    %v1802 = vmul.f32 %v1794, %v1458
    %v1803 = vmul.f32 %v1795, %v1459
    %v1804 = vmul.f32 %v1796, %v1460
    %v1805 = vmul.f32 %v1797, %v1461
    %v1806 = vmul.f32 %v1798, %v1462
    %v1807 = vmul.f32 %v1799, %v1463
    %v1808 = vmul.f32 %v1800, %v1464
    %v1809 = vmul.f32 %v1801, %v1465
    %v1810 = vsub.f32 0.5, %v1666
    %v1811 = vsub.f32 0.5, %v1667
    %v1812 = vsub.f32 0.5, %v1668
    %v1813 = vsub.f32 0.5, %v1669
    %v1814 = vsub.f32 0.5, %v1670
    %v1815 = vsub.f32 0.5, %v1671
    %v1816 = vsub.f32 0.5, %v1672
    %v1817 = vsub.f32 0.5, %v1673
    %v1818 = vmul.f32 %v1810, %v1498
    %v1819 = vmul.f32 %v1811, %v1499
    %v1820 = vmul.f32 %v1812, %v1500
    %v1821 = vmul.f32 %v1813, %v1501
    %v1822 = vmul.f32 %v1814, %v1502
    %v1823 = vmul.f32 %v1815, %v1503
    %v1824 = vmul.f32 %v1816, %v1504
    %v1825 = vmul.f32 %v1817, %v1505
    %v1826 = vadd.f32 %v1802, %v1818
    %v1827 = vadd.f32 %v1803, %v1819
    %v1828 = vadd.f32 %v1804, %v1820
    %v1829 = vadd.f32 %v1805, %v1821
    %v1830 = vadd.f32 %v1806, %v1822
    %v1831 = vadd.f32 %v1807, %v1823
    %v1832 = vadd.f32 %v1808, %v1824
    %v1833 = vadd.f32 %v1809, %v1825
    %v1834 = vsub.f32 %v1666, -0.5
    %v1835 = vsub.f32 %v1667, -0.5
    %v1836 = vsub.f32 %v1668, -0.5
    %v1837 = vsub.f32 %v1669, -0.5
    %v1838 = vsub.f32 %v1670, -0.5
    %v1839 = vsub.f32 %v1671, -0.5
    %v1840 = vsub.f32 %v1672, -0.5
    %v1841 = vsub.f32 %v1673, -0.5
    %v1842 = vmul.f32 %v1834, %v1498
    %v1843 = vmul.f32 %v1835, %v1499
    %v1844 = vmul.f32 %v1836, %v1500
    %v1845 = vmul.f32 %v1837, %v1501
    %v1846 = vmul.f32 %v1838, %v1502
    %v1847 = vmul.f32 %v1839, %v1503
    %v1848 = vmul.f32 %v1840, %v1504
    %v1849 = vmul.f32 %v1841, %v1505
    %v1850 = vsub.f32 0.8333333, %v1666
    %v1851 = vsub.f32 0.8333333, %v1667
    %v1852 = vsub.f32 0.8333333, %v1668
    %v1853 = vsub.f32 0.8333333, %v1669
    %v1854 = vsub.f32 0.8333333, %v1670
    %v1855 = vsub.f32 0.8333333, %v1671
    %v1856 = vsub.f32 0.8333333, %v1672
    %v1857 = vsub.f32 0.8333333, %v1673
    %v1858 = vmul.f32 %v1850, %v1538
    %v1859 = vmul.f32 %v1851, %v1539
    %v1860 = vmul.f32 %v1852, %v1540
    %v1861 = vmul.f32 %v1853, %v1541
    %v1862 = vmul.f32 %v1854, %v1542
    %v1863 = vmul.f32 %v1855, %v1543
    %v1864 = vmul.f32 %v1856, %v1544
    %v1865 = vmul.f32 %v1857, %v1545
    %v1866 = vadd.f32 %v1842, %v1858
    %v1867 = vadd.f32 %v1843, %v1859
    %v1868 = vadd.f32 %v1844, %v1860
    %v1869 = vadd.f32 %v1845, %v1861
    %v1870 = vadd.f32 %v1846, %v1862
    %v1871 = vadd.f32 %v1847, %v1863
    %v1872 = vadd.f32 %v1848, %v1864
    %v1873 = vadd.f32 %v1849, %v1865
    %v1874 = vsub.f32 %v1666, -0.16666666
    %v1875 = vsub.f32 %v1667, -0.16666666
    %v1876 = vsub.f32 %v1668, -0.16666666
    %v1877 = vsub.f32 %v1669, -0.16666666
    %v1878 = vsub.f32 %v1670, -0.16666666
    %v1879 = vsub.f32 %v1671, -0.16666666
    %v1880 = vsub.f32 %v1672, -0.16666666
    %v1881 = vsub.f32 %v1673, -0.16666666
    %v1882 = vmul.f32 %v1874, %v1538
    %v1883 = vmul.f32 %v1875, %v1539
    %v1884 = vmul.f32 %v1876, %v1540
    %v1885 = vmul.f32 %v1877, %v1541
    %v1886 = vmul.f32 %v1878, %v1542
    %v1887 = vmul.f32 %v1879, %v1543
    %v1888 = vmul.f32 %v1880, %v1544
    %v1889 = vmul.f32 %v1881, %v1545
    %v1890 = vsub.f32 1.1666667, %v1666
    %v1891 = vsub.f32 1.1666667, %v1667
    %v1892 = vsub.f32 1.1666667, %v1668
    %v1893 = vsub.f32 1.1666667, %v1669
    %v1894 = vsub.f32 1.1666667, %v1670
    %v1895 = vsub.f32 1.1666667, %v1671
    %v1896 = vsub.f32 1.1666667, %v1672
    %v1897 = vsub.f32 1.1666667, %v1673
    %v1898 = vmul.f32 %v1890, %v1578
    %v1899 = vmul.f32 %v1891, %v1579
    %v1900 = vmul.f32 %v1892, %v1580
    %v1901 = vmul.f32 %v1893, %v1581
    %v1902 = vmul.f32 %v1894, %v1582
    %v1903 = vmul.f32 %v1895, %v1583
    %v1904 = vmul.f32 %v1896, %v1584
    %v1905 = vmul.f32 %v1897, %v1585
    %v1906 = vadd.f32 %v1882, %v1898
    %v1907 = vadd.f32 %v1883, %v1899
    %v1908 = vadd.f32 %v1884, %v1900
    %v1909 = vadd.f32 %v1885, %v1901
    %v1910 = vadd.f32 %v1886, %v1902
    %v1911 = vadd.f32 %v1887, %v1903
    %v1912 = vadd.f32 %v1888, %v1904
    %v1913 = vadd.f32 %v1889, %v1905
    %v1914 = vsub.f32 %v1666, 0.1666667
    %v1915 = vsub.f32 %v1667, 0.1666667
    %v1916 = vsub.f32 %v1668, 0.1666667
    %v1917 = vsub.f32 %v1669, 0.1666667
    %v1918 = vsub.f32 %v1670, 0.1666667
    %v1919 = vsub.f32 %v1671, 0.1666667
    %v1920 = vsub.f32 %v1672, 0.1666667
    %v1921 = vsub.f32 %v1673, 0.1666667
    %v1922 = vmul.f32 %v1914, %v1578
    %v1923 = vmul.f32 %v1915, %v1579
    %v1924 = vmul.f32 %v1916, %v1580
    %v1925 = vmul.f32 %v1917, %v1581
    %v1926 = vmul.f32 %v1918, %v1582
    %v1927 = vmul.f32 %v1919, %v1583
    %v1928 = vmul.f32 %v1920, %v1584
    %v1929 = vmul.f32 %v1921, %v1585
    %v1930 = vsub.f32 1.4999999, %v1666
    %v1931 = vsub.f32 1.4999999, %v1667
    %v1932 = vsub.f32 1.4999999, %v1668
    %v1933 = vsub.f32 1.4999999, %v1669
    %v1934 = vsub.f32 1.4999999, %v1670
    %v1935 = vsub.f32 1.4999999, %v1671
    %v1936 = vsub.f32 1.4999999, %v1672
    %v1937 = vsub.f32 1.4999999, %v1673
    %v1938 = vmul.f32 %v1930, %v1618
    %v1939 = vmul.f32 %v1931, %v1619
    %v1940 = vmul.f32 %v1932, %v1620
    %v1941 = vmul.f32 %v1933, %v1621
    %v1942 = vmul.f32 %v1934, %v1622
    %v1943 = vmul.f32 %v1935, %v1623
    %v1944 = vmul.f32 %v1936, %v1624
    %v1945 = vmul.f32 %v1937, %v1625
    %v1946 = vadd.f32 %v1922, %v1938
    %v1947 = vadd.f32 %v1923, %v1939
    %v1948 = vadd.f32 %v1924, %v1940
    %v1949 = vadd.f32 %v1925, %v1941
    %v1950 = vadd.f32 %v1926, %v1942
    %v1951 = vadd.f32 %v1927, %v1943
    %v1952 = vadd.f32 %v1928, %v1944
    %v1953 = vadd.f32 %v1929, %v1945
    %v1954 = vsub.f32 %v1666, 0.5
    %v1955 = vsub.f32 %v1667, 0.5
    %v1956 = vsub.f32 %v1668, 0.5
    %v1957 = vsub.f32 %v1669, 0.5
    %v1958 = vsub.f32 %v1670, 0.5
    %v1959 = vsub.f32 %v1671, 0.5
    %v1960 = vsub.f32 %v1672, 0.5
    %v1961 = vsub.f32 %v1673, 0.5
    %v1962 = vmul.f32 %v1954, %v1618
    %v1963 = vmul.f32 %v1955, %v1619
    %v1964 = vmul.f32 %v1956, %v1620
    %v1965 = vmul.f32 %v1957, %v1621
    %v1966 = vmul.f32 %v1958, %v1622
    %v1967 = vmul.f32 %v1959, %v1623
    %v1968 = vmul.f32 %v1960, %v1624
    %v1969 = vmul.f32 %v1961, %v1625
    %v1970 = vsub.f32 1.8333334, %v1666
    %v1971 = vsub.f32 1.8333334, %v1667
    %v1972 = vsub.f32 1.8333334, %v1668
    %v1973 = vsub.f32 1.8333334, %v1669
    %v1974 = vsub.f32 1.8333334, %v1670
    %v1975 = vsub.f32 1.8333334, %v1671
    %v1976 = vsub.f32 1.8333334, %v1672
    %v1977 = vsub.f32 1.8333334, %v1673
    %v1978 = vmul.f32 %v1970, %v1658
    %v1979 = vmul.f32 %v1971, %v1659
    %v1980 = vmul.f32 %v1972, %v1660
    %v1981 = vmul.f32 %v1973, %v1661
    %v1982 = vmul.f32 %v1974, %v1662
    %v1983 = vmul.f32 %v1975, %v1663
    %v1984 = vmul.f32 %v1976, %v1664
    %v1985 = vmul.f32 %v1977, %v1665
    %v1986 = vadd.f32 %v1962, %v1978
    %v1987 = vadd.f32 %v1963, %v1979
    %v1988 = vadd.f32 %v1964, %v1980
    %v1989 = vadd.f32 %v1965, %v1981
    %v1990 = vadd.f32 %v1966, %v1982
    %v1991 = vadd.f32 %v1967, %v1983
    %v1992 = vadd.f32 %v1968, %v1984
    %v1993 = vadd.f32 %v1969, %v1985
    %v1994 = vpack.c.bf16 %v507, %v506
    %v1995 = vpack.c.bf16 %v509, %v508
    %v1996 = vpack.c.bf16 %v511, %v510
    %v1997 = vpack.c.bf16 %v513, %v512
    %v1998 = vpack.c.bf16 %v1707, %v1706
    %v1999 = vpack.c.bf16 %v1709, %v1708
    %v2000 = vpack.c.bf16 %v1711, %v1710
    %v2001 = vpack.c.bf16 %v1713, %v1712
    %v2002 = vpack.c.bf16 %v1747, %v1746
    %v2003 = vpack.c.bf16 %v1749, %v1748
    %v2004 = vpack.c.bf16 %v1751, %v1750
    %v2005 = vpack.c.bf16 %v1753, %v1752
    %v2006 = vpack.c.bf16 %v1787, %v1786
    %v2007 = vpack.c.bf16 %v1789, %v1788
    %v2008 = vpack.c.bf16 %v1791, %v1790
    %v2009 = vpack.c.bf16 %v1793, %v1792
    %v2010 = vpack.c.bf16 %v1827, %v1826
    %v2011 = vpack.c.bf16 %v1829, %v1828
    %v2012 = vpack.c.bf16 %v1831, %v1830
    %v2013 = vpack.c.bf16 %v1833, %v1832
    %v2014 = vpack.c.bf16 %v1867, %v1866
    %v2015 = vpack.c.bf16 %v1869, %v1868
    %v2016 = vpack.c.bf16 %v1871, %v1870
    %v2017 = vpack.c.bf16 %v1873, %v1872
    %v2018 = vpack.c.bf16 %v1907, %v1906
    %v2019 = vpack.c.bf16 %v1909, %v1908
    %v2020 = vpack.c.bf16 %v1911, %v1910
    %v2021 = vpack.c.bf16 %v1913, %v1912
    %v2022 = vpack.c.bf16 %v1947, %v1946
    %v2023 = vpack.c.bf16 %v1949, %v1948
    %v2024 = vpack.c.bf16 %v1951, %v1950
    %v2025 = vpack.c.bf16 %v1953, %v1952
    %v2026 = vpack.c.bf16 %v1987, %v1986
    %v2027 = vpack.c.bf16 %v1989, %v1988
    %v2028 = vpack.c.bf16 %v1991, %v1990
    %v2029 = vpack.c.bf16 %v1993, %v1992
    %v2030 = vld [vmem:[#allocation5] sm:$0xff]
    %v2031 = vld [vmem:[#allocation5 + $0x8] sm:$0xff]
    %v2032 = vld [vmem:[#allocation5 + $0x10] sm:$0xf]
    %v2033 = vld [vmem:[#allocation5 + $0x14] sm:$0xff]
    %v2034 = vld [vmem:[#allocation5 + $0x1c] sm:$0xff]
    %v2035 = vld [vmem:[#allocation5 + $0x24] sm:$0xf]
    %v2036 = vld [vmem:[#allocation5 + $0x28] sm:$0xff]
    %v2037 = vld [vmem:[#allocation5 + $0x30] sm:$0xff]
    %v2038 = vld [vmem:[#allocation5 + $0x38] sm:$0xf]
    %v2039 = vld [vmem:[#allocation5 + $0x3c] sm:$0xff]
    %v2040 = vld [vmem:[#allocation5 + $0x44] sm:$0xff]
    %v2041 = vld [vmem:[#allocation5 + $0x4c] sm:$0xf]
    %v2054 = vunpack.c.l.b16 %v2030
    %v2055 = vunpack.c.h.b16 %v2030
    %v2056 = vunpack.c.l.b16 %v2031
    %v2057 = vunpack.c.h.b16 %v2031
    %v2058 = vunpack.c.l.b16 %v2032
    %v2059 = vunpack.c.l.b16 %v2033
    %v2060 = vunpack.c.h.b16 %v2033
    %v2061 = vunpack.c.l.b16 %v2034
    %v2062 = vunpack.c.h.b16 %v2034
    %v2063 = vunpack.c.l.b16 %v2035
    %v2064 = vunpack.c.l.b16 %v2036
    %v2065 = vunpack.c.h.b16 %v2036
    %v2066 = vunpack.c.l.b16 %v2037
    %v2067 = vunpack.c.h.b16 %v2037
    %v2068 = vunpack.c.l.b16 %v2038
    %v2069 = vunpack.c.l.b16 %v2039
    %v2070 = vunpack.c.h.b16 %v2039
    %v2071 = vunpack.c.l.b16 %v2040
    %v2072 = vunpack.c.h.b16 %v2040
    %v2073 = vunpack.c.l.b16 %v2041
    %v2074 = vpack.c.b16 %v2059, %v2054
    %v2075 = vpack.c.b16 %v2060, %v2055
    %v2076 = vpack.c.b16 %v2061, %v2056
    %v2077 = vpack.c.b16 %v2062, %v2057
    %v2078 = vpack.c.b16 %v2063, %v2058
    %v2079 = vpack.c.b16 %v2069, %v2064
    %v2080 = vpack.c.b16 %v2070, %v2065
    %v2081 = vpack.c.b16 %v2071, %v2066
    %v2082 = vpack.c.b16 %v2072, %v2067
    %v2083 = vpack.c.b16 %v2073, %v2068
    %vm2092 = vcmask 523264
    %v2094 = vsel %vm2092, %v2078, 0
    %v2097 = vsel %vm2092, %v2083, 0
    %2099 = vmatpush.bf16.msra.mxu0 %v2001
    %2100 = vmatpush.bf16.msra.mxu0 %v2000
    %2101 = vmatpush.bf16.msra.mxu0 %v1999
    %2102 = vmatpush.bf16.msra.mxu0 %v1998
    %2103 = vmatpush.bf16.msra.mxu0 %v1997
    %2104 = vmatpush.bf16.msra.mxu0 %v1996
    %2105 = vmatpush.bf16.msra.mxu0 %v1995
    %2106 = vmatpush.bf16.msra.mxu0 %v1994
    %2107 = vmatmul.bf16.gmra.mxu0 %v2074
    %v2108 = vpop.f32.mrf.mxu0
    %v2109 = vadd.f32 0.0, %v2108
    %v2110 = vpop.f32.mrf.mxu0
    %v2111 = vadd.f32 0.0, %v2110
    %2112 = vmatmul.bf16.gmra.mxu0 %v2079
    %v2113 = vpop.f32.mrf.mxu0
    %v2114 = vadd.f32 0.0, %v2113
    %v2115 = vpop.f32.mrf.mxu0
    %v2116 = vadd.f32 0.0, %v2115
    %2117 = vdwg.mxu0
    %2118 = vmatpush.bf16.msra.mxu0 %v2009
    %2119 = vmatpush.bf16.msra.mxu0 %v2008
    %2120 = vmatpush.bf16.msra.mxu0 %v2007
    %2121 = vmatpush.bf16.msra.mxu0 %v2006
    %2122 = vmatpush.bf16.msra.mxu0 %v2005
    %2123 = vmatpush.bf16.msra.mxu0 %v2004
    %2124 = vmatpush.bf16.msra.mxu0 %v2003
    %2125 = vmatpush.bf16.msra.mxu0 %v2002
    %2126 = vmatmul.bf16.gmra.mxu0 %v2075
    %v2127 = vpop.f32.mrf.mxu0
    %v2128 = vadd.f32 %v2109, %v2127
    %v2129 = vpop.f32.mrf.mxu0
    %v2130 = vadd.f32 %v2111, %v2129
    %2131 = vmatmul.bf16.gmra.mxu0 %v2080
    %v2132 = vpop.f32.mrf.mxu0
    %v2133 = vadd.f32 %v2114, %v2132
    %v2134 = vpop.f32.mrf.mxu0
    %v2135 = vadd.f32 %v2116, %v2134
    %2136 = vdwg.mxu0
    %2137 = vmatpush.bf16.msra.mxu0 %v2017
    %2138 = vmatpush.bf16.msra.mxu0 %v2016
    %2139 = vmatpush.bf16.msra.mxu0 %v2015
    %2140 = vmatpush.bf16.msra.mxu0 %v2014
    %2141 = vmatpush.bf16.msra.mxu0 %v2013
    %2142 = vmatpush.bf16.msra.mxu0 %v2012
    %2143 = vmatpush.bf16.msra.mxu0 %v2011
    %2144 = vmatpush.bf16.msra.mxu0 %v2010
    %2145 = vmatmul.bf16.gmra.mxu0 %v2076
    %v2146 = vpop.f32.mrf.mxu0
    %v2147 = vadd.f32 %v2128, %v2146
    %v2148 = vpop.f32.mrf.mxu0
    %v2149 = vadd.f32 %v2130, %v2148
    %2150 = vmatmul.bf16.gmra.mxu0 %v2081
    %v2151 = vpop.f32.mrf.mxu0
    %v2152 = vadd.f32 %v2133, %v2151
    %v2153 = vpop.f32.mrf.mxu0
    %v2154 = vadd.f32 %v2135, %v2153
    %2155 = vdwg.mxu0
    %2156 = vmatpush.bf16.msra.mxu0 %v2025
    %2157 = vmatpush.bf16.msra.mxu0 %v2024
    %2158 = vmatpush.bf16.msra.mxu0 %v2023
    %2159 = vmatpush.bf16.msra.mxu0 %v2022
    %2160 = vmatpush.bf16.msra.mxu0 %v2021
    %2161 = vmatpush.bf16.msra.mxu0 %v2020
    %2162 = vmatpush.bf16.msra.mxu0 %v2019
    %2163 = vmatpush.bf16.msra.mxu0 %v2018
    %2164 = vmatmul.bf16.gmra.mxu0 %v2077
    %v2165 = vpop.f32.mrf.mxu0
    %v2166 = vadd.f32 %v2147, %v2165
    %v2167 = vpop.f32.mrf.mxu0
    %v2168 = vadd.f32 %v2149, %v2167
    %2169 = vmatmul.bf16.gmra.mxu0 %v2082
    %v2170 = vpop.f32.mrf.mxu0
    %v2171 = vadd.f32 %v2152, %v2170
    %v2172 = vpop.f32.mrf.mxu0
    %v2173 = vadd.f32 %v2154, %v2172
    %2174 = vdwg.mxu0
    %2175 = vmatpush.bf16.msra.mxu0 0
    %2176 = vmatpush.bf16.msra.mxu0 0
    %2177 = vmatpush.bf16.msra.mxu0 0
    %2178 = vmatpush.bf16.msra.mxu0 0
    %2179 = vmatpush.bf16.msra.mxu0 %v2029
    %2180 = vmatpush.bf16.msra.mxu0 %v2028
    %2181 = vmatpush.bf16.msra.mxu0 %v2027
    %2182 = vmatpush.bf16.msra.mxu0 %v2026
    %2183 = vmatmul.bf16.gmra.mxu0 %v2094
    %v2184 = vpop.f32.mrf.mxu0
    %v2185 = vadd.f32 %v2166, %v2184
    %v2186 = vpop.f32.mrf.mxu0
    %v2187 = vadd.f32 %v2168, %v2186
    %2188 = vmatmul.bf16.gmra.mxu0 %v2097
    %v2189 = vpop.f32.mrf.mxu0
    %v2190 = vadd.f32 %v2171, %v2189
    %v2191 = vpop.f32.mrf.mxu0
    %v2192 = vadd.f32 %v2173, %v2191
    %2193 = vdwg.mxu0
    %v2194 = vxor.u32 %v2185, 2147483648
    %v2195 = vxor.u32 %v2187, 2147483648
    %v2196 = vxor.u32 %v2190, 2147483648
    %v2197 = vxor.u32 %v2192, 2147483648
    %v2198 = vmul.f32 %v2194, 1.442695
    %v2199 = vpow.pop %v2198
    %v2200 = vmul.f32 %v2195, 1.442695
    %v2201 = vpow.pop %v2200
    %v2202 = vmul.f32 %v2196, 1.442695
    %v2203 = vpow.pop %v2202
    %v2204 = vmul.f32 %v2197, 1.442695
    %v2205 = vpow.pop %v2204
    %v2206 = vadd.f32 %v2199, 1.0
    %v2207 = vadd.f32 %v2201, 1.0
    %v2208 = vadd.f32 %v2203, 1.0
    %v2209 = vadd.f32 %v2205, 1.0
    %v2210 = vrcp.pop %v2206
    %v2211 = vmul.f32 %v2206, %v2210
    %v2212 = vsub.f32 1.0, %v2211
    %v2213 = vmul.f32 %v2210, %v2212
    %v2214 = vadd.f32 %v2210, %v2213
    %vm2215 = vweird.f32 %v2206
    %vm2216 = vweird.f32 %v2210
    %vm2217 = vmor %vm2215, %vm2216
    %v2218 = vsel %vm2217, %v2210, %v2214
    %v2219 = vand.u32 2147483647, %v2206
    %vm2220 = vcmp.eq.f32.partialorder %v2219, 8.507059e+37
    %v2221 = vand.u32 %v2206, 2147483648
    %v2222 = vor.u32 1.1754944e-38, %v2221
    %v2223 = vsel %vm2220, %v2222, %v2218
    %v2224 = vmul.f32 1.0, %v2223
    %v2225 = vrcp.pop %v2207
    %v2226 = vmul.f32 %v2207, %v2225
    %v2227 = vsub.f32 1.0, %v2226
    %v2228 = vmul.f32 %v2225, %v2227
    %v2229 = vadd.f32 %v2225, %v2228
    %vm2230 = vweird.f32 %v2207
    %vm2231 = vweird.f32 %v2225
    %vm2232 = vmor %vm2230, %vm2231
    %v2233 = vsel %vm2232, %v2225, %v2229
    %v2234 = vand.u32 2147483647, %v2207
    %vm2235 = vcmp.eq.f32.partialorder %v2234, 8.507059e+37
    %v2236 = vand.u32 %v2207, 2147483648
    %v2237 = vor.u32 1.1754944e-38, %v2236
    %v2238 = vsel %vm2235, %v2237, %v2233
    %v2239 = vmul.f32 1.0, %v2238
    %v2240 = vrcp.pop %v2208
    %v2241 = vmul.f32 %v2208, %v2240
    %v2242 = vsub.f32 1.0, %v2241
    %v2243 = vmul.f32 %v2240, %v2242
    %v2244 = vadd.f32 %v2240, %v2243
    %vm2245 = vweird.f32 %v2208
    %vm2246 = vweird.f32 %v2240
    %vm2247 = vmor %vm2245, %vm2246
    %v2248 = vsel %vm2247, %v2240, %v2244
    %v2249 = vand.u32 2147483647, %v2208
    %vm2250 = vcmp.eq.f32.partialorder %v2249, 8.507059e+37
    %v2251 = vand.u32 %v2208, 2147483648
    %v2252 = vor.u32 1.1754944e-38, %v2251
    %v2253 = vsel %vm2250, %v2252, %v2248
    %v2254 = vmul.f32 1.0, %v2253
    %v2255 = vrcp.pop %v2209
    %v2256 = vmul.f32 %v2209, %v2255
    %v2257 = vsub.f32 1.0, %v2256
    %v2258 = vmul.f32 %v2255, %v2257
    %v2259 = vadd.f32 %v2255, %v2258
    %vm2260 = vweird.f32 %v2209
    %vm2261 = vweird.f32 %v2255
    %vm2262 = vmor %vm2260, %vm2261
    %v2263 = vsel %vm2262, %v2255, %v2259
    %v2264 = vand.u32 2147483647, %v2209
    %vm2265 = vcmp.eq.f32.partialorder %v2264, 8.507059e+37
    %v2266 = vand.u32 %v2209, 2147483648
    %v2267 = vor.u32 1.1754944e-38, %v2266
    %v2268 = vsel %vm2265, %v2267, %v2263
    %v2269 = vmul.f32 1.0, %v2268
    %v2270 = vmul.f32 %v2185, %v2224
    %v2271 = vmul.f32 %v2187, %v2239
    %v2272 = vmul.f32 %v2190, %v2254
    %v2273 = vmul.f32 %v2192, %v2269
    %vm2274 = vcmp.ge.f32.partialorder %v2185, -2.2
    %vm2275 = vcmp.ge.f32.partialorder %v2187, -2.2
    %vm2276 = vcmp.ge.f32.partialorder %v2190, -2.2
    %vm2277 = vcmp.ge.f32.partialorder %v2192, -2.2
    %v2278 = vsel %vm2274, 1, 0
    %v2279 = vsel %vm2275, 1, 0
    %v2280 = vsel %vm2276, 1, 0
    %v2281 = vsel %vm2277, 1, 0
    %v2282 = vcvt.s32.f32 %v2278
    %v2283 = vcvt.s32.f32 %v2279
    %v2284 = vcvt.s32.f32 %v2280
    %v2285 = vcvt.s32.f32 %v2281
    %vm2286 = vcmp.ge.f32.partialorder %v2185, -1.8
    %vm2287 = vcmp.ge.f32.partialorder %v2187, -1.8
    %vm2288 = vcmp.ge.f32.partialorder %v2190, -1.8
    %vm2289 = vcmp.ge.f32.partialorder %v2192, -1.8
    %v2290 = vsel %vm2286, 1, 0
    %v2291 = vsel %vm2287, 1, 0
    %v2292 = vsel %vm2288, 1, 0
    %v2293 = vsel %vm2289, 1, 0
    %v2294 = vcvt.s32.f32 %v2290
    %v2295 = vcvt.s32.f32 %v2291
    %v2296 = vcvt.s32.f32 %v2292
    %v2297 = vcvt.s32.f32 %v2293
    %vm2298 = vcmp.ge.f32.partialorder %v2185, -1.4
    %vm2299 = vcmp.ge.f32.partialorder %v2187, -1.4
    %vm2300 = vcmp.ge.f32.partialorder %v2190, -1.4
    %vm2301 = vcmp.ge.f32.partialorder %v2192, -1.4
    %v2302 = vsel %vm2298, 1, 0
    %v2303 = vsel %vm2299, 1, 0
    %v2304 = vsel %vm2300, 1, 0
    %v2305 = vsel %vm2301, 1, 0
    %v2306 = vcvt.s32.f32 %v2302
    %v2307 = vcvt.s32.f32 %v2303
    %v2308 = vcvt.s32.f32 %v2304
    %v2309 = vcvt.s32.f32 %v2305
    %vm2310 = vcmp.ge.f32.partialorder %v2185, -1.0
    %vm2311 = vcmp.ge.f32.partialorder %v2187, -1.0
    %vm2312 = vcmp.ge.f32.partialorder %v2190, -1.0
    %vm2313 = vcmp.ge.f32.partialorder %v2192, -1.0
    %v2314 = vsel %vm2310, 1, 0
    %v2315 = vsel %vm2311, 1, 0
    %v2316 = vsel %vm2312, 1, 0
    %v2317 = vsel %vm2313, 1, 0
    %v2318 = vcvt.s32.f32 %v2314
    %v2319 = vcvt.s32.f32 %v2315
    %v2320 = vcvt.s32.f32 %v2316
    %v2321 = vcvt.s32.f32 %v2317
    %vm2322 = vcmp.ge.f32.partialorder %v2185, -0.6
    %vm2323 = vcmp.ge.f32.partialorder %v2187, -0.6
    %vm2324 = vcmp.ge.f32.partialorder %v2190, -0.6
    %vm2325 = vcmp.ge.f32.partialorder %v2192, -0.6
    %v2326 = vsel %vm2322, 1, 0
    %v2327 = vsel %vm2323, 1, 0
    %v2328 = vsel %vm2324, 1, 0
    %v2329 = vsel %vm2325, 1, 0
    %v2330 = vcvt.s32.f32 %v2326
    %v2331 = vcvt.s32.f32 %v2327
    %v2332 = vcvt.s32.f32 %v2328
    %v2333 = vcvt.s32.f32 %v2329
    %vm2334 = vcmp.ge.f32.partialorder %v2185, -0.19999999
    %vm2335 = vcmp.ge.f32.partialorder %v2187, -0.19999999
    %vm2336 = vcmp.ge.f32.partialorder %v2190, -0.19999999
    %vm2337 = vcmp.ge.f32.partialorder %v2192, -0.19999999
    %v2338 = vsel %vm2334, 1, 0
    %v2339 = vsel %vm2335, 1, 0
    %v2340 = vsel %vm2336, 1, 0
    %v2341 = vsel %vm2337, 1, 0
    %v2342 = vcvt.s32.f32 %v2338
    %v2343 = vcvt.s32.f32 %v2339
    %v2344 = vcvt.s32.f32 %v2340
    %v2345 = vcvt.s32.f32 %v2341
    %vm2346 = vcmp.ge.f32.partialorder %v2185, 0.20000005
    %vm2347 = vcmp.ge.f32.partialorder %v2187, 0.20000005
    %vm2348 = vcmp.ge.f32.partialorder %v2190, 0.20000005
    %vm2349 = vcmp.ge.f32.partialorder %v2192, 0.20000005
    %v2350 = vsel %vm2346, 1, 0
    %v2351 = vsel %vm2347, 1, 0
    %v2352 = vsel %vm2348, 1, 0
    %v2353 = vsel %vm2349, 1, 0
    %v2354 = vcvt.s32.f32 %v2350
    %v2355 = vcvt.s32.f32 %v2351
    %v2356 = vcvt.s32.f32 %v2352
    %v2357 = vcvt.s32.f32 %v2353
    %vm2358 = vcmp.ge.f32.partialorder %v2185, 0.6
    %vm2359 = vcmp.ge.f32.partialorder %v2187, 0.6
    %vm2360 = vcmp.ge.f32.partialorder %v2190, 0.6
    %vm2361 = vcmp.ge.f32.partialorder %v2192, 0.6
    %v2362 = vsel %vm2358, 1, 0
    %v2363 = vsel %vm2359, 1, 0
    %v2364 = vsel %vm2360, 1, 0
    %v2365 = vsel %vm2361, 1, 0
    %v2366 = vcvt.s32.f32 %v2362
    %v2367 = vcvt.s32.f32 %v2363
    %v2368 = vcvt.s32.f32 %v2364
    %v2369 = vcvt.s32.f32 %v2365
    %vm2370 = vcmp.ge.f32.partialorder %v2185, 1.0
    %vm2371 = vcmp.ge.f32.partialorder %v2187, 1.0
    %vm2372 = vcmp.ge.f32.partialorder %v2190, 1.0
    %vm2373 = vcmp.ge.f32.partialorder %v2192, 1.0
    %v2374 = vsel %vm2370, 1, 0
    %v2375 = vsel %vm2371, 1, 0
    %v2376 = vsel %vm2372, 1, 0
    %v2377 = vsel %vm2373, 1, 0
    %v2378 = vcvt.s32.f32 %v2374
    %v2379 = vcvt.s32.f32 %v2375
    %v2380 = vcvt.s32.f32 %v2376
    %v2381 = vcvt.s32.f32 %v2377
    %vm2382 = vcmp.ge.f32.partialorder %v2185, 1.4000001
    %vm2383 = vcmp.ge.f32.partialorder %v2187, 1.4000001
    %vm2384 = vcmp.ge.f32.partialorder %v2190, 1.4000001
    %vm2385 = vcmp.ge.f32.partialorder %v2192, 1.4000001
    %v2386 = vsel %vm2382, 1, 0
    %v2387 = vsel %vm2383, 1, 0
    %v2388 = vsel %vm2384, 1, 0
    %v2389 = vsel %vm2385, 1, 0
    %v2390 = vcvt.s32.f32 %v2386
    %v2391 = vcvt.s32.f32 %v2387
    %v2392 = vcvt.s32.f32 %v2388
    %v2393 = vcvt.s32.f32 %v2389
    %vm2394 = vcmp.ge.f32.partialorder %v2185, 1.8
    %vm2395 = vcmp.ge.f32.partialorder %v2187, 1.8
    %vm2396 = vcmp.ge.f32.partialorder %v2190, 1.8
    %vm2397 = vcmp.ge.f32.partialorder %v2192, 1.8
    %v2398 = vsel %vm2394, 1, 0
    %v2399 = vsel %vm2395, 1, 0
    %v2400 = vsel %vm2396, 1, 0
    %v2401 = vsel %vm2397, 1, 0
    %v2402 = vcvt.s32.f32 %v2398
    %v2403 = vcvt.s32.f32 %v2399
    %v2404 = vcvt.s32.f32 %v2400
    %v2405 = vcvt.s32.f32 %v2401
    %vm2406 = vcmp.ge.f32.partialorder %v2185, 2.2
    %vm2407 = vcmp.ge.f32.partialorder %v2187, 2.2
    %vm2408 = vcmp.ge.f32.partialorder %v2190, 2.2
    %vm2409 = vcmp.ge.f32.partialorder %v2192, 2.2
    %v2410 = vsel %vm2406, 1, 0
    %v2411 = vsel %vm2407, 1, 0
    %v2412 = vsel %vm2408, 1, 0
    %v2413 = vsel %vm2409, 1, 0
    %v2414 = vcvt.s32.f32 %v2410
    %v2415 = vcvt.s32.f32 %v2411
    %v2416 = vcvt.s32.f32 %v2412
    %v2417 = vcvt.s32.f32 %v2413
    %v2418 = vsub.f32 %v2282, %v2294
    %v2419 = vsub.f32 %v2283, %v2295
    %v2420 = vsub.f32 %v2284, %v2296
    %v2421 = vsub.f32 %v2285, %v2297
    %v2422 = vsub.f32 %v2294, %v2306
    %v2423 = vsub.f32 %v2295, %v2307
    %v2424 = vsub.f32 %v2296, %v2308
    %v2425 = vsub.f32 %v2297, %v2309
    %v2426 = vsub.f32 %v2306, %v2318
    %v2427 = vsub.f32 %v2307, %v2319
    %v2428 = vsub.f32 %v2308, %v2320
    %v2429 = vsub.f32 %v2309, %v2321
    %v2430 = vsub.f32 %v2318, %v2330
    %v2431 = vsub.f32 %v2319, %v2331
    %v2432 = vsub.f32 %v2320, %v2332
    %v2433 = vsub.f32 %v2321, %v2333
    %v2434 = vsub.f32 %v2330, %v2342
    %v2435 = vsub.f32 %v2331, %v2343
    %v2436 = vsub.f32 %v2332, %v2344
    %v2437 = vsub.f32 %v2333, %v2345
    %v2438 = vsub.f32 %v2342, %v2354
    %v2439 = vsub.f32 %v2343, %v2355
    %v2440 = vsub.f32 %v2344, %v2356
    %v2441 = vsub.f32 %v2345, %v2357
    %v2442 = vsub.f32 %v2354, %v2366
    %v2443 = vsub.f32 %v2355, %v2367
    %v2444 = vsub.f32 %v2356, %v2368
    %v2445 = vsub.f32 %v2357, %v2369
    %v2446 = vsub.f32 %v2366, %v2378
    %v2447 = vsub.f32 %v2367, %v2379
    %v2448 = vsub.f32 %v2368, %v2380
    %v2449 = vsub.f32 %v2369, %v2381
    %v2450 = vsub.f32 %v2378, %v2390
    %v2451 = vsub.f32 %v2379, %v2391
    %v2452 = vsub.f32 %v2380, %v2392
    %v2453 = vsub.f32 %v2381, %v2393
    %v2454 = vsub.f32 %v2390, %v2402
    %v2455 = vsub.f32 %v2391, %v2403
    %v2456 = vsub.f32 %v2392, %v2404
    %v2457 = vsub.f32 %v2393, %v2405
    %v2458 = vsub.f32 %v2402, %v2414
    %v2459 = vsub.f32 %v2403, %v2415
    %v2460 = vsub.f32 %v2404, %v2416
    %v2461 = vsub.f32 %v2405, %v2417
    %v2462 = vmul.f32 %v2185, 2.5
    %v2463 = vmul.f32 %v2187, 2.5
    %v2464 = vmul.f32 %v2190, 2.5
    %v2465 = vmul.f32 %v2192, 2.5
    %v2466 = vsub.f32 %v2462, -5.5
    %v2467 = vsub.f32 %v2463, -5.5
    %v2468 = vsub.f32 %v2464, -5.5
    %v2469 = vsub.f32 %v2465, -5.5
    %v2470 = vmul.f32 %v2466, %v2418
    %v2471 = vmul.f32 %v2467, %v2419
    %v2472 = vmul.f32 %v2468, %v2420
    %v2473 = vmul.f32 %v2469, %v2421
    %v2474 = vsub.f32 -3.5, %v2462
    %v2475 = vsub.f32 -3.5, %v2463
    %v2476 = vsub.f32 -3.5, %v2464
    %v2477 = vsub.f32 -3.5, %v2465
    %v2478 = vmul.f32 %v2474, %v2422
    %v2479 = vmul.f32 %v2475, %v2423
    %v2480 = vmul.f32 %v2476, %v2424
    %v2481 = vmul.f32 %v2477, %v2425
    %v2482 = vadd.f32 %v2470, %v2478
    %v2483 = vadd.f32 %v2471, %v2479
    %v2484 = vadd.f32 %v2472, %v2480
    %v2485 = vadd.f32 %v2473, %v2481
    %v2486 = vsub.f32 %v2462, -4.5
    %v2487 = vsub.f32 %v2463, -4.5
    %v2488 = vsub.f32 %v2464, -4.5
    %v2489 = vsub.f32 %v2465, -4.5
    %v2490 = vmul.f32 %v2486, %v2422
    %v2491 = vmul.f32 %v2487, %v2423
    %v2492 = vmul.f32 %v2488, %v2424
    %v2493 = vmul.f32 %v2489, %v2425
    %v2494 = vsub.f32 -2.5, %v2462
    %v2495 = vsub.f32 -2.5, %v2463
    %v2496 = vsub.f32 -2.5, %v2464
    %v2497 = vsub.f32 -2.5, %v2465
    %v2498 = vmul.f32 %v2494, %v2426
    %v2499 = vmul.f32 %v2495, %v2427
    %v2500 = vmul.f32 %v2496, %v2428
    %v2501 = vmul.f32 %v2497, %v2429
    %v2502 = vadd.f32 %v2490, %v2498
    %v2503 = vadd.f32 %v2491, %v2499
    %v2504 = vadd.f32 %v2492, %v2500
    %v2505 = vadd.f32 %v2493, %v2501
    %v2506 = vsub.f32 %v2462, -3.5
    %v2507 = vsub.f32 %v2463, -3.5
    %v2508 = vsub.f32 %v2464, -3.5
    %v2509 = vsub.f32 %v2465, -3.5
    %v2510 = vmul.f32 %v2506, %v2426
    %v2511 = vmul.f32 %v2507, %v2427
    %v2512 = vmul.f32 %v2508, %v2428
    %v2513 = vmul.f32 %v2509, %v2429
    %v2514 = vsub.f32 -1.5, %v2462
    %v2515 = vsub.f32 -1.5, %v2463
    %v2516 = vsub.f32 -1.5, %v2464
    %v2517 = vsub.f32 -1.5, %v2465
    %v2518 = vmul.f32 %v2514, %v2430
    %v2519 = vmul.f32 %v2515, %v2431
    %v2520 = vmul.f32 %v2516, %v2432
    %v2521 = vmul.f32 %v2517, %v2433
    %v2522 = vadd.f32 %v2510, %v2518
    %v2523 = vadd.f32 %v2511, %v2519
    %v2524 = vadd.f32 %v2512, %v2520
    %v2525 = vadd.f32 %v2513, %v2521
    %v2526 = vsub.f32 %v2462, -2.5
    %v2527 = vsub.f32 %v2463, -2.5
    %v2528 = vsub.f32 %v2464, -2.5
    %v2529 = vsub.f32 %v2465, -2.5
    %v2530 = vmul.f32 %v2526, %v2430
    %v2531 = vmul.f32 %v2527, %v2431
    %v2532 = vmul.f32 %v2528, %v2432
    %v2533 = vmul.f32 %v2529, %v2433
    %v2534 = vsub.f32 -0.49999997, %v2462
    %v2535 = vsub.f32 -0.49999997, %v2463
    %v2536 = vsub.f32 -0.49999997, %v2464
    %v2537 = vsub.f32 -0.49999997, %v2465
    %v2538 = vmul.f32 %v2534, %v2434
    %v2539 = vmul.f32 %v2535, %v2435
    %v2540 = vmul.f32 %v2536, %v2436
    %v2541 = vmul.f32 %v2537, %v2437
    %v2542 = vadd.f32 %v2530, %v2538
    %v2543 = vadd.f32 %v2531, %v2539
    %v2544 = vadd.f32 %v2532, %v2540
    %v2545 = vadd.f32 %v2533, %v2541
    %v2546 = vsub.f32 %v2462, -1.5
    %v2547 = vsub.f32 %v2463, -1.5
    %v2548 = vsub.f32 %v2464, -1.5
    %v2549 = vsub.f32 %v2465, -1.5
    %v2550 = vmul.f32 %v2546, %v2434
    %v2551 = vmul.f32 %v2547, %v2435
    %v2552 = vmul.f32 %v2548, %v2436
    %v2553 = vmul.f32 %v2549, %v2437
    %v2554 = vsub.f32 0.5000001, %v2462
    %v2555 = vsub.f32 0.5000001, %v2463
    %v2556 = vsub.f32 0.5000001, %v2464
    %v2557 = vsub.f32 0.5000001, %v2465
    %v2558 = vmul.f32 %v2554, %v2438
    %v2559 = vmul.f32 %v2555, %v2439
    %v2560 = vmul.f32 %v2556, %v2440
    %v2561 = vmul.f32 %v2557, %v2441
    %v2562 = vadd.f32 %v2550, %v2558
    %v2563 = vadd.f32 %v2551, %v2559
    %v2564 = vadd.f32 %v2552, %v2560
    %v2565 = vadd.f32 %v2553, %v2561
    %v2566 = vsub.f32 %v2462, -0.49999997
    %v2567 = vsub.f32 %v2463, -0.49999997
    %v2568 = vsub.f32 %v2464, -0.49999997
    %v2569 = vsub.f32 %v2465, -0.49999997
    %v2570 = vmul.f32 %v2566, %v2438
    %v2571 = vmul.f32 %v2567, %v2439
    %v2572 = vmul.f32 %v2568, %v2440
    %v2573 = vmul.f32 %v2569, %v2441
    %v2574 = vsub.f32 1.5, %v2462
    %v2575 = vsub.f32 1.5, %v2463
    %v2576 = vsub.f32 1.5, %v2464
    %v2577 = vsub.f32 1.5, %v2465
    %v2578 = vmul.f32 %v2574, %v2442
    %v2579 = vmul.f32 %v2575, %v2443
    %v2580 = vmul.f32 %v2576, %v2444
    %v2581 = vmul.f32 %v2577, %v2445
    %v2582 = vadd.f32 %v2570, %v2578
    %v2583 = vadd.f32 %v2571, %v2579
    %v2584 = vadd.f32 %v2572, %v2580
    %v2585 = vadd.f32 %v2573, %v2581
    %v2586 = vsub.f32 %v2462, 0.5000001
    %v2587 = vsub.f32 %v2463, 0.5000001
    %v2588 = vsub.f32 %v2464, 0.5000001
    %v2589 = vsub.f32 %v2465, 0.5000001
    %v2590 = vmul.f32 %v2586, %v2442
    %v2591 = vmul.f32 %v2587, %v2443
    %v2592 = vmul.f32 %v2588, %v2444
    %v2593 = vmul.f32 %v2589, %v2445
    %v2594 = vsub.f32 2.5, %v2462
    %v2595 = vsub.f32 2.5, %v2463
    %v2596 = vsub.f32 2.5, %v2464
    %v2597 = vsub.f32 2.5, %v2465
    %v2598 = vmul.f32 %v2594, %v2446
    %v2599 = vmul.f32 %v2595, %v2447
    %v2600 = vmul.f32 %v2596, %v2448
    %v2601 = vmul.f32 %v2597, %v2449
    %v2602 = vadd.f32 %v2590, %v2598
    %v2603 = vadd.f32 %v2591, %v2599
    %v2604 = vadd.f32 %v2592, %v2600
    %v2605 = vadd.f32 %v2593, %v2601
    %v2606 = vsub.f32 %v2462, 1.5
    %v2607 = vsub.f32 %v2463, 1.5
    %v2608 = vsub.f32 %v2464, 1.5
    %v2609 = vsub.f32 %v2465, 1.5
    %v2610 = vmul.f32 %v2606, %v2446
    %v2611 = vmul.f32 %v2607, %v2447
    %v2612 = vmul.f32 %v2608, %v2448
    %v2613 = vmul.f32 %v2609, %v2449
    %v2614 = vsub.f32 3.5000002, %v2462
    %v2615 = vsub.f32 3.5000002, %v2463
    %v2616 = vsub.f32 3.5000002, %v2464
    %v2617 = vsub.f32 3.5000002, %v2465
    %v2618 = vmul.f32 %v2614, %v2450
    %v2619 = vmul.f32 %v2615, %v2451
    %v2620 = vmul.f32 %v2616, %v2452
    %v2621 = vmul.f32 %v2617, %v2453
    %v2622 = vadd.f32 %v2610, %v2618
    %v2623 = vadd.f32 %v2611, %v2619
    %v2624 = vadd.f32 %v2612, %v2620
    %v2625 = vadd.f32 %v2613, %v2621
    %v2626 = vsub.f32 %v2462, 2.5
    %v2627 = vsub.f32 %v2463, 2.5
    %v2628 = vsub.f32 %v2464, 2.5
    %v2629 = vsub.f32 %v2465, 2.5
    %v2630 = vmul.f32 %v2626, %v2450
    %v2631 = vmul.f32 %v2627, %v2451
    %v2632 = vmul.f32 %v2628, %v2452
    %v2633 = vmul.f32 %v2629, %v2453
    %v2634 = vsub.f32 4.5, %v2462
    %v2635 = vsub.f32 4.5, %v2463
    %v2636 = vsub.f32 4.5, %v2464
    %v2637 = vsub.f32 4.5, %v2465
    %v2638 = vmul.f32 %v2634, %v2454
    %v2639 = vmul.f32 %v2635, %v2455
    %v2640 = vmul.f32 %v2636, %v2456
    %v2641 = vmul.f32 %v2637, %v2457
    %v2642 = vadd.f32 %v2630, %v2638
    %v2643 = vadd.f32 %v2631, %v2639
    %v2644 = vadd.f32 %v2632, %v2640
    %v2645 = vadd.f32 %v2633, %v2641
    %v2646 = vsub.f32 %v2462, 3.5000002
    %v2647 = vsub.f32 %v2463, 3.5000002
    %v2648 = vsub.f32 %v2464, 3.5000002
    %v2649 = vsub.f32 %v2465, 3.5000002
    %v2650 = vmul.f32 %v2646, %v2454
    %v2651 = vmul.f32 %v2647, %v2455
    %v2652 = vmul.f32 %v2648, %v2456
    %v2653 = vmul.f32 %v2649, %v2457
    %v2654 = vsub.f32 5.5, %v2462
    %v2655 = vsub.f32 5.5, %v2463
    %v2656 = vsub.f32 5.5, %v2464
    %v2657 = vsub.f32 5.5, %v2465
    %v2658 = vmul.f32 %v2654, %v2458
    %v2659 = vmul.f32 %v2655, %v2459
    %v2660 = vmul.f32 %v2656, %v2460
    %v2661 = vmul.f32 %v2657, %v2461
    %v2662 = vadd.f32 %v2650, %v2658
    %v2663 = vadd.f32 %v2651, %v2659
    %v2664 = vadd.f32 %v2652, %v2660
    %v2665 = vadd.f32 %v2653, %v2661
    %v2666 = vmul.f32 %v2185, 1.25
    %v2667 = vmul.f32 %v2187, 1.25
    %v2668 = vmul.f32 %v2190, 1.25
    %v2669 = vmul.f32 %v2192, 1.25
    %v2670 = vsub.f32 %v2666, -2.75
    %v2671 = vsub.f32 %v2667, -2.75
    %v2672 = vsub.f32 %v2668, -2.75
    %v2673 = vsub.f32 %v2669, -2.75
    %v2674 = vmul.f32 %v2670, %v2482
    %v2675 = vmul.f32 %v2671, %v2483
    %v2676 = vmul.f32 %v2672, %v2484
    %v2677 = vmul.f32 %v2673, %v2485
    %v2678 = vsub.f32 -1.25, %v2666
    %v2679 = vsub.f32 -1.25, %v2667
    %v2680 = vsub.f32 -1.25, %v2668
    %v2681 = vsub.f32 -1.25, %v2669
    %v2682 = vmul.f32 %v2678, %v2502
    %v2683 = vmul.f32 %v2679, %v2503
    %v2684 = vmul.f32 %v2680, %v2504
    %v2685 = vmul.f32 %v2681, %v2505
    %v2686 = vadd.f32 %v2674, %v2682
    %v2687 = vadd.f32 %v2675, %v2683
    %v2688 = vadd.f32 %v2676, %v2684
    %v2689 = vadd.f32 %v2677, %v2685
    %v2690 = vsub.f32 %v2666, -2.25
    %v2691 = vsub.f32 %v2667, -2.25
    %v2692 = vsub.f32 %v2668, -2.25
    %v2693 = vsub.f32 %v2669, -2.25
    %v2694 = vmul.f32 %v2690, %v2502
    %v2695 = vmul.f32 %v2691, %v2503
    %v2696 = vmul.f32 %v2692, %v2504
    %v2697 = vmul.f32 %v2693, %v2505
    %v2698 = vsub.f32 -0.75, %v2666
    %v2699 = vsub.f32 -0.75, %v2667
    %v2700 = vsub.f32 -0.75, %v2668
    %v2701 = vsub.f32 -0.75, %v2669
    %v2702 = vmul.f32 %v2698, %v2522
    %v2703 = vmul.f32 %v2699, %v2523
    %v2704 = vmul.f32 %v2700, %v2524
    %v2705 = vmul.f32 %v2701, %v2525
    %v2706 = vadd.f32 %v2694, %v2702
    %v2707 = vadd.f32 %v2695, %v2703
    %v2708 = vadd.f32 %v2696, %v2704
    %v2709 = vadd.f32 %v2697, %v2705
    %v2710 = vsub.f32 %v2666, -1.75
    %v2711 = vsub.f32 %v2667, -1.75
    %v2712 = vsub.f32 %v2668, -1.75
    %v2713 = vsub.f32 %v2669, -1.75
    %v2714 = vmul.f32 %v2710, %v2522
    %v2715 = vmul.f32 %v2711, %v2523
    %v2716 = vmul.f32 %v2712, %v2524
    %v2717 = vmul.f32 %v2713, %v2525
    %v2718 = vsub.f32 -0.24999999, %v2666
    %v2719 = vsub.f32 -0.24999999, %v2667
    %v2720 = vsub.f32 -0.24999999, %v2668
    %v2721 = vsub.f32 -0.24999999, %v2669
    %v2722 = vmul.f32 %v2718, %v2542
    %v2723 = vmul.f32 %v2719, %v2543
    %v2724 = vmul.f32 %v2720, %v2544
    %v2725 = vmul.f32 %v2721, %v2545
    %v2726 = vadd.f32 %v2714, %v2722
    %v2727 = vadd.f32 %v2715, %v2723
    %v2728 = vadd.f32 %v2716, %v2724
    %v2729 = vadd.f32 %v2717, %v2725
    %v2730 = vsub.f32 %v2666, -1.25
    %v2731 = vsub.f32 %v2667, -1.25
    %v2732 = vsub.f32 %v2668, -1.25
    %v2733 = vsub.f32 %v2669, -1.25
    %v2734 = vmul.f32 %v2730, %v2542
    %v2735 = vmul.f32 %v2731, %v2543
    %v2736 = vmul.f32 %v2732, %v2544
    %v2737 = vmul.f32 %v2733, %v2545
    %v2738 = vsub.f32 0.25000006, %v2666
    %v2739 = vsub.f32 0.25000006, %v2667
    %v2740 = vsub.f32 0.25000006, %v2668
    %v2741 = vsub.f32 0.25000006, %v2669
    %v2742 = vmul.f32 %v2738, %v2562
    %v2743 = vmul.f32 %v2739, %v2563
    %v2744 = vmul.f32 %v2740, %v2564
    %v2745 = vmul.f32 %v2741, %v2565
    %v2746 = vadd.f32 %v2734, %v2742
    %v2747 = vadd.f32 %v2735, %v2743
    %v2748 = vadd.f32 %v2736, %v2744
    %v2749 = vadd.f32 %v2737, %v2745
    %v2750 = vsub.f32 %v2666, -0.75
    %v2751 = vsub.f32 %v2667, -0.75
    %v2752 = vsub.f32 %v2668, -0.75
    %v2753 = vsub.f32 %v2669, -0.75
    %v2754 = vmul.f32 %v2750, %v2562
    %v2755 = vmul.f32 %v2751, %v2563
    %v2756 = vmul.f32 %v2752, %v2564
    %v2757 = vmul.f32 %v2753, %v2565
    %v2758 = vsub.f32 0.75, %v2666
    %v2759 = vsub.f32 0.75, %v2667
    %v2760 = vsub.f32 0.75, %v2668
    %v2761 = vsub.f32 0.75, %v2669
    %v2762 = vmul.f32 %v2758, %v2582
    %v2763 = vmul.f32 %v2759, %v2583
    %v2764 = vmul.f32 %v2760, %v2584
    %v2765 = vmul.f32 %v2761, %v2585
    %v2766 = vadd.f32 %v2754, %v2762
    %v2767 = vadd.f32 %v2755, %v2763
    %v2768 = vadd.f32 %v2756, %v2764
    %v2769 = vadd.f32 %v2757, %v2765
    %v2770 = vsub.f32 %v2666, -0.24999999
    %v2771 = vsub.f32 %v2667, -0.24999999
    %v2772 = vsub.f32 %v2668, -0.24999999
    %v2773 = vsub.f32 %v2669, -0.24999999
    %v2774 = vmul.f32 %v2770, %v2582
    %v2775 = vmul.f32 %v2771, %v2583
    %v2776 = vmul.f32 %v2772, %v2584
    %v2777 = vmul.f32 %v2773, %v2585
    %v2778 = vsub.f32 1.25, %v2666
    %v2779 = vsub.f32 1.25, %v2667
    %v2780 = vsub.f32 1.25, %v2668
    %v2781 = vsub.f32 1.25, %v2669
    %v2782 = vmul.f32 %v2778, %v2602
    %v2783 = vmul.f32 %v2779, %v2603
    %v2784 = vmul.f32 %v2780, %v2604
    %v2785 = vmul.f32 %v2781, %v2605
    %v2786 = vadd.f32 %v2774, %v2782
    %v2787 = vadd.f32 %v2775, %v2783
    %v2788 = vadd.f32 %v2776, %v2784
    %v2789 = vadd.f32 %v2777, %v2785
    %v2790 = vsub.f32 %v2666, 0.25000006
    %v2791 = vsub.f32 %v2667, 0.25000006
    %v2792 = vsub.f32 %v2668, 0.25000006
    %v2793 = vsub.f32 %v2669, 0.25000006
    %v2794 = vmul.f32 %v2790, %v2602
    %v2795 = vmul.f32 %v2791, %v2603
    %v2796 = vmul.f32 %v2792, %v2604
    %v2797 = vmul.f32 %v2793, %v2605
    %v2798 = vsub.f32 1.7500001, %v2666
    %v2799 = vsub.f32 1.7500001, %v2667
    %v2800 = vsub.f32 1.7500001, %v2668
    %v2801 = vsub.f32 1.7500001, %v2669
    %v2802 = vmul.f32 %v2798, %v2622
    %v2803 = vmul.f32 %v2799, %v2623
    %v2804 = vmul.f32 %v2800, %v2624
    %v2805 = vmul.f32 %v2801, %v2625
    %v2806 = vadd.f32 %v2794, %v2802
    %v2807 = vadd.f32 %v2795, %v2803
    %v2808 = vadd.f32 %v2796, %v2804
    %v2809 = vadd.f32 %v2797, %v2805
    %v2810 = vsub.f32 %v2666, 0.75
    %v2811 = vsub.f32 %v2667, 0.75
    %v2812 = vsub.f32 %v2668, 0.75
    %v2813 = vsub.f32 %v2669, 0.75
    %v2814 = vmul.f32 %v2810, %v2622
    %v2815 = vmul.f32 %v2811, %v2623
    %v2816 = vmul.f32 %v2812, %v2624
    %v2817 = vmul.f32 %v2813, %v2625
    %v2818 = vsub.f32 2.25, %v2666
    %v2819 = vsub.f32 2.25, %v2667
    %v2820 = vsub.f32 2.25, %v2668
    %v2821 = vsub.f32 2.25, %v2669
    %v2822 = vmul.f32 %v2818, %v2642
    %v2823 = vmul.f32 %v2819, %v2643
    %v2824 = vmul.f32 %v2820, %v2644
    %v2825 = vmul.f32 %v2821, %v2645
    %v2826 = vadd.f32 %v2814, %v2822
    %v2827 = vadd.f32 %v2815, %v2823
    %v2828 = vadd.f32 %v2816, %v2824
    %v2829 = vadd.f32 %v2817, %v2825
    %v2830 = vsub.f32 %v2666, 1.25
    %v2831 = vsub.f32 %v2667, 1.25
    %v2832 = vsub.f32 %v2668, 1.25
    %v2833 = vsub.f32 %v2669, 1.25
    %v2834 = vmul.f32 %v2830, %v2642
    %v2835 = vmul.f32 %v2831, %v2643
    %v2836 = vmul.f32 %v2832, %v2644
    %v2837 = vmul.f32 %v2833, %v2645
    %v2838 = vsub.f32 2.75, %v2666
    %v2839 = vsub.f32 2.75, %v2667
    %v2840 = vsub.f32 2.75, %v2668
    %v2841 = vsub.f32 2.75, %v2669
    %v2842 = vmul.f32 %v2838, %v2662
    %v2843 = vmul.f32 %v2839, %v2663
    %v2844 = vmul.f32 %v2840, %v2664
    %v2845 = vmul.f32 %v2841, %v2665
    %v2846 = vadd.f32 %v2834, %v2842
    %v2847 = vadd.f32 %v2835, %v2843
    %v2848 = vadd.f32 %v2836, %v2844
    %v2849 = vadd.f32 %v2837, %v2845
    %v2850 = vmul.f32 %v2185, 0.8333333
    %v2851 = vmul.f32 %v2187, 0.8333333
    %v2852 = vmul.f32 %v2190, 0.8333333
    %v2853 = vmul.f32 %v2192, 0.8333333
    %v2854 = vsub.f32 %v2850, -1.8333334
    %v2855 = vsub.f32 %v2851, -1.8333334
    %v2856 = vsub.f32 %v2852, -1.8333334
    %v2857 = vsub.f32 %v2853, -1.8333334
    %v2858 = vmul.f32 %v2854, %v2686
    %v2859 = vmul.f32 %v2855, %v2687
    %v2860 = vmul.f32 %v2856, %v2688
    %v2861 = vmul.f32 %v2857, %v2689
    %v2862 = vsub.f32 -0.5, %v2850
    %v2863 = vsub.f32 -0.5, %v2851
    %v2864 = vsub.f32 -0.5, %v2852
    %v2865 = vsub.f32 -0.5, %v2853
    %v2866 = vmul.f32 %v2862, %v2706
    %v2867 = vmul.f32 %v2863, %v2707
    %v2868 = vmul.f32 %v2864, %v2708
    %v2869 = vmul.f32 %v2865, %v2709
    %v2870 = vadd.f32 %v2858, %v2866
    %v2871 = vadd.f32 %v2859, %v2867
    %v2872 = vadd.f32 %v2860, %v2868
    %v2873 = vadd.f32 %v2861, %v2869
    %v2874 = vsub.f32 %v2850, -1.4999999
    %v2875 = vsub.f32 %v2851, -1.4999999
    %v2876 = vsub.f32 %v2852, -1.4999999
    %v2877 = vsub.f32 %v2853, -1.4999999
    %v2878 = vmul.f32 %v2874, %v2706
    %v2879 = vmul.f32 %v2875, %v2707
    %v2880 = vmul.f32 %v2876, %v2708
    %v2881 = vmul.f32 %v2877, %v2709
    %v2882 = vsub.f32 -0.16666666, %v2850
    %v2883 = vsub.f32 -0.16666666, %v2851
    %v2884 = vsub.f32 -0.16666666, %v2852
    %v2885 = vsub.f32 -0.16666666, %v2853
    %v2886 = vmul.f32 %v2882, %v2726
    %v2887 = vmul.f32 %v2883, %v2727
    %v2888 = vmul.f32 %v2884, %v2728
    %v2889 = vmul.f32 %v2885, %v2729
    %v2890 = vadd.f32 %v2878, %v2886
    %v2891 = vadd.f32 %v2879, %v2887
    %v2892 = vadd.f32 %v2880, %v2888
    %v2893 = vadd.f32 %v2881, %v2889
    %v2894 = vsub.f32 %v2850, -1.1666666
    %v2895 = vsub.f32 %v2851, -1.1666666
    %v2896 = vsub.f32 %v2852, -1.1666666
    %v2897 = vsub.f32 %v2853, -1.1666666
    %v2898 = vmul.f32 %v2894, %v2726
    %v2899 = vmul.f32 %v2895, %v2727
    %v2900 = vmul.f32 %v2896, %v2728
    %v2901 = vmul.f32 %v2897, %v2729
    %v2902 = vsub.f32 0.1666667, %v2850
    %v2903 = vsub.f32 0.1666667, %v2851
    %v2904 = vsub.f32 0.1666667, %v2852
    %v2905 = vsub.f32 0.1666667, %v2853
    %v2906 = vmul.f32 %v2902, %v2746
    %v2907 = vmul.f32 %v2903, %v2747
    %v2908 = vmul.f32 %v2904, %v2748
    %v2909 = vmul.f32 %v2905, %v2749
    %v2910 = vadd.f32 %v2898, %v2906
    %v2911 = vadd.f32 %v2899, %v2907
    %v2912 = vadd.f32 %v2900, %v2908
    %v2913 = vadd.f32 %v2901, %v2909
    %v2914 = vsub.f32 %v2850, -0.8333333
    %v2915 = vsub.f32 %v2851, -0.8333333
    %v2916 = vsub.f32 %v2852, -0.8333333
    %v2917 = vsub.f32 %v2853, -0.8333333
    %v2918 = vmul.f32 %v2914, %v2746
    %v2919 = vmul.f32 %v2915, %v2747
    %v2920 = vmul.f32 %v2916, %v2748
    %v2921 = vmul.f32 %v2917, %v2749
    %v2922 = vsub.f32 0.5, %v2850
    %v2923 = vsub.f32 0.5, %v2851
    %v2924 = vsub.f32 0.5, %v2852
    %v2925 = vsub.f32 0.5, %v2853
    %v2926 = vmul.f32 %v2922, %v2766
    %v2927 = vmul.f32 %v2923, %v2767
    %v2928 = vmul.f32 %v2924, %v2768
    %v2929 = vmul.f32 %v2925, %v2769
    %v2930 = vadd.f32 %v2918, %v2926
    %v2931 = vadd.f32 %v2919, %v2927
    %v2932 = vadd.f32 %v2920, %v2928
    %v2933 = vadd.f32 %v2921, %v2929
    %v2934 = vsub.f32 %v2850, -0.5
    %v2935 = vsub.f32 %v2851, -0.5
    %v2936 = vsub.f32 %v2852, -0.5
    %v2937 = vsub.f32 %v2853, -0.5
    %v2938 = vmul.f32 %v2934, %v2766
    %v2939 = vmul.f32 %v2935, %v2767
    %v2940 = vmul.f32 %v2936, %v2768
    %v2941 = vmul.f32 %v2937, %v2769
    %v2942 = vsub.f32 0.8333333, %v2850
    %v2943 = vsub.f32 0.8333333, %v2851
    %v2944 = vsub.f32 0.8333333, %v2852
    %v2945 = vsub.f32 0.8333333, %v2853
    %v2946 = vmul.f32 %v2942, %v2786
    %v2947 = vmul.f32 %v2943, %v2787
    %v2948 = vmul.f32 %v2944, %v2788
    %v2949 = vmul.f32 %v2945, %v2789
    %v2950 = vadd.f32 %v2938, %v2946
    %v2951 = vadd.f32 %v2939, %v2947
    %v2952 = vadd.f32 %v2940, %v2948
    %v2953 = vadd.f32 %v2941, %v2949
    %v2954 = vsub.f32 %v2850, -0.16666666
    %v2955 = vsub.f32 %v2851, -0.16666666
    %v2956 = vsub.f32 %v2852, -0.16666666
    %v2957 = vsub.f32 %v2853, -0.16666666
    %v2958 = vmul.f32 %v2954, %v2786
    %v2959 = vmul.f32 %v2955, %v2787
    %v2960 = vmul.f32 %v2956, %v2788
    %v2961 = vmul.f32 %v2957, %v2789
    %v2962 = vsub.f32 1.1666667, %v2850
    %v2963 = vsub.f32 1.1666667, %v2851
    %v2964 = vsub.f32 1.1666667, %v2852
    %v2965 = vsub.f32 1.1666667, %v2853
    %v2966 = vmul.f32 %v2962, %v2806
    %v2967 = vmul.f32 %v2963, %v2807
    %v2968 = vmul.f32 %v2964, %v2808
    %v2969 = vmul.f32 %v2965, %v2809
    %v2970 = vadd.f32 %v2958, %v2966
    %v2971 = vadd.f32 %v2959, %v2967
    %v2972 = vadd.f32 %v2960, %v2968
    %v2973 = vadd.f32 %v2961, %v2969
    %v2974 = vsub.f32 %v2850, 0.1666667
    %v2975 = vsub.f32 %v2851, 0.1666667
    %v2976 = vsub.f32 %v2852, 0.1666667
    %v2977 = vsub.f32 %v2853, 0.1666667
    %v2978 = vmul.f32 %v2974, %v2806
    %v2979 = vmul.f32 %v2975, %v2807
    %v2980 = vmul.f32 %v2976, %v2808
    %v2981 = vmul.f32 %v2977, %v2809
    %v2982 = vsub.f32 1.4999999, %v2850
    %v2983 = vsub.f32 1.4999999, %v2851
    %v2984 = vsub.f32 1.4999999, %v2852
    %v2985 = vsub.f32 1.4999999, %v2853
    %v2986 = vmul.f32 %v2982, %v2826
    %v2987 = vmul.f32 %v2983, %v2827
    %v2988 = vmul.f32 %v2984, %v2828
    %v2989 = vmul.f32 %v2985, %v2829
    %v2990 = vadd.f32 %v2978, %v2986
    %v2991 = vadd.f32 %v2979, %v2987
    %v2992 = vadd.f32 %v2980, %v2988
    %v2993 = vadd.f32 %v2981, %v2989
    %v2994 = vsub.f32 %v2850, 0.5
    %v2995 = vsub.f32 %v2851, 0.5
    %v2996 = vsub.f32 %v2852, 0.5
    %v2997 = vsub.f32 %v2853, 0.5
    %v2998 = vmul.f32 %v2994, %v2826
    %v2999 = vmul.f32 %v2995, %v2827
    %v3000 = vmul.f32 %v2996, %v2828
    %v3001 = vmul.f32 %v2997, %v2829
    %v3002 = vsub.f32 1.8333334, %v2850
    %v3003 = vsub.f32 1.8333334, %v2851
    %v3004 = vsub.f32 1.8333334, %v2852
    %v3005 = vsub.f32 1.8333334, %v2853
    %v3006 = vmul.f32 %v3002, %v2846
    %v3007 = vmul.f32 %v3003, %v2847
    %v3008 = vmul.f32 %v3004, %v2848
    %v3009 = vmul.f32 %v3005, %v2849
    %v3010 = vadd.f32 %v2998, %v3006
    %v3011 = vadd.f32 %v2999, %v3007
    %v3012 = vadd.f32 %v3000, %v3008
    %v3013 = vadd.f32 %v3001, %v3009
    %v3014 = vpack.c.bf16 %v2271, %v2270
    %v3015 = vpack.c.bf16 %v2273, %v2272
    %v3016 = vpack.c.bf16 %v2871, %v2870
    %v3017 = vpack.c.bf16 %v2873, %v2872
    %v3018 = vpack.c.bf16 %v2891, %v2890
    %v3019 = vpack.c.bf16 %v2893, %v2892
    %v3020 = vpack.c.bf16 %v2911, %v2910
    %v3021 = vpack.c.bf16 %v2913, %v2912
    %v3022 = vpack.c.bf16 %v2931, %v2930
    %v3023 = vpack.c.bf16 %v2933, %v2932
    %v3024 = vpack.c.bf16 %v2951, %v2950
    %v3025 = vpack.c.bf16 %v2953, %v2952
    %v3026 = vpack.c.bf16 %v2971, %v2970
    %v3027 = vpack.c.bf16 %v2973, %v2972
    %v3028 = vpack.c.bf16 %v2991, %v2990
    %v3029 = vpack.c.bf16 %v2993, %v2992
    %v3030 = vpack.c.bf16 %v3011, %v3010
    %v3031 = vpack.c.bf16 %v3013, %v3012
    %v3032 = vld [vmem:[#allocation7] sm:$0xff]
    %v3033 = vld [vmem:[#allocation7 + $0x8] sm:$0xf]
    %v3034 = vld [vmem:[#allocation7 + $0xc] sm:$0xff]
    %v3035 = vld [vmem:[#allocation7 + $0x14] sm:$0xf]
    %v3036 = vld [vmem:[#allocation7 + $0x18] sm:$0xff]
    %v3037 = vld [vmem:[#allocation7 + $0x20] sm:$0xf]
    %v3038 = vld [vmem:[#allocation7 + $0x24] sm:$0xff]
    %v3039 = vld [vmem:[#allocation7 + $0x2c] sm:$0xf]
    %v3040 = vld [vmem:[#allocation7 + $0x30] sm:$0xff]
    %v3041 = vld [vmem:[#allocation7 + $0x38] sm:$0xf]
    %v3042 = vld [vmem:[#allocation7 + $0x3c] sm:$0xff]
    %v3043 = vld [vmem:[#allocation7 + $0x44] sm:$0xf]
    %v3044 = vld [vmem:[#allocation7 + $0x48] sm:$0xff]
    %v3045 = vld [vmem:[#allocation7 + $0x50] sm:$0xf]
    %v3046 = vld [vmem:[#allocation7 + $0x54] sm:$0xff]
    %v3047 = vld [vmem:[#allocation7 + $0x5c] sm:$0xf]
    %v3064 = vunpack.c.l.b16 %v3032
    %v3065 = vunpack.c.h.b16 %v3032
    %v3066 = vunpack.c.l.b16 %v3033
    %v3067 = vunpack.c.l.b16 %v3034
    %v3068 = vunpack.c.h.b16 %v3034
    %v3069 = vunpack.c.l.b16 %v3035
    %v3070 = vunpack.c.l.b16 %v3036
    %v3071 = vunpack.c.h.b16 %v3036
    %v3072 = vunpack.c.l.b16 %v3037
    %v3073 = vunpack.c.l.b16 %v3038
    %v3074 = vunpack.c.h.b16 %v3038
    %v3075 = vunpack.c.l.b16 %v3039
    %v3076 = vunpack.c.l.b16 %v3040
    %v3077 = vunpack.c.h.b16 %v3040
    %v3078 = vunpack.c.l.b16 %v3041
    %v3079 = vunpack.c.l.b16 %v3042
    %v3080 = vunpack.c.h.b16 %v3042
    %v3081 = vunpack.c.l.b16 %v3043
    %v3082 = vunpack.c.l.b16 %v3044
    %v3083 = vunpack.c.h.b16 %v3044
    %v3084 = vunpack.c.l.b16 %v3045
    %v3085 = vunpack.c.l.b16 %v3046
    %v3086 = vunpack.c.h.b16 %v3046
    %v3087 = vunpack.c.l.b16 %v3047
    %v3088 = vpack.c.b16 %v3067, %v3064
    %v3089 = vpack.c.b16 %v3068, %v3065
    %v3090 = vpack.c.b16 %v3069, %v3066
    %v3091 = vpack.c.b16 %v3073, %v3070
    %v3092 = vpack.c.b16 %v3074, %v3071
    %v3093 = vpack.c.b16 %v3075, %v3072
    %v3094 = vpack.c.b16 %v3079, %v3076
    %v3095 = vpack.c.b16 %v3080, %v3077
    %v3096 = vpack.c.b16 %v3081, %v3078
    %v3097 = vpack.c.b16 %v3085, %v3082
    %v3098 = vpack.c.b16 %v3086, %v3083
    %v3099 = vpack.c.b16 %v3087, %v3084
    %vm3108 = vcmask 261120
    %v3110 = vsel %vm3108, %v3090, 0
    %v3113 = vsel %vm3108, %v3093, 0
    %v3116 = vsel %vm3108, %v3096, 0
    %v3119 = vsel %vm3108, %v3099, 0
    %3121 = vmatpush.bf16.msra.mxu0 %v3021
    %3122 = vmatpush.bf16.msra.mxu0 %v3020
    %3123 = vmatpush.bf16.msra.mxu0 %v3019
    %3124 = vmatpush.bf16.msra.mxu0 %v3018
    %3125 = vmatpush.bf16.msra.mxu0 %v3017
    %3126 = vmatpush.bf16.msra.mxu0 %v3016
    %3127 = vmatpush.bf16.msra.mxu0 %v3015
    %3128 = vmatpush.bf16.msra.mxu0 %v3014
    %3129 = vmatmul.bf16.gmra.mxu0 %v3088
    %v3130 = vpop.f32.mrf.mxu0
    %v3131 = vadd.f32 0.0, %v3130
    %v3132 = vpop.f32.mrf.mxu0
    %v3133 = vadd.f32 0.0, %v3132
    %3134 = vmatmul.bf16.gmra.mxu0 %v3091
    %v3135 = vpop.f32.mrf.mxu0
    %v3136 = vadd.f32 0.0, %v3135
    %v3137 = vpop.f32.mrf.mxu0
    %v3138 = vadd.f32 0.0, %v3137
    %3139 = vmatmul.bf16.gmra.mxu0 %v3094
    %v3140 = vpop.f32.mrf.mxu0
    %v3141 = vadd.f32 0.0, %v3140
    %v3142 = vpop.f32.mrf.mxu0
    %v3143 = vadd.f32 0.0, %v3142
    %3144 = vmatmul.bf16.gmra.mxu0 %v3097
    %v3145 = vpop.f32.mrf.mxu0
    %v3146 = vadd.f32 0.0, %v3145
    %v3147 = vpop.f32.mrf.mxu0
    %v3148 = vadd.f32 0.0, %v3147
    %3149 = vdwg.mxu0
    %3150 = vmatpush.bf16.msra.mxu0 %v3029
    %3151 = vmatpush.bf16.msra.mxu0 %v3028
    %3152 = vmatpush.bf16.msra.mxu0 %v3027
    %3153 = vmatpush.bf16.msra.mxu0 %v3026
    %3154 = vmatpush.bf16.msra.mxu0 %v3025
    %3155 = vmatpush.bf16.msra.mxu0 %v3024
    %3156 = vmatpush.bf16.msra.mxu0 %v3023
    %3157 = vmatpush.bf16.msra.mxu0 %v3022
    %3158 = vmatmul.bf16.gmra.mxu0 %v3089
    %v3159 = vpop.f32.mrf.mxu0
    %v3160 = vadd.f32 %v3131, %v3159
    %v3161 = vpop.f32.mrf.mxu0
    %v3162 = vadd.f32 %v3133, %v3161
    %3163 = vmatmul.bf16.gmra.mxu0 %v3092
    %v3164 = vpop.f32.mrf.mxu0
    %v3165 = vadd.f32 %v3136, %v3164
    %v3166 = vpop.f32.mrf.mxu0
    %v3167 = vadd.f32 %v3138, %v3166
    %3168 = vmatmul.bf16.gmra.mxu0 %v3095
    %v3169 = vpop.f32.mrf.mxu0
    %v3170 = vadd.f32 %v3141, %v3169
    %v3171 = vpop.f32.mrf.mxu0
    %v3172 = vadd.f32 %v3143, %v3171
    %3173 = vmatmul.bf16.gmra.mxu0 %v3098
    %v3174 = vpop.f32.mrf.mxu0
    %v3175 = vadd.f32 %v3146, %v3174
    %v3176 = vpop.f32.mrf.mxu0
    %v3177 = vadd.f32 %v3148, %v3176
    %3178 = vdwg.mxu0
    %3179 = vmatpush.bf16.msra.mxu0 0
    %3180 = vmatpush.bf16.msra.mxu0 0
    %3181 = vmatpush.bf16.msra.mxu0 0
    %3182 = vmatpush.bf16.msra.mxu0 0
    %3183 = vmatpush.bf16.msra.mxu0 0
    %3184 = vmatpush.bf16.msra.mxu0 0
    %3185 = vmatpush.bf16.msra.mxu0 %v3031
    %3186 = vmatpush.bf16.msra.mxu0 %v3030
    %3187 = vmatmul.bf16.gmra.mxu0 %v3110
    %v3188 = vpop.f32.mrf.mxu0
    %v3189 = vadd.f32 %v3160, %v3188
    %v3190 = vpop.f32.mrf.mxu0
    %v3191 = vadd.f32 %v3162, %v3190
    %3192 = vmatmul.bf16.gmra.mxu0 %v3113
    %v3193 = vpop.f32.mrf.mxu0
    %v3194 = vadd.f32 %v3165, %v3193
    %v3195 = vpop.f32.mrf.mxu0
    %v3196 = vadd.f32 %v3167, %v3195
    %3197 = vmatmul.bf16.gmra.mxu0 %v3116
    %v3198 = vpop.f32.mrf.mxu0
    %v3199 = vadd.f32 %v3170, %v3198
    %v3200 = vpop.f32.mrf.mxu0
    %v3201 = vadd.f32 %v3172, %v3200
    %3202 = vmatmul.bf16.gmra.mxu0 %v3119
    %v3203 = vpop.f32.mrf.mxu0
    %v3204 = vadd.f32 %v3175, %v3203
    %v3205 = vpop.f32.mrf.mxu0
    %v3206 = vadd.f32 %v3177, %v3205
    %3207 = vdwg.mxu0
    %v3208 = vxor.u32 %v3189, 2147483648
    %v3209 = vxor.u32 %v3191, 2147483648
    %v3210 = vxor.u32 %v3194, 2147483648
    %v3211 = vxor.u32 %v3196, 2147483648
    %v3212 = vxor.u32 %v3199, 2147483648
    %v3213 = vxor.u32 %v3201, 2147483648
    %v3214 = vxor.u32 %v3204, 2147483648
    %v3215 = vxor.u32 %v3206, 2147483648
    %v3216 = vmul.f32 %v3208, 1.442695
    %v3217 = vpow.pop %v3216
    %v3218 = vmul.f32 %v3209, 1.442695
    %v3219 = vpow.pop %v3218
    %v3220 = vmul.f32 %v3210, 1.442695
    %v3221 = vpow.pop %v3220
    %v3222 = vmul.f32 %v3211, 1.442695
    %v3223 = vpow.pop %v3222
    %v3224 = vmul.f32 %v3212, 1.442695
    %v3225 = vpow.pop %v3224
    %v3226 = vmul.f32 %v3213, 1.442695
    %v3227 = vpow.pop %v3226
    %v3228 = vmul.f32 %v3214, 1.442695
    %v3229 = vpow.pop %v3228
    %v3230 = vmul.f32 %v3215, 1.442695
    %v3231 = vpow.pop %v3230
    %v3232 = vadd.f32 %v3217, 1.0
    %v3233 = vadd.f32 %v3219, 1.0
    %v3234 = vadd.f32 %v3221, 1.0
    %v3235 = vadd.f32 %v3223, 1.0
    %v3236 = vadd.f32 %v3225, 1.0
    %v3237 = vadd.f32 %v3227, 1.0
    %v3238 = vadd.f32 %v3229, 1.0
    %v3239 = vadd.f32 %v3231, 1.0
    %v3240 = vrcp.pop %v3232
    %v3241 = vmul.f32 %v3232, %v3240
    %v3242 = vsub.f32 1.0, %v3241
    %v3243 = vmul.f32 %v3240, %v3242
    %v3244 = vadd.f32 %v3240, %v3243
    %vm3245 = vweird.f32 %v3232
    %vm3246 = vweird.f32 %v3240
    %vm3247 = vmor %vm3245, %vm3246
    %v3248 = vsel %vm3247, %v3240, %v3244
    %v3249 = vand.u32 2147483647, %v3232
    %vm3250 = vcmp.eq.f32.partialorder %v3249, 8.507059e+37
    %v3251 = vand.u32 %v3232, 2147483648
    %v3252 = vor.u32 1.1754944e-38, %v3251
    %v3253 = vsel %vm3250, %v3252, %v3248
    %v3254 = vmul.f32 1.0, %v3253
    %v3255 = vrcp.pop %v3233
    %v3256 = vmul.f32 %v3233, %v3255
    %v3257 = vsub.f32 1.0, %v3256
    %v3258 = vmul.f32 %v3255, %v3257
    %v3259 = vadd.f32 %v3255, %v3258
    %vm3260 = vweird.f32 %v3233
    %vm3261 = vweird.f32 %v3255
    %vm3262 = vmor %vm3260, %vm3261
    %v3263 = vsel %vm3262, %v3255, %v3259
    %v3264 = vand.u32 2147483647, %v3233
    %vm3265 = vcmp.eq.f32.partialorder %v3264, 8.507059e+37
    %v3266 = vand.u32 %v3233, 2147483648
    %v3267 = vor.u32 1.1754944e-38, %v3266
    %v3268 = vsel %vm3265, %v3267, %v3263
    %v3269 = vmul.f32 1.0, %v3268
    %v3270 = vrcp.pop %v3234
    %v3271 = vmul.f32 %v3234, %v3270
    %v3272 = vsub.f32 1.0, %v3271
    %v3273 = vmul.f32 %v3270, %v3272
    %v3274 = vadd.f32 %v3270, %v3273
    %vm3275 = vweird.f32 %v3234
    %vm3276 = vweird.f32 %v3270
    %vm3277 = vmor %vm3275, %vm3276
    %v3278 = vsel %vm3277, %v3270, %v3274
    %v3279 = vand.u32 2147483647, %v3234
    %vm3280 = vcmp.eq.f32.partialorder %v3279, 8.507059e+37
    %v3281 = vand.u32 %v3234, 2147483648
    %v3282 = vor.u32 1.1754944e-38, %v3281
    %v3283 = vsel %vm3280, %v3282, %v3278
    %v3284 = vmul.f32 1.0, %v3283
    %v3285 = vrcp.pop %v3235
    %v3286 = vmul.f32 %v3235, %v3285
    %v3287 = vsub.f32 1.0, %v3286
    %v3288 = vmul.f32 %v3285, %v3287
    %v3289 = vadd.f32 %v3285, %v3288
    %vm3290 = vweird.f32 %v3235
    %vm3291 = vweird.f32 %v3285
    %vm3292 = vmor %vm3290, %vm3291
    %v3293 = vsel %vm3292, %v3285, %v3289
    %v3294 = vand.u32 2147483647, %v3235
    %vm3295 = vcmp.eq.f32.partialorder %v3294, 8.507059e+37
    %v3296 = vand.u32 %v3235, 2147483648
    %v3297 = vor.u32 1.1754944e-38, %v3296
    %v3298 = vsel %vm3295, %v3297, %v3293
    %v3299 = vmul.f32 1.0, %v3298
    %v3300 = vrcp.pop %v3236
    %v3301 = vmul.f32 %v3236, %v3300
    %v3302 = vsub.f32 1.0, %v3301
    %v3303 = vmul.f32 %v3300, %v3302
    %v3304 = vadd.f32 %v3300, %v3303
    %vm3305 = vweird.f32 %v3236
    %vm3306 = vweird.f32 %v3300
    %vm3307 = vmor %vm3305, %vm3306
    %v3308 = vsel %vm3307, %v3300, %v3304
    %v3309 = vand.u32 2147483647, %v3236
    %vm3310 = vcmp.eq.f32.partialorder %v3309, 8.507059e+37
    %v3311 = vand.u32 %v3236, 2147483648
    %v3312 = vor.u32 1.1754944e-38, %v3311
    %v3313 = vsel %vm3310, %v3312, %v3308
    %v3314 = vmul.f32 1.0, %v3313
    %v3315 = vrcp.pop %v3237
    %v3316 = vmul.f32 %v3237, %v3315
    %v3317 = vsub.f32 1.0, %v3316
    %v3318 = vmul.f32 %v3315, %v3317
    %v3319 = vadd.f32 %v3315, %v3318
    %vm3320 = vweird.f32 %v3237
    %vm3321 = vweird.f32 %v3315
    %vm3322 = vmor %vm3320, %vm3321
    %v3323 = vsel %vm3322, %v3315, %v3319
    %v3324 = vand.u32 2147483647, %v3237
    %vm3325 = vcmp.eq.f32.partialorder %v3324, 8.507059e+37
    %v3326 = vand.u32 %v3237, 2147483648
    %v3327 = vor.u32 1.1754944e-38, %v3326
    %v3328 = vsel %vm3325, %v3327, %v3323
    %v3329 = vmul.f32 1.0, %v3328
    %v3330 = vrcp.pop %v3238
    %v3331 = vmul.f32 %v3238, %v3330
    %v3332 = vsub.f32 1.0, %v3331
    %v3333 = vmul.f32 %v3330, %v3332
    %v3334 = vadd.f32 %v3330, %v3333
    %vm3335 = vweird.f32 %v3238
    %vm3336 = vweird.f32 %v3330
    %vm3337 = vmor %vm3335, %vm3336
    %v3338 = vsel %vm3337, %v3330, %v3334
    %v3339 = vand.u32 2147483647, %v3238
    %vm3340 = vcmp.eq.f32.partialorder %v3339, 8.507059e+37
    %v3341 = vand.u32 %v3238, 2147483648
    %v3342 = vor.u32 1.1754944e-38, %v3341
    %v3343 = vsel %vm3340, %v3342, %v3338
    %v3344 = vmul.f32 1.0, %v3343
    %v3345 = vrcp.pop %v3239
    %v3346 = vmul.f32 %v3239, %v3345
    %v3347 = vsub.f32 1.0, %v3346
    %v3348 = vmul.f32 %v3345, %v3347
    %v3349 = vadd.f32 %v3345, %v3348
    %vm3350 = vweird.f32 %v3239
    %vm3351 = vweird.f32 %v3345
    %vm3352 = vmor %vm3350, %vm3351
    %v3353 = vsel %vm3352, %v3345, %v3349
    %v3354 = vand.u32 2147483647, %v3239
    %vm3355 = vcmp.eq.f32.partialorder %v3354, 8.507059e+37
    %v3356 = vand.u32 %v3239, 2147483648
    %v3357 = vor.u32 1.1754944e-38, %v3356
    %v3358 = vsel %vm3355, %v3357, %v3353
    %v3359 = vmul.f32 1.0, %v3358
    %v3360 = vmul.f32 %v3189, %v3254
    %v3361 = vmul.f32 %v3191, %v3269
    %v3362 = vmul.f32 %v3194, %v3284
    %v3363 = vmul.f32 %v3196, %v3299
    %v3364 = vmul.f32 %v3199, %v3314
    %v3365 = vmul.f32 %v3201, %v3329
    %v3366 = vmul.f32 %v3204, %v3344
    %v3367 = vmul.f32 %v3206, %v3359
    %vm3368 = vcmp.ge.f32.partialorder %v3189, -2.2
    %vm3369 = vcmp.ge.f32.partialorder %v3191, -2.2
    %vm3370 = vcmp.ge.f32.partialorder %v3194, -2.2
    %vm3371 = vcmp.ge.f32.partialorder %v3196, -2.2
    %vm3372 = vcmp.ge.f32.partialorder %v3199, -2.2
    %vm3373 = vcmp.ge.f32.partialorder %v3201, -2.2
    %vm3374 = vcmp.ge.f32.partialorder %v3204, -2.2
    %vm3375 = vcmp.ge.f32.partialorder %v3206, -2.2
    %v3376 = vsel %vm3368, 1, 0
    %v3377 = vsel %vm3369, 1, 0
    %v3378 = vsel %vm3370, 1, 0
    %v3379 = vsel %vm3371, 1, 0
    %v3380 = vsel %vm3372, 1, 0
    %v3381 = vsel %vm3373, 1, 0
    %v3382 = vsel %vm3374, 1, 0
    %v3383 = vsel %vm3375, 1, 0
    %v3384 = vcvt.s32.f32 %v3376
    %v3385 = vcvt.s32.f32 %v3377
    %v3386 = vcvt.s32.f32 %v3378
    %v3387 = vcvt.s32.f32 %v3379
    %v3388 = vcvt.s32.f32 %v3380
    %v3389 = vcvt.s32.f32 %v3381
    %v3390 = vcvt.s32.f32 %v3382
    %v3391 = vcvt.s32.f32 %v3383
    %vm3392 = vcmp.ge.f32.partialorder %v3189, -1.8
    %vm3393 = vcmp.ge.f32.partialorder %v3191, -1.8
    %vm3394 = vcmp.ge.f32.partialorder %v3194, -1.8
    %vm3395 = vcmp.ge.f32.partialorder %v3196, -1.8
    %vm3396 = vcmp.ge.f32.partialorder %v3199, -1.8
    %vm3397 = vcmp.ge.f32.partialorder %v3201, -1.8
    %vm3398 = vcmp.ge.f32.partialorder %v3204, -1.8
    %vm3399 = vcmp.ge.f32.partialorder %v3206, -1.8
    %v3400 = vsel %vm3392, 1, 0
    %v3401 = vsel %vm3393, 1, 0
    %v3402 = vsel %vm3394, 1, 0
    %v3403 = vsel %vm3395, 1, 0
    %v3404 = vsel %vm3396, 1, 0
    %v3405 = vsel %vm3397, 1, 0
    %v3406 = vsel %vm3398, 1, 0
    %v3407 = vsel %vm3399, 1, 0
    %v3408 = vcvt.s32.f32 %v3400
    %v3409 = vcvt.s32.f32 %v3401
    %v3410 = vcvt.s32.f32 %v3402
    %v3411 = vcvt.s32.f32 %v3403
    %v3412 = vcvt.s32.f32 %v3404
    %v3413 = vcvt.s32.f32 %v3405
    %v3414 = vcvt.s32.f32 %v3406
    %v3415 = vcvt.s32.f32 %v3407
    %vm3416 = vcmp.ge.f32.partialorder %v3189, -1.4
    %vm3417 = vcmp.ge.f32.partialorder %v3191, -1.4
    %vm3418 = vcmp.ge.f32.partialorder %v3194, -1.4
    %vm3419 = vcmp.ge.f32.partialorder %v3196, -1.4
    %vm3420 = vcmp.ge.f32.partialorder %v3199, -1.4
    %vm3421 = vcmp.ge.f32.partialorder %v3201, -1.4
    %vm3422 = vcmp.ge.f32.partialorder %v3204, -1.4
    %vm3423 = vcmp.ge.f32.partialorder %v3206, -1.4
    %v3424 = vsel %vm3416, 1, 0
    %v3425 = vsel %vm3417, 1, 0
    %v3426 = vsel %vm3418, 1, 0
    %v3427 = vsel %vm3419, 1, 0
    %v3428 = vsel %vm3420, 1, 0
    %v3429 = vsel %vm3421, 1, 0
    %v3430 = vsel %vm3422, 1, 0
    %v3431 = vsel %vm3423, 1, 0
    %v3432 = vcvt.s32.f32 %v3424
    %v3433 = vcvt.s32.f32 %v3425
    %v3434 = vcvt.s32.f32 %v3426
    %v3435 = vcvt.s32.f32 %v3427
    %v3436 = vcvt.s32.f32 %v3428
    %v3437 = vcvt.s32.f32 %v3429
    %v3438 = vcvt.s32.f32 %v3430
    %v3439 = vcvt.s32.f32 %v3431
    %vm3440 = vcmp.ge.f32.partialorder %v3189, -1.0
    %vm3441 = vcmp.ge.f32.partialorder %v3191, -1.0
    %vm3442 = vcmp.ge.f32.partialorder %v3194, -1.0
    %vm3443 = vcmp.ge.f32.partialorder %v3196, -1.0
    %vm3444 = vcmp.ge.f32.partialorder %v3199, -1.0
    %vm3445 = vcmp.ge.f32.partialorder %v3201, -1.0
    %vm3446 = vcmp.ge.f32.partialorder %v3204, -1.0
    %vm3447 = vcmp.ge.f32.partialorder %v3206, -1.0
    %v3448 = vsel %vm3440, 1, 0
    %v3449 = vsel %vm3441, 1, 0
    %v3450 = vsel %vm3442, 1, 0
    %v3451 = vsel %vm3443, 1, 0
    %v3452 = vsel %vm3444, 1, 0
    %v3453 = vsel %vm3445, 1, 0
    %v3454 = vsel %vm3446, 1, 0
    %v3455 = vsel %vm3447, 1, 0
    %v3456 = vcvt.s32.f32 %v3448
    %v3457 = vcvt.s32.f32 %v3449
    %v3458 = vcvt.s32.f32 %v3450
    %v3459 = vcvt.s32.f32 %v3451
    %v3460 = vcvt.s32.f32 %v3452
    %v3461 = vcvt.s32.f32 %v3453
    %v3462 = vcvt.s32.f32 %v3454
    %v3463 = vcvt.s32.f32 %v3455
    %vm3464 = vcmp.ge.f32.partialorder %v3189, -0.6
    %vm3465 = vcmp.ge.f32.partialorder %v3191, -0.6
    %vm3466 = vcmp.ge.f32.partialorder %v3194, -0.6
    %vm3467 = vcmp.ge.f32.partialorder %v3196, -0.6
    %vm3468 = vcmp.ge.f32.partialorder %v3199, -0.6
    %vm3469 = vcmp.ge.f32.partialorder %v3201, -0.6
    %vm3470 = vcmp.ge.f32.partialorder %v3204, -0.6
    %vm3471 = vcmp.ge.f32.partialorder %v3206, -0.6
    %v3472 = vsel %vm3464, 1, 0
    %v3473 = vsel %vm3465, 1, 0
    %v3474 = vsel %vm3466, 1, 0
    %v3475 = vsel %vm3467, 1, 0
    %v3476 = vsel %vm3468, 1, 0
    %v3477 = vsel %vm3469, 1, 0
    %v3478 = vsel %vm3470, 1, 0
    %v3479 = vsel %vm3471, 1, 0
    %v3480 = vcvt.s32.f32 %v3472
    %v3481 = vcvt.s32.f32 %v3473
    %v3482 = vcvt.s32.f32 %v3474
    %v3483 = vcvt.s32.f32 %v3475
    %v3484 = vcvt.s32.f32 %v3476
    %v3485 = vcvt.s32.f32 %v3477
    %v3486 = vcvt.s32.f32 %v3478
    %v3487 = vcvt.s32.f32 %v3479
    %vm3488 = vcmp.ge.f32.partialorder %v3189, -0.19999999
    %vm3489 = vcmp.ge.f32.partialorder %v3191, -0.19999999
    %vm3490 = vcmp.ge.f32.partialorder %v3194, -0.19999999
    %vm3491 = vcmp.ge.f32.partialorder %v3196, -0.19999999
    %vm3492 = vcmp.ge.f32.partialorder %v3199, -0.19999999
    %vm3493 = vcmp.ge.f32.partialorder %v3201, -0.19999999
    %vm3494 = vcmp.ge.f32.partialorder %v3204, -0.19999999
    %vm3495 = vcmp.ge.f32.partialorder %v3206, -0.19999999
    %v3496 = vsel %vm3488, 1, 0
    %v3497 = vsel %vm3489, 1, 0
    %v3498 = vsel %vm3490, 1, 0
    %v3499 = vsel %vm3491, 1, 0
    %v3500 = vsel %vm3492, 1, 0
    %v3501 = vsel %vm3493, 1, 0
    %v3502 = vsel %vm3494, 1, 0
    %v3503 = vsel %vm3495, 1, 0
    %v3504 = vcvt.s32.f32 %v3496
    %v3505 = vcvt.s32.f32 %v3497
    %v3506 = vcvt.s32.f32 %v3498
    %v3507 = vcvt.s32.f32 %v3499
    %v3508 = vcvt.s32.f32 %v3500
    %v3509 = vcvt.s32.f32 %v3501
    %v3510 = vcvt.s32.f32 %v3502
    %v3511 = vcvt.s32.f32 %v3503
    %vm3512 = vcmp.ge.f32.partialorder %v3189, 0.20000005
    %vm3513 = vcmp.ge.f32.partialorder %v3191, 0.20000005
    %vm3514 = vcmp.ge.f32.partialorder %v3194, 0.20000005
    %vm3515 = vcmp.ge.f32.partialorder %v3196, 0.20000005
    %vm3516 = vcmp.ge.f32.partialorder %v3199, 0.20000005
    %vm3517 = vcmp.ge.f32.partialorder %v3201, 0.20000005
    %vm3518 = vcmp.ge.f32.partialorder %v3204, 0.20000005
    %vm3519 = vcmp.ge.f32.partialorder %v3206, 0.20000005
    %v3520 = vsel %vm3512, 1, 0
    %v3521 = vsel %vm3513, 1, 0
    %v3522 = vsel %vm3514, 1, 0
    %v3523 = vsel %vm3515, 1, 0
    %v3524 = vsel %vm3516, 1, 0
    %v3525 = vsel %vm3517, 1, 0
    %v3526 = vsel %vm3518, 1, 0
    %v3527 = vsel %vm3519, 1, 0
    %v3528 = vcvt.s32.f32 %v3520
    %v3529 = vcvt.s32.f32 %v3521
    %v3530 = vcvt.s32.f32 %v3522
    %v3531 = vcvt.s32.f32 %v3523
    %v3532 = vcvt.s32.f32 %v3524
    %v3533 = vcvt.s32.f32 %v3525
    %v3534 = vcvt.s32.f32 %v3526
    %v3535 = vcvt.s32.f32 %v3527
    %vm3536 = vcmp.ge.f32.partialorder %v3189, 0.6
    %vm3537 = vcmp.ge.f32.partialorder %v3191, 0.6
    %vm3538 = vcmp.ge.f32.partialorder %v3194, 0.6
    %vm3539 = vcmp.ge.f32.partialorder %v3196, 0.6
    %vm3540 = vcmp.ge.f32.partialorder %v3199, 0.6
    %vm3541 = vcmp.ge.f32.partialorder %v3201, 0.6
    %vm3542 = vcmp.ge.f32.partialorder %v3204, 0.6
    %vm3543 = vcmp.ge.f32.partialorder %v3206, 0.6
    %v3544 = vsel %vm3536, 1, 0
    %v3545 = vsel %vm3537, 1, 0
    %v3546 = vsel %vm3538, 1, 0
    %v3547 = vsel %vm3539, 1, 0
    %v3548 = vsel %vm3540, 1, 0
    %v3549 = vsel %vm3541, 1, 0
    %v3550 = vsel %vm3542, 1, 0
    %v3551 = vsel %vm3543, 1, 0
    %v3552 = vcvt.s32.f32 %v3544
    %v3553 = vcvt.s32.f32 %v3545
    %v3554 = vcvt.s32.f32 %v3546
    %v3555 = vcvt.s32.f32 %v3547
    %v3556 = vcvt.s32.f32 %v3548
    %v3557 = vcvt.s32.f32 %v3549
    %v3558 = vcvt.s32.f32 %v3550
    %v3559 = vcvt.s32.f32 %v3551
    %vm3560 = vcmp.ge.f32.partialorder %v3189, 1.0
    %vm3561 = vcmp.ge.f32.partialorder %v3191, 1.0
    %vm3562 = vcmp.ge.f32.partialorder %v3194, 1.0
    %vm3563 = vcmp.ge.f32.partialorder %v3196, 1.0
    %vm3564 = vcmp.ge.f32.partialorder %v3199, 1.0
    %vm3565 = vcmp.ge.f32.partialorder %v3201, 1.0
    %vm3566 = vcmp.ge.f32.partialorder %v3204, 1.0
    %vm3567 = vcmp.ge.f32.partialorder %v3206, 1.0
    %v3568 = vsel %vm3560, 1, 0
    %v3569 = vsel %vm3561, 1, 0
    %v3570 = vsel %vm3562, 1, 0
    %v3571 = vsel %vm3563, 1, 0
    %v3572 = vsel %vm3564, 1, 0
    %v3573 = vsel %vm3565, 1, 0
    %v3574 = vsel %vm3566, 1, 0
    %v3575 = vsel %vm3567, 1, 0
    %v3576 = vcvt.s32.f32 %v3568
    %v3577 = vcvt.s32.f32 %v3569
    %v3578 = vcvt.s32.f32 %v3570
    %v3579 = vcvt.s32.f32 %v3571
    %v3580 = vcvt.s32.f32 %v3572
    %v3581 = vcvt.s32.f32 %v3573
    %v3582 = vcvt.s32.f32 %v3574
    %v3583 = vcvt.s32.f32 %v3575
    %vm3584 = vcmp.ge.f32.partialorder %v3189, 1.4000001
    %vm3585 = vcmp.ge.f32.partialorder %v3191, 1.4000001
    %vm3586 = vcmp.ge.f32.partialorder %v3194, 1.4000001
    %vm3587 = vcmp.ge.f32.partialorder %v3196, 1.4000001
    %vm3588 = vcmp.ge.f32.partialorder %v3199, 1.4000001
    %vm3589 = vcmp.ge.f32.partialorder %v3201, 1.4000001
    %vm3590 = vcmp.ge.f32.partialorder %v3204, 1.4000001
    %vm3591 = vcmp.ge.f32.partialorder %v3206, 1.4000001
    %v3592 = vsel %vm3584, 1, 0
    %v3593 = vsel %vm3585, 1, 0
    %v3594 = vsel %vm3586, 1, 0
    %v3595 = vsel %vm3587, 1, 0
    %v3596 = vsel %vm3588, 1, 0
    %v3597 = vsel %vm3589, 1, 0
    %v3598 = vsel %vm3590, 1, 0
    %v3599 = vsel %vm3591, 1, 0
    %v3600 = vcvt.s32.f32 %v3592
    %v3601 = vcvt.s32.f32 %v3593
    %v3602 = vcvt.s32.f32 %v3594
    %v3603 = vcvt.s32.f32 %v3595
    %v3604 = vcvt.s32.f32 %v3596
    %v3605 = vcvt.s32.f32 %v3597
    %v3606 = vcvt.s32.f32 %v3598
    %v3607 = vcvt.s32.f32 %v3599
    %vm3608 = vcmp.ge.f32.partialorder %v3189, 1.8
    %vm3609 = vcmp.ge.f32.partialorder %v3191, 1.8
    %vm3610 = vcmp.ge.f32.partialorder %v3194, 1.8
    %vm3611 = vcmp.ge.f32.partialorder %v3196, 1.8
    %vm3612 = vcmp.ge.f32.partialorder %v3199, 1.8
    %vm3613 = vcmp.ge.f32.partialorder %v3201, 1.8
    %vm3614 = vcmp.ge.f32.partialorder %v3204, 1.8
    %vm3615 = vcmp.ge.f32.partialorder %v3206, 1.8
    %v3616 = vsel %vm3608, 1, 0
    %v3617 = vsel %vm3609, 1, 0
    %v3618 = vsel %vm3610, 1, 0
    %v3619 = vsel %vm3611, 1, 0
    %v3620 = vsel %vm3612, 1, 0
    %v3621 = vsel %vm3613, 1, 0
    %v3622 = vsel %vm3614, 1, 0
    %v3623 = vsel %vm3615, 1, 0
    %v3624 = vcvt.s32.f32 %v3616
    %v3625 = vcvt.s32.f32 %v3617
    %v3626 = vcvt.s32.f32 %v3618
    %v3627 = vcvt.s32.f32 %v3619
    %v3628 = vcvt.s32.f32 %v3620
    %v3629 = vcvt.s32.f32 %v3621
    %v3630 = vcvt.s32.f32 %v3622
    %v3631 = vcvt.s32.f32 %v3623
    %vm3632 = vcmp.ge.f32.partialorder %v3189, 2.2
    %vm3633 = vcmp.ge.f32.partialorder %v3191, 2.2
    %vm3634 = vcmp.ge.f32.partialorder %v3194, 2.2
    %vm3635 = vcmp.ge.f32.partialorder %v3196, 2.2
    %vm3636 = vcmp.ge.f32.partialorder %v3199, 2.2
    %vm3637 = vcmp.ge.f32.partialorder %v3201, 2.2
    %vm3638 = vcmp.ge.f32.partialorder %v3204, 2.2
    %vm3639 = vcmp.ge.f32.partialorder %v3206, 2.2
    %v3640 = vsel %vm3632, 1, 0
    %v3641 = vsel %vm3633, 1, 0
    %v3642 = vsel %vm3634, 1, 0
    %v3643 = vsel %vm3635, 1, 0
    %v3644 = vsel %vm3636, 1, 0
    %v3645 = vsel %vm3637, 1, 0
    %v3646 = vsel %vm3638, 1, 0
    %v3647 = vsel %vm3639, 1, 0
    %v3648 = vcvt.s32.f32 %v3640
    %v3649 = vcvt.s32.f32 %v3641
    %v3650 = vcvt.s32.f32 %v3642
    %v3651 = vcvt.s32.f32 %v3643
    %v3652 = vcvt.s32.f32 %v3644
    %v3653 = vcvt.s32.f32 %v3645
    %v3654 = vcvt.s32.f32 %v3646
    %v3655 = vcvt.s32.f32 %v3647
    %v3656 = vsub.f32 %v3384, %v3408
    %v3657 = vsub.f32 %v3385, %v3409
    %v3658 = vsub.f32 %v3386, %v3410
    %v3659 = vsub.f32 %v3387, %v3411
    %v3660 = vsub.f32 %v3388, %v3412
    %v3661 = vsub.f32 %v3389, %v3413
    %v3662 = vsub.f32 %v3390, %v3414
    %v3663 = vsub.f32 %v3391, %v3415
    %v3664 = vsub.f32 %v3408, %v3432
    %v3665 = vsub.f32 %v3409, %v3433
    %v3666 = vsub.f32 %v3410, %v3434
    %v3667 = vsub.f32 %v3411, %v3435
    %v3668 = vsub.f32 %v3412, %v3436
    %v3669 = vsub.f32 %v3413, %v3437
    %v3670 = vsub.f32 %v3414, %v3438
    %v3671 = vsub.f32 %v3415, %v3439
    %v3672 = vsub.f32 %v3432, %v3456
    %v3673 = vsub.f32 %v3433, %v3457
    %v3674 = vsub.f32 %v3434, %v3458
    %v3675 = vsub.f32 %v3435, %v3459
    %v3676 = vsub.f32 %v3436, %v3460
    %v3677 = vsub.f32 %v3437, %v3461
    %v3678 = vsub.f32 %v3438, %v3462
    %v3679 = vsub.f32 %v3439, %v3463
    %v3680 = vsub.f32 %v3456, %v3480
    %v3681 = vsub.f32 %v3457, %v3481
    %v3682 = vsub.f32 %v3458, %v3482
    %v3683 = vsub.f32 %v3459, %v3483
    %v3684 = vsub.f32 %v3460, %v3484
    %v3685 = vsub.f32 %v3461, %v3485
    %v3686 = vsub.f32 %v3462, %v3486
    %v3687 = vsub.f32 %v3463, %v3487
    %v3688 = vsub.f32 %v3480, %v3504
    %v3689 = vsub.f32 %v3481, %v3505
    %v3690 = vsub.f32 %v3482, %v3506
    %v3691 = vsub.f32 %v3483, %v3507
    %v3692 = vsub.f32 %v3484, %v3508
    %v3693 = vsub.f32 %v3485, %v3509
    %v3694 = vsub.f32 %v3486, %v3510
    %v3695 = vsub.f32 %v3487, %v3511
    %v3696 = vsub.f32 %v3504, %v3528
    %v3697 = vsub.f32 %v3505, %v3529
    %v3698 = vsub.f32 %v3506, %v3530
    %v3699 = vsub.f32 %v3507, %v3531
    %v3700 = vsub.f32 %v3508, %v3532
    %v3701 = vsub.f32 %v3509, %v3533
    %v3702 = vsub.f32 %v3510, %v3534
    %v3703 = vsub.f32 %v3511, %v3535
    %v3704 = vsub.f32 %v3528, %v3552
    %v3705 = vsub.f32 %v3529, %v3553
    %v3706 = vsub.f32 %v3530, %v3554
    %v3707 = vsub.f32 %v3531, %v3555
    %v3708 = vsub.f32 %v3532, %v3556
    %v3709 = vsub.f32 %v3533, %v3557
    %v3710 = vsub.f32 %v3534, %v3558
    %v3711 = vsub.f32 %v3535, %v3559
    %v3712 = vsub.f32 %v3552, %v3576
    %v3713 = vsub.f32 %v3553, %v3577
    %v3714 = vsub.f32 %v3554, %v3578
    %v3715 = vsub.f32 %v3555, %v3579
    %v3716 = vsub.f32 %v3556, %v3580
    %v3717 = vsub.f32 %v3557, %v3581
    %v3718 = vsub.f32 %v3558, %v3582
    %v3719 = vsub.f32 %v3559, %v3583
    %v3720 = vsub.f32 %v3576, %v3600
    %v3721 = vsub.f32 %v3577, %v3601
    %v3722 = vsub.f32 %v3578, %v3602
    %v3723 = vsub.f32 %v3579, %v3603
    %v3724 = vsub.f32 %v3580, %v3604
    %v3725 = vsub.f32 %v3581, %v3605
    %v3726 = vsub.f32 %v3582, %v3606
    %v3727 = vsub.f32 %v3583, %v3607
    %v3728 = vsub.f32 %v3600, %v3624
    %v3729 = vsub.f32 %v3601, %v3625
    %v3730 = vsub.f32 %v3602, %v3626
    %v3731 = vsub.f32 %v3603, %v3627
    %v3732 = vsub.f32 %v3604, %v3628
    %v3733 = vsub.f32 %v3605, %v3629
    %v3734 = vsub.f32 %v3606, %v3630
    %v3735 = vsub.f32 %v3607, %v3631
    %v3736 = vsub.f32 %v3624, %v3648
    %v3737 = vsub.f32 %v3625, %v3649
    %v3738 = vsub.f32 %v3626, %v3650
    %v3739 = vsub.f32 %v3627, %v3651
    %v3740 = vsub.f32 %v3628, %v3652
    %v3741 = vsub.f32 %v3629, %v3653
    %v3742 = vsub.f32 %v3630, %v3654
    %v3743 = vsub.f32 %v3631, %v3655
    %v3744 = vmul.f32 %v3189, 2.5
    %v3745 = vmul.f32 %v3191, 2.5
    %v3746 = vmul.f32 %v3194, 2.5
    %v3747 = vmul.f32 %v3196, 2.5
    %v3748 = vmul.f32 %v3199, 2.5
    %v3749 = vmul.f32 %v3201, 2.5
    %v3750 = vmul.f32 %v3204, 2.5
    %v3751 = vmul.f32 %v3206, 2.5
    %v3752 = vsub.f32 %v3744, -5.5
    %v3753 = vsub.f32 %v3745, -5.5
    %v3754 = vsub.f32 %v3746, -5.5
    %v3755 = vsub.f32 %v3747, -5.5
    %v3756 = vsub.f32 %v3748, -5.5
    %v3757 = vsub.f32 %v3749, -5.5
    %v3758 = vsub.f32 %v3750, -5.5
    %v3759 = vsub.f32 %v3751, -5.5
    %v3760 = vmul.f32 %v3752, %v3656
    %v3761 = vmul.f32 %v3753, %v3657
    %v3762 = vmul.f32 %v3754, %v3658
    %v3763 = vmul.f32 %v3755, %v3659
    %v3764 = vmul.f32 %v3756, %v3660
    %v3765 = vmul.f32 %v3757, %v3661
    %v3766 = vmul.f32 %v3758, %v3662
    %v3767 = vmul.f32 %v3759, %v3663
    %v3768 = vsub.f32 -3.5, %v3744
    %v3769 = vsub.f32 -3.5, %v3745
    %v3770 = vsub.f32 -3.5, %v3746
    %v3771 = vsub.f32 -3.5, %v3747
    %v3772 = vsub.f32 -3.5, %v3748
    %v3773 = vsub.f32 -3.5, %v3749
    %v3774 = vsub.f32 -3.5, %v3750
    %v3775 = vsub.f32 -3.5, %v3751
    %v3776 = vmul.f32 %v3768, %v3664
    %v3777 = vmul.f32 %v3769, %v3665
    %v3778 = vmul.f32 %v3770, %v3666
    %v3779 = vmul.f32 %v3771, %v3667
    %v3780 = vmul.f32 %v3772, %v3668
    %v3781 = vmul.f32 %v3773, %v3669
    %v3782 = vmul.f32 %v3774, %v3670
    %v3783 = vmul.f32 %v3775, %v3671
    %v3784 = vadd.f32 %v3760, %v3776
    %v3785 = vadd.f32 %v3761, %v3777
    %v3786 = vadd.f32 %v3762, %v3778
    %v3787 = vadd.f32 %v3763, %v3779
    %v3788 = vadd.f32 %v3764, %v3780
    %v3789 = vadd.f32 %v3765, %v3781
    %v3790 = vadd.f32 %v3766, %v3782
    %v3791 = vadd.f32 %v3767, %v3783
    %v3792 = vsub.f32 %v3744, -4.5
    %v3793 = vsub.f32 %v3745, -4.5
    %v3794 = vsub.f32 %v3746, -4.5
    %v3795 = vsub.f32 %v3747, -4.5
    %v3796 = vsub.f32 %v3748, -4.5
    %v3797 = vsub.f32 %v3749, -4.5
    %v3798 = vsub.f32 %v3750, -4.5
    %v3799 = vsub.f32 %v3751, -4.5
    %v3800 = vmul.f32 %v3792, %v3664
    %v3801 = vmul.f32 %v3793, %v3665
    %v3802 = vmul.f32 %v3794, %v3666
    %v3803 = vmul.f32 %v3795, %v3667
    %v3804 = vmul.f32 %v3796, %v3668
    %v3805 = vmul.f32 %v3797, %v3669
    %v3806 = vmul.f32 %v3798, %v3670
    %v3807 = vmul.f32 %v3799, %v3671
    %v3808 = vsub.f32 -2.5, %v3744
    %v3809 = vsub.f32 -2.5, %v3745
    %v3810 = vsub.f32 -2.5, %v3746
    %v3811 = vsub.f32 -2.5, %v3747
    %v3812 = vsub.f32 -2.5, %v3748
    %v3813 = vsub.f32 -2.5, %v3749
    %v3814 = vsub.f32 -2.5, %v3750
    %v3815 = vsub.f32 -2.5, %v3751
    %v3816 = vmul.f32 %v3808, %v3672
    %v3817 = vmul.f32 %v3809, %v3673
    %v3818 = vmul.f32 %v3810, %v3674
    %v3819 = vmul.f32 %v3811, %v3675
    %v3820 = vmul.f32 %v3812, %v3676
    %v3821 = vmul.f32 %v3813, %v3677
    %v3822 = vmul.f32 %v3814, %v3678
    %v3823 = vmul.f32 %v3815, %v3679
    %v3824 = vadd.f32 %v3800, %v3816
    %v3825 = vadd.f32 %v3801, %v3817
    %v3826 = vadd.f32 %v3802, %v3818
    %v3827 = vadd.f32 %v3803, %v3819
    %v3828 = vadd.f32 %v3804, %v3820
    %v3829 = vadd.f32 %v3805, %v3821
    %v3830 = vadd.f32 %v3806, %v3822
    %v3831 = vadd.f32 %v3807, %v3823
    %v3832 = vsub.f32 %v3744, -3.5
    %v3833 = vsub.f32 %v3745, -3.5
    %v3834 = vsub.f32 %v3746, -3.5
    %v3835 = vsub.f32 %v3747, -3.5
    %v3836 = vsub.f32 %v3748, -3.5
    %v3837 = vsub.f32 %v3749, -3.5
    %v3838 = vsub.f32 %v3750, -3.5
    %v3839 = vsub.f32 %v3751, -3.5
    %v3840 = vmul.f32 %v3832, %v3672
    %v3841 = vmul.f32 %v3833, %v3673
    %v3842 = vmul.f32 %v3834, %v3674
    %v3843 = vmul.f32 %v3835, %v3675
    %v3844 = vmul.f32 %v3836, %v3676
    %v3845 = vmul.f32 %v3837, %v3677
    %v3846 = vmul.f32 %v3838, %v3678
    %v3847 = vmul.f32 %v3839, %v3679
    %v3848 = vsub.f32 -1.5, %v3744
    %v3849 = vsub.f32 -1.5, %v3745
    %v3850 = vsub.f32 -1.5, %v3746
    %v3851 = vsub.f32 -1.5, %v3747
    %v3852 = vsub.f32 -1.5, %v3748
    %v3853 = vsub.f32 -1.5, %v3749
    %v3854 = vsub.f32 -1.5, %v3750
    %v3855 = vsub.f32 -1.5, %v3751
    %v3856 = vmul.f32 %v3848, %v3680
    %v3857 = vmul.f32 %v3849, %v3681
    %v3858 = vmul.f32 %v3850, %v3682
    %v3859 = vmul.f32 %v3851, %v3683
    %v3860 = vmul.f32 %v3852, %v3684
    %v3861 = vmul.f32 %v3853, %v3685
    %v3862 = vmul.f32 %v3854, %v3686
    %v3863 = vmul.f32 %v3855, %v3687
    %v3864 = vadd.f32 %v3840, %v3856
    %v3865 = vadd.f32 %v3841, %v3857
    %v3866 = vadd.f32 %v3842, %v3858
    %v3867 = vadd.f32 %v3843, %v3859
    %v3868 = vadd.f32 %v3844, %v3860
    %v3869 = vadd.f32 %v3845, %v3861
    %v3870 = vadd.f32 %v3846, %v3862
    %v3871 = vadd.f32 %v3847, %v3863
    %v3872 = vsub.f32 %v3744, -2.5
    %v3873 = vsub.f32 %v3745, -2.5
    %v3874 = vsub.f32 %v3746, -2.5
    %v3875 = vsub.f32 %v3747, -2.5
    %v3876 = vsub.f32 %v3748, -2.5
    %v3877 = vsub.f32 %v3749, -2.5
    %v3878 = vsub.f32 %v3750, -2.5
    %v3879 = vsub.f32 %v3751, -2.5
    %v3880 = vmul.f32 %v3872, %v3680
    %v3881 = vmul.f32 %v3873, %v3681
    %v3882 = vmul.f32 %v3874, %v3682
    %v3883 = vmul.f32 %v3875, %v3683
    %v3884 = vmul.f32 %v3876, %v3684
    %v3885 = vmul.f32 %v3877, %v3685
    %v3886 = vmul.f32 %v3878, %v3686
    %v3887 = vmul.f32 %v3879, %v3687
    %v3888 = vsub.f32 -0.49999997, %v3744
    %v3889 = vsub.f32 -0.49999997, %v3745
    %v3890 = vsub.f32 -0.49999997, %v3746
    %v3891 = vsub.f32 -0.49999997, %v3747
    %v3892 = vsub.f32 -0.49999997, %v3748
    %v3893 = vsub.f32 -0.49999997, %v3749
    %v3894 = vsub.f32 -0.49999997, %v3750
    %v3895 = vsub.f32 -0.49999997, %v3751
    %v3896 = vmul.f32 %v3888, %v3688
    %v3897 = vmul.f32 %v3889, %v3689
    %v3898 = vmul.f32 %v3890, %v3690
    %v3899 = vmul.f32 %v3891, %v3691
    %v3900 = vmul.f32 %v3892, %v3692
    %v3901 = vmul.f32 %v3893, %v3693
    %v3902 = vmul.f32 %v3894, %v3694
    %v3903 = vmul.f32 %v3895, %v3695
    %v3904 = vadd.f32 %v3880, %v3896
    %v3905 = vadd.f32 %v3881, %v3897
    %v3906 = vadd.f32 %v3882, %v3898
    %v3907 = vadd.f32 %v3883, %v3899
    %v3908 = vadd.f32 %v3884, %v3900
    %v3909 = vadd.f32 %v3885, %v3901
    %v3910 = vadd.f32 %v3886, %v3902
    %v3911 = vadd.f32 %v3887, %v3903
    %v3912 = vsub.f32 %v3744, -1.5
    %v3913 = vsub.f32 %v3745, -1.5
    %v3914 = vsub.f32 %v3746, -1.5
    %v3915 = vsub.f32 %v3747, -1.5
    %v3916 = vsub.f32 %v3748, -1.5
    %v3917 = vsub.f32 %v3749, -1.5
    %v3918 = vsub.f32 %v3750, -1.5
    %v3919 = vsub.f32 %v3751, -1.5
    %v3920 = vmul.f32 %v3912, %v3688
    %v3921 = vmul.f32 %v3913, %v3689
    %v3922 = vmul.f32 %v3914, %v3690
    %v3923 = vmul.f32 %v3915, %v3691
    %v3924 = vmul.f32 %v3916, %v3692
    %v3925 = vmul.f32 %v3917, %v3693
    %v3926 = vmul.f32 %v3918, %v3694
    %v3927 = vmul.f32 %v3919, %v3695
    %v3928 = vsub.f32 0.5000001, %v3744
    %v3929 = vsub.f32 0.5000001, %v3745
    %v3930 = vsub.f32 0.5000001, %v3746
    %v3931 = vsub.f32 0.5000001, %v3747
    %v3932 = vsub.f32 0.5000001, %v3748
    %v3933 = vsub.f32 0.5000001, %v3749
    %v3934 = vsub.f32 0.5000001, %v3750
    %v3935 = vsub.f32 0.5000001, %v3751
    %v3936 = vmul.f32 %v3928, %v3696
    %v3937 = vmul.f32 %v3929, %v3697
    %v3938 = vmul.f32 %v3930, %v3698
    %v3939 = vmul.f32 %v3931, %v3699
    %v3940 = vmul.f32 %v3932, %v3700
    %v3941 = vmul.f32 %v3933, %v3701
    %v3942 = vmul.f32 %v3934, %v3702
    %v3943 = vmul.f32 %v3935, %v3703
    %v3944 = vadd.f32 %v3920, %v3936
    %v3945 = vadd.f32 %v3921, %v3937
    %v3946 = vadd.f32 %v3922, %v3938
    %v3947 = vadd.f32 %v3923, %v3939
    %v3948 = vadd.f32 %v3924, %v3940
    %v3949 = vadd.f32 %v3925, %v3941
    %v3950 = vadd.f32 %v3926, %v3942
    %v3951 = vadd.f32 %v3927, %v3943
    %v3952 = vsub.f32 %v3744, -0.49999997
    %v3953 = vsub.f32 %v3745, -0.49999997
    %v3954 = vsub.f32 %v3746, -0.49999997
    %v3955 = vsub.f32 %v3747, -0.49999997
    %v3956 = vsub.f32 %v3748, -0.49999997
    %v3957 = vsub.f32 %v3749, -0.49999997
    %v3958 = vsub.f32 %v3750, -0.49999997
    %v3959 = vsub.f32 %v3751, -0.49999997
    %v3960 = vmul.f32 %v3952, %v3696
    %v3961 = vmul.f32 %v3953, %v3697
    %v3962 = vmul.f32 %v3954, %v3698
    %v3963 = vmul.f32 %v3955, %v3699
    %v3964 = vmul.f32 %v3956, %v3700
    %v3965 = vmul.f32 %v3957, %v3701
    %v3966 = vmul.f32 %v3958, %v3702
    %v3967 = vmul.f32 %v3959, %v3703
    %v3968 = vsub.f32 1.5, %v3744
    %v3969 = vsub.f32 1.5, %v3745
    %v3970 = vsub.f32 1.5, %v3746
    %v3971 = vsub.f32 1.5, %v3747
    %v3972 = vsub.f32 1.5, %v3748
    %v3973 = vsub.f32 1.5, %v3749
    %v3974 = vsub.f32 1.5, %v3750
    %v3975 = vsub.f32 1.5, %v3751
    %v3976 = vmul.f32 %v3968, %v3704
    %v3977 = vmul.f32 %v3969, %v3705
    %v3978 = vmul.f32 %v3970, %v3706
    %v3979 = vmul.f32 %v3971, %v3707
    %v3980 = vmul.f32 %v3972, %v3708
    %v3981 = vmul.f32 %v3973, %v3709
    %v3982 = vmul.f32 %v3974, %v3710
    %v3983 = vmul.f32 %v3975, %v3711
    %v3984 = vadd.f32 %v3960, %v3976
    %v3985 = vadd.f32 %v3961, %v3977
    %v3986 = vadd.f32 %v3962, %v3978
    %v3987 = vadd.f32 %v3963, %v3979
    %v3988 = vadd.f32 %v3964, %v3980
    %v3989 = vadd.f32 %v3965, %v3981
    %v3990 = vadd.f32 %v3966, %v3982
    %v3991 = vadd.f32 %v3967, %v3983
    %v3992 = vsub.f32 %v3744, 0.5000001
    %v3993 = vsub.f32 %v3745, 0.5000001
    %v3994 = vsub.f32 %v3746, 0.5000001
    %v3995 = vsub.f32 %v3747, 0.5000001
    %v3996 = vsub.f32 %v3748, 0.5000001
    %v3997 = vsub.f32 %v3749, 0.5000001
    %v3998 = vsub.f32 %v3750, 0.5000001
    %v3999 = vsub.f32 %v3751, 0.5000001
    %v4000 = vmul.f32 %v3992, %v3704
    %v4001 = vmul.f32 %v3993, %v3705
    %v4002 = vmul.f32 %v3994, %v3706
    %v4003 = vmul.f32 %v3995, %v3707
    %v4004 = vmul.f32 %v3996, %v3708
    %v4005 = vmul.f32 %v3997, %v3709
    %v4006 = vmul.f32 %v3998, %v3710
    %v4007 = vmul.f32 %v3999, %v3711
    %v4008 = vsub.f32 2.5, %v3744
    %v4009 = vsub.f32 2.5, %v3745
    %v4010 = vsub.f32 2.5, %v3746
    %v4011 = vsub.f32 2.5, %v3747
    %v4012 = vsub.f32 2.5, %v3748
    %v4013 = vsub.f32 2.5, %v3749
    %v4014 = vsub.f32 2.5, %v3750
    %v4015 = vsub.f32 2.5, %v3751
    %v4016 = vmul.f32 %v4008, %v3712
    %v4017 = vmul.f32 %v4009, %v3713
    %v4018 = vmul.f32 %v4010, %v3714
    %v4019 = vmul.f32 %v4011, %v3715
    %v4020 = vmul.f32 %v4012, %v3716
    %v4021 = vmul.f32 %v4013, %v3717
    %v4022 = vmul.f32 %v4014, %v3718
    %v4023 = vmul.f32 %v4015, %v3719
    %v4024 = vadd.f32 %v4000, %v4016
    %v4025 = vadd.f32 %v4001, %v4017
    %v4026 = vadd.f32 %v4002, %v4018
    %v4027 = vadd.f32 %v4003, %v4019
    %v4028 = vadd.f32 %v4004, %v4020
    %v4029 = vadd.f32 %v4005, %v4021
    %v4030 = vadd.f32 %v4006, %v4022
    %v4031 = vadd.f32 %v4007, %v4023
    %v4032 = vsub.f32 %v3744, 1.5
    %v4033 = vsub.f32 %v3745, 1.5
    %v4034 = vsub.f32 %v3746, 1.5
    %v4035 = vsub.f32 %v3747, 1.5
    %v4036 = vsub.f32 %v3748, 1.5
    %v4037 = vsub.f32 %v3749, 1.5
    %v4038 = vsub.f32 %v3750, 1.5
    %v4039 = vsub.f32 %v3751, 1.5
    %v4040 = vmul.f32 %v4032, %v3712
    %v4041 = vmul.f32 %v4033, %v3713
    %v4042 = vmul.f32 %v4034, %v3714
    %v4043 = vmul.f32 %v4035, %v3715
    %v4044 = vmul.f32 %v4036, %v3716
    %v4045 = vmul.f32 %v4037, %v3717
    %v4046 = vmul.f32 %v4038, %v3718
    %v4047 = vmul.f32 %v4039, %v3719
    %v4048 = vsub.f32 3.5000002, %v3744
    %v4049 = vsub.f32 3.5000002, %v3745
    %v4050 = vsub.f32 3.5000002, %v3746
    %v4051 = vsub.f32 3.5000002, %v3747
    %v4052 = vsub.f32 3.5000002, %v3748
    %v4053 = vsub.f32 3.5000002, %v3749
    %v4054 = vsub.f32 3.5000002, %v3750
    %v4055 = vsub.f32 3.5000002, %v3751
    %v4056 = vmul.f32 %v4048, %v3720
    %v4057 = vmul.f32 %v4049, %v3721
    %v4058 = vmul.f32 %v4050, %v3722
    %v4059 = vmul.f32 %v4051, %v3723
    %v4060 = vmul.f32 %v4052, %v3724
    %v4061 = vmul.f32 %v4053, %v3725
    %v4062 = vmul.f32 %v4054, %v3726
    %v4063 = vmul.f32 %v4055, %v3727
    %v4064 = vadd.f32 %v4040, %v4056
    %v4065 = vadd.f32 %v4041, %v4057
    %v4066 = vadd.f32 %v4042, %v4058
    %v4067 = vadd.f32 %v4043, %v4059
    %v4068 = vadd.f32 %v4044, %v4060
    %v4069 = vadd.f32 %v4045, %v4061
    %v4070 = vadd.f32 %v4046, %v4062
    %v4071 = vadd.f32 %v4047, %v4063
    %v4072 = vsub.f32 %v3744, 2.5
    %v4073 = vsub.f32 %v3745, 2.5
    %v4074 = vsub.f32 %v3746, 2.5
    %v4075 = vsub.f32 %v3747, 2.5
    %v4076 = vsub.f32 %v3748, 2.5
    %v4077 = vsub.f32 %v3749, 2.5
    %v4078 = vsub.f32 %v3750, 2.5
    %v4079 = vsub.f32 %v3751, 2.5
    %v4080 = vmul.f32 %v4072, %v3720
    %v4081 = vmul.f32 %v4073, %v3721
    %v4082 = vmul.f32 %v4074, %v3722
    %v4083 = vmul.f32 %v4075, %v3723
    %v4084 = vmul.f32 %v4076, %v3724
    %v4085 = vmul.f32 %v4077, %v3725
    %v4086 = vmul.f32 %v4078, %v3726
    %v4087 = vmul.f32 %v4079, %v3727
    %v4088 = vsub.f32 4.5, %v3744
    %v4089 = vsub.f32 4.5, %v3745
    %v4090 = vsub.f32 4.5, %v3746
    %v4091 = vsub.f32 4.5, %v3747
    %v4092 = vsub.f32 4.5, %v3748
    %v4093 = vsub.f32 4.5, %v3749
    %v4094 = vsub.f32 4.5, %v3750
    %v4095 = vsub.f32 4.5, %v3751
    %v4096 = vmul.f32 %v4088, %v3728
    %v4097 = vmul.f32 %v4089, %v3729
    %v4098 = vmul.f32 %v4090, %v3730
    %v4099 = vmul.f32 %v4091, %v3731
    %v4100 = vmul.f32 %v4092, %v3732
    %v4101 = vmul.f32 %v4093, %v3733
    %v4102 = vmul.f32 %v4094, %v3734
    %v4103 = vmul.f32 %v4095, %v3735
    %v4104 = vadd.f32 %v4080, %v4096
    %v4105 = vadd.f32 %v4081, %v4097
    %v4106 = vadd.f32 %v4082, %v4098
    %v4107 = vadd.f32 %v4083, %v4099
    %v4108 = vadd.f32 %v4084, %v4100
    %v4109 = vadd.f32 %v4085, %v4101
    %v4110 = vadd.f32 %v4086, %v4102
    %v4111 = vadd.f32 %v4087, %v4103
    %v4112 = vsub.f32 %v3744, 3.5000002
    %v4113 = vsub.f32 %v3745, 3.5000002
    %v4114 = vsub.f32 %v3746, 3.5000002
    %v4115 = vsub.f32 %v3747, 3.5000002
    %v4116 = vsub.f32 %v3748, 3.5000002
    %v4117 = vsub.f32 %v3749, 3.5000002
    %v4118 = vsub.f32 %v3750, 3.5000002
    %v4119 = vsub.f32 %v3751, 3.5000002
    %v4120 = vmul.f32 %v4112, %v3728
    %v4121 = vmul.f32 %v4113, %v3729
    %v4122 = vmul.f32 %v4114, %v3730
    %v4123 = vmul.f32 %v4115, %v3731
    %v4124 = vmul.f32 %v4116, %v3732
    %v4125 = vmul.f32 %v4117, %v3733
    %v4126 = vmul.f32 %v4118, %v3734
    %v4127 = vmul.f32 %v4119, %v3735
    %v4128 = vsub.f32 5.5, %v3744
    %v4129 = vsub.f32 5.5, %v3745
    %v4130 = vsub.f32 5.5, %v3746
    %v4131 = vsub.f32 5.5, %v3747
    %v4132 = vsub.f32 5.5, %v3748
    %v4133 = vsub.f32 5.5, %v3749
    %v4134 = vsub.f32 5.5, %v3750
    %v4135 = vsub.f32 5.5, %v3751
    %v4136 = vmul.f32 %v4128, %v3736
    %v4137 = vmul.f32 %v4129, %v3737
    %v4138 = vmul.f32 %v4130, %v3738
    %v4139 = vmul.f32 %v4131, %v3739
    %v4140 = vmul.f32 %v4132, %v3740
    %v4141 = vmul.f32 %v4133, %v3741
    %v4142 = vmul.f32 %v4134, %v3742
    %v4143 = vmul.f32 %v4135, %v3743
    %v4144 = vadd.f32 %v4120, %v4136
    %v4145 = vadd.f32 %v4121, %v4137
    %v4146 = vadd.f32 %v4122, %v4138
    %v4147 = vadd.f32 %v4123, %v4139
    %v4148 = vadd.f32 %v4124, %v4140
    %v4149 = vadd.f32 %v4125, %v4141
    %v4150 = vadd.f32 %v4126, %v4142
    %v4151 = vadd.f32 %v4127, %v4143
    %v4152 = vmul.f32 %v3189, 1.25
    %v4153 = vmul.f32 %v3191, 1.25
    %v4154 = vmul.f32 %v3194, 1.25
    %v4155 = vmul.f32 %v3196, 1.25
    %v4156 = vmul.f32 %v3199, 1.25
    %v4157 = vmul.f32 %v3201, 1.25
    %v4158 = vmul.f32 %v3204, 1.25
    %v4159 = vmul.f32 %v3206, 1.25
    %v4160 = vsub.f32 %v4152, -2.75
    %v4161 = vsub.f32 %v4153, -2.75
    %v4162 = vsub.f32 %v4154, -2.75
    %v4163 = vsub.f32 %v4155, -2.75
    %v4164 = vsub.f32 %v4156, -2.75
    %v4165 = vsub.f32 %v4157, -2.75
    %v4166 = vsub.f32 %v4158, -2.75
    %v4167 = vsub.f32 %v4159, -2.75
    %v4168 = vmul.f32 %v4160, %v3784
    %v4169 = vmul.f32 %v4161, %v3785
    %v4170 = vmul.f32 %v4162, %v3786
    %v4171 = vmul.f32 %v4163, %v3787
    %v4172 = vmul.f32 %v4164, %v3788
    %v4173 = vmul.f32 %v4165, %v3789
    %v4174 = vmul.f32 %v4166, %v3790
    %v4175 = vmul.f32 %v4167, %v3791
    %v4176 = vsub.f32 -1.25, %v4152
    %v4177 = vsub.f32 -1.25, %v4153
    %v4178 = vsub.f32 -1.25, %v4154
    %v4179 = vsub.f32 -1.25, %v4155
    %v4180 = vsub.f32 -1.25, %v4156
    %v4181 = vsub.f32 -1.25, %v4157
    %v4182 = vsub.f32 -1.25, %v4158
    %v4183 = vsub.f32 -1.25, %v4159
    %v4184 = vmul.f32 %v4176, %v3824
    %v4185 = vmul.f32 %v4177, %v3825
    %v4186 = vmul.f32 %v4178, %v3826
    %v4187 = vmul.f32 %v4179, %v3827
    %v4188 = vmul.f32 %v4180, %v3828
    %v4189 = vmul.f32 %v4181, %v3829
    %v4190 = vmul.f32 %v4182, %v3830
    %v4191 = vmul.f32 %v4183, %v3831
    %v4192 = vadd.f32 %v4168, %v4184
    %v4193 = vadd.f32 %v4169, %v4185
    %v4194 = vadd.f32 %v4170, %v4186
    %v4195 = vadd.f32 %v4171, %v4187
    %v4196 = vadd.f32 %v4172, %v4188
    %v4197 = vadd.f32 %v4173, %v4189
    %v4198 = vadd.f32 %v4174, %v4190
    %v4199 = vadd.f32 %v4175, %v4191
    %v4200 = vsub.f32 %v4152, -2.25
    %v4201 = vsub.f32 %v4153, -2.25
    %v4202 = vsub.f32 %v4154, -2.25
    %v4203 = vsub.f32 %v4155, -2.25
    %v4204 = vsub.f32 %v4156, -2.25
    %v4205 = vsub.f32 %v4157, -2.25
    %v4206 = vsub.f32 %v4158, -2.25
    %v4207 = vsub.f32 %v4159, -2.25
    %v4208 = vmul.f32 %v4200, %v3824
    %v4209 = vmul.f32 %v4201, %v3825
    %v4210 = vmul.f32 %v4202, %v3826
    %v4211 = vmul.f32 %v4203, %v3827
    %v4212 = vmul.f32 %v4204, %v3828
    %v4213 = vmul.f32 %v4205, %v3829
    %v4214 = vmul.f32 %v4206, %v3830
    %v4215 = vmul.f32 %v4207, %v3831
    %v4216 = vsub.f32 -0.75, %v4152
    %v4217 = vsub.f32 -0.75, %v4153
    %v4218 = vsub.f32 -0.75, %v4154
    %v4219 = vsub.f32 -0.75, %v4155
    %v4220 = vsub.f32 -0.75, %v4156
    %v4221 = vsub.f32 -0.75, %v4157
    %v4222 = vsub.f32 -0.75, %v4158
    %v4223 = vsub.f32 -0.75, %v4159
    %v4224 = vmul.f32 %v4216, %v3864
    %v4225 = vmul.f32 %v4217, %v3865
    %v4226 = vmul.f32 %v4218, %v3866
    %v4227 = vmul.f32 %v4219, %v3867
    %v4228 = vmul.f32 %v4220, %v3868
    %v4229 = vmul.f32 %v4221, %v3869
    %v4230 = vmul.f32 %v4222, %v3870
    %v4231 = vmul.f32 %v4223, %v3871
    %v4232 = vadd.f32 %v4208, %v4224
    %v4233 = vadd.f32 %v4209, %v4225
    %v4234 = vadd.f32 %v4210, %v4226
    %v4235 = vadd.f32 %v4211, %v4227
    %v4236 = vadd.f32 %v4212, %v4228
    %v4237 = vadd.f32 %v4213, %v4229
    %v4238 = vadd.f32 %v4214, %v4230
    %v4239 = vadd.f32 %v4215, %v4231
    %v4240 = vsub.f32 %v4152, -1.75
    %v4241 = vsub.f32 %v4153, -1.75
    %v4242 = vsub.f32 %v4154, -1.75
    %v4243 = vsub.f32 %v4155, -1.75
    %v4244 = vsub.f32 %v4156, -1.75
    %v4245 = vsub.f32 %v4157, -1.75
    %v4246 = vsub.f32 %v4158, -1.75
    %v4247 = vsub.f32 %v4159, -1.75
    %v4248 = vmul.f32 %v4240, %v3864
    %v4249 = vmul.f32 %v4241, %v3865
    %v4250 = vmul.f32 %v4242, %v3866
    %v4251 = vmul.f32 %v4243, %v3867
    %v4252 = vmul.f32 %v4244, %v3868
    %v4253 = vmul.f32 %v4245, %v3869
    %v4254 = vmul.f32 %v4246, %v3870
    %v4255 = vmul.f32 %v4247, %v3871
    %v4256 = vsub.f32 -0.24999999, %v4152
    %v4257 = vsub.f32 -0.24999999, %v4153
    %v4258 = vsub.f32 -0.24999999, %v4154
    %v4259 = vsub.f32 -0.24999999, %v4155
    %v4260 = vsub.f32 -0.24999999, %v4156
    %v4261 = vsub.f32 -0.24999999, %v4157
    %v4262 = vsub.f32 -0.24999999, %v4158
    %v4263 = vsub.f32 -0.24999999, %v4159
    %v4264 = vmul.f32 %v4256, %v3904
    %v4265 = vmul.f32 %v4257, %v3905
    %v4266 = vmul.f32 %v4258, %v3906
    %v4267 = vmul.f32 %v4259, %v3907
    %v4268 = vmul.f32 %v4260, %v3908
    %v4269 = vmul.f32 %v4261, %v3909
    %v4270 = vmul.f32 %v4262, %v3910
    %v4271 = vmul.f32 %v4263, %v3911
    %v4272 = vadd.f32 %v4248, %v4264
    %v4273 = vadd.f32 %v4249, %v4265
    %v4274 = vadd.f32 %v4250, %v4266
    %v4275 = vadd.f32 %v4251, %v4267
    %v4276 = vadd.f32 %v4252, %v4268
    %v4277 = vadd.f32 %v4253, %v4269
    %v4278 = vadd.f32 %v4254, %v4270
    %v4279 = vadd.f32 %v4255, %v4271
    %v4280 = vsub.f32 %v4152, -1.25
    %v4281 = vsub.f32 %v4153, -1.25
    %v4282 = vsub.f32 %v4154, -1.25
    %v4283 = vsub.f32 %v4155, -1.25
    %v4284 = vsub.f32 %v4156, -1.25
    %v4285 = vsub.f32 %v4157, -1.25
    %v4286 = vsub.f32 %v4158, -1.25
    %v4287 = vsub.f32 %v4159, -1.25
    %v4288 = vmul.f32 %v4280, %v3904
    %v4289 = vmul.f32 %v4281, %v3905
    %v4290 = vmul.f32 %v4282, %v3906
    %v4291 = vmul.f32 %v4283, %v3907
    %v4292 = vmul.f32 %v4284, %v3908
    %v4293 = vmul.f32 %v4285, %v3909
    %v4294 = vmul.f32 %v4286, %v3910
    %v4295 = vmul.f32 %v4287, %v3911
    %v4296 = vsub.f32 0.25000006, %v4152
    %v4297 = vsub.f32 0.25000006, %v4153
    %v4298 = vsub.f32 0.25000006, %v4154
    %v4299 = vsub.f32 0.25000006, %v4155
    %v4300 = vsub.f32 0.25000006, %v4156
    %v4301 = vsub.f32 0.25000006, %v4157
    %v4302 = vsub.f32 0.25000006, %v4158
    %v4303 = vsub.f32 0.25000006, %v4159
    %v4304 = vmul.f32 %v4296, %v3944
    %v4305 = vmul.f32 %v4297, %v3945
    %v4306 = vmul.f32 %v4298, %v3946
    %v4307 = vmul.f32 %v4299, %v3947
    %v4308 = vmul.f32 %v4300, %v3948
    %v4309 = vmul.f32 %v4301, %v3949
    %v4310 = vmul.f32 %v4302, %v3950
    %v4311 = vmul.f32 %v4303, %v3951
    %v4312 = vadd.f32 %v4288, %v4304
    %v4313 = vadd.f32 %v4289, %v4305
    %v4314 = vadd.f32 %v4290, %v4306
    %v4315 = vadd.f32 %v4291, %v4307
    %v4316 = vadd.f32 %v4292, %v4308
    %v4317 = vadd.f32 %v4293, %v4309
    %v4318 = vadd.f32 %v4294, %v4310
    %v4319 = vadd.f32 %v4295, %v4311
    %v4320 = vsub.f32 %v4152, -0.75
    %v4321 = vsub.f32 %v4153, -0.75
    %v4322 = vsub.f32 %v4154, -0.75
    %v4323 = vsub.f32 %v4155, -0.75
    %v4324 = vsub.f32 %v4156, -0.75
    %v4325 = vsub.f32 %v4157, -0.75
    %v4326 = vsub.f32 %v4158, -0.75
    %v4327 = vsub.f32 %v4159, -0.75
    %v4328 = vmul.f32 %v4320, %v3944
    %v4329 = vmul.f32 %v4321, %v3945
    %v4330 = vmul.f32 %v4322, %v3946
    %v4331 = vmul.f32 %v4323, %v3947
    %v4332 = vmul.f32 %v4324, %v3948
    %v4333 = vmul.f32 %v4325, %v3949
    %v4334 = vmul.f32 %v4326, %v3950
    %v4335 = vmul.f32 %v4327, %v3951
    %v4336 = vsub.f32 0.75, %v4152
    %v4337 = vsub.f32 0.75, %v4153
    %v4338 = vsub.f32 0.75, %v4154
    %v4339 = vsub.f32 0.75, %v4155
    %v4340 = vsub.f32 0.75, %v4156
    %v4341 = vsub.f32 0.75, %v4157
    %v4342 = vsub.f32 0.75, %v4158
    %v4343 = vsub.f32 0.75, %v4159
    %v4344 = vmul.f32 %v4336, %v3984
    %v4345 = vmul.f32 %v4337, %v3985
    %v4346 = vmul.f32 %v4338, %v3986
    %v4347 = vmul.f32 %v4339, %v3987
    %v4348 = vmul.f32 %v4340, %v3988
    %v4349 = vmul.f32 %v4341, %v3989
    %v4350 = vmul.f32 %v4342, %v3990
    %v4351 = vmul.f32 %v4343, %v3991
    %v4352 = vadd.f32 %v4328, %v4344
    %v4353 = vadd.f32 %v4329, %v4345
    %v4354 = vadd.f32 %v4330, %v4346
    %v4355 = vadd.f32 %v4331, %v4347
    %v4356 = vadd.f32 %v4332, %v4348
    %v4357 = vadd.f32 %v4333, %v4349
    %v4358 = vadd.f32 %v4334, %v4350
    %v4359 = vadd.f32 %v4335, %v4351
    %v4360 = vsub.f32 %v4152, -0.24999999
    %v4361 = vsub.f32 %v4153, -0.24999999
    %v4362 = vsub.f32 %v4154, -0.24999999
    %v4363 = vsub.f32 %v4155, -0.24999999
    %v4364 = vsub.f32 %v4156, -0.24999999
    %v4365 = vsub.f32 %v4157, -0.24999999
    %v4366 = vsub.f32 %v4158, -0.24999999
    %v4367 = vsub.f32 %v4159, -0.24999999
    %v4368 = vmul.f32 %v4360, %v3984
    %v4369 = vmul.f32 %v4361, %v3985
    %v4370 = vmul.f32 %v4362, %v3986
    %v4371 = vmul.f32 %v4363, %v3987
    %v4372 = vmul.f32 %v4364, %v3988
    %v4373 = vmul.f32 %v4365, %v3989
    %v4374 = vmul.f32 %v4366, %v3990
    %v4375 = vmul.f32 %v4367, %v3991
    %v4376 = vsub.f32 1.25, %v4152
    %v4377 = vsub.f32 1.25, %v4153
    %v4378 = vsub.f32 1.25, %v4154
    %v4379 = vsub.f32 1.25, %v4155
    %v4380 = vsub.f32 1.25, %v4156
    %v4381 = vsub.f32 1.25, %v4157
    %v4382 = vsub.f32 1.25, %v4158
    %v4383 = vsub.f32 1.25, %v4159
    %v4384 = vmul.f32 %v4376, %v4024
    %v4385 = vmul.f32 %v4377, %v4025
    %v4386 = vmul.f32 %v4378, %v4026
    %v4387 = vmul.f32 %v4379, %v4027
    %v4388 = vmul.f32 %v4380, %v4028
    %v4389 = vmul.f32 %v4381, %v4029
    %v4390 = vmul.f32 %v4382, %v4030
    %v4391 = vmul.f32 %v4383, %v4031
    %v4392 = vadd.f32 %v4368, %v4384
    %v4393 = vadd.f32 %v4369, %v4385
    %v4394 = vadd.f32 %v4370, %v4386
    %v4395 = vadd.f32 %v4371, %v4387
    %v4396 = vadd.f32 %v4372, %v4388
    %v4397 = vadd.f32 %v4373, %v4389
    %v4398 = vadd.f32 %v4374, %v4390
    %v4399 = vadd.f32 %v4375, %v4391
    %v4400 = vsub.f32 %v4152, 0.25000006
    %v4401 = vsub.f32 %v4153, 0.25000006
    %v4402 = vsub.f32 %v4154, 0.25000006
    %v4403 = vsub.f32 %v4155, 0.25000006
    %v4404 = vsub.f32 %v4156, 0.25000006
    %v4405 = vsub.f32 %v4157, 0.25000006
    %v4406 = vsub.f32 %v4158, 0.25000006
    %v4407 = vsub.f32 %v4159, 0.25000006
    %v4408 = vmul.f32 %v4400, %v4024
    %v4409 = vmul.f32 %v4401, %v4025
    %v4410 = vmul.f32 %v4402, %v4026
    %v4411 = vmul.f32 %v4403, %v4027
    %v4412 = vmul.f32 %v4404, %v4028
    %v4413 = vmul.f32 %v4405, %v4029
    %v4414 = vmul.f32 %v4406, %v4030
    %v4415 = vmul.f32 %v4407, %v4031
    %v4416 = vsub.f32 1.7500001, %v4152
    %v4417 = vsub.f32 1.7500001, %v4153
    %v4418 = vsub.f32 1.7500001, %v4154
    %v4419 = vsub.f32 1.7500001, %v4155
    %v4420 = vsub.f32 1.7500001, %v4156
    %v4421 = vsub.f32 1.7500001, %v4157
    %v4422 = vsub.f32 1.7500001, %v4158
    %v4423 = vsub.f32 1.7500001, %v4159
    %v4424 = vmul.f32 %v4416, %v4064
    %v4425 = vmul.f32 %v4417, %v4065
    %v4426 = vmul.f32 %v4418, %v4066
    %v4427 = vmul.f32 %v4419, %v4067
    %v4428 = vmul.f32 %v4420, %v4068
    %v4429 = vmul.f32 %v4421, %v4069
    %v4430 = vmul.f32 %v4422, %v4070
    %v4431 = vmul.f32 %v4423, %v4071
    %v4432 = vadd.f32 %v4408, %v4424
    %v4433 = vadd.f32 %v4409, %v4425
    %v4434 = vadd.f32 %v4410, %v4426
    %v4435 = vadd.f32 %v4411, %v4427
    %v4436 = vadd.f32 %v4412, %v4428
    %v4437 = vadd.f32 %v4413, %v4429
    %v4438 = vadd.f32 %v4414, %v4430
    %v4439 = vadd.f32 %v4415, %v4431
    %v4440 = vsub.f32 %v4152, 0.75
    %v4441 = vsub.f32 %v4153, 0.75
    %v4442 = vsub.f32 %v4154, 0.75
    %v4443 = vsub.f32 %v4155, 0.75
    %v4444 = vsub.f32 %v4156, 0.75
    %v4445 = vsub.f32 %v4157, 0.75
    %v4446 = vsub.f32 %v4158, 0.75
    %v4447 = vsub.f32 %v4159, 0.75
    %v4448 = vmul.f32 %v4440, %v4064
    %v4449 = vmul.f32 %v4441, %v4065
    %v4450 = vmul.f32 %v4442, %v4066
    %v4451 = vmul.f32 %v4443, %v4067
    %v4452 = vmul.f32 %v4444, %v4068
    %v4453 = vmul.f32 %v4445, %v4069
    %v4454 = vmul.f32 %v4446, %v4070
    %v4455 = vmul.f32 %v4447, %v4071
    %v4456 = vsub.f32 2.25, %v4152
    %v4457 = vsub.f32 2.25, %v4153
    %v4458 = vsub.f32 2.25, %v4154
    %v4459 = vsub.f32 2.25, %v4155
    %v4460 = vsub.f32 2.25, %v4156
    %v4461 = vsub.f32 2.25, %v4157
    %v4462 = vsub.f32 2.25, %v4158
    %v4463 = vsub.f32 2.25, %v4159
    %v4464 = vmul.f32 %v4456, %v4104
    %v4465 = vmul.f32 %v4457, %v4105
    %v4466 = vmul.f32 %v4458, %v4106
    %v4467 = vmul.f32 %v4459, %v4107
    %v4468 = vmul.f32 %v4460, %v4108
    %v4469 = vmul.f32 %v4461, %v4109
    %v4470 = vmul.f32 %v4462, %v4110
    %v4471 = vmul.f32 %v4463, %v4111
    %v4472 = vadd.f32 %v4448, %v4464
    %v4473 = vadd.f32 %v4449, %v4465
    %v4474 = vadd.f32 %v4450, %v4466
    %v4475 = vadd.f32 %v4451, %v4467
    %v4476 = vadd.f32 %v4452, %v4468
    %v4477 = vadd.f32 %v4453, %v4469
    %v4478 = vadd.f32 %v4454, %v4470
    %v4479 = vadd.f32 %v4455, %v4471
    %v4480 = vsub.f32 %v4152, 1.25
    %v4481 = vsub.f32 %v4153, 1.25
    %v4482 = vsub.f32 %v4154, 1.25
    %v4483 = vsub.f32 %v4155, 1.25
    %v4484 = vsub.f32 %v4156, 1.25
    %v4485 = vsub.f32 %v4157, 1.25
    %v4486 = vsub.f32 %v4158, 1.25
    %v4487 = vsub.f32 %v4159, 1.25
    %v4488 = vmul.f32 %v4480, %v4104
    %v4489 = vmul.f32 %v4481, %v4105
    %v4490 = vmul.f32 %v4482, %v4106
    %v4491 = vmul.f32 %v4483, %v4107
    %v4492 = vmul.f32 %v4484, %v4108
    %v4493 = vmul.f32 %v4485, %v4109
    %v4494 = vmul.f32 %v4486, %v4110
    %v4495 = vmul.f32 %v4487, %v4111
    %v4496 = vsub.f32 2.75, %v4152
    %v4497 = vsub.f32 2.75, %v4153
    %v4498 = vsub.f32 2.75, %v4154
    %v4499 = vsub.f32 2.75, %v4155
    %v4500 = vsub.f32 2.75, %v4156
    %v4501 = vsub.f32 2.75, %v4157
    %v4502 = vsub.f32 2.75, %v4158
    %v4503 = vsub.f32 2.75, %v4159
    %v4504 = vmul.f32 %v4496, %v4144
    %v4505 = vmul.f32 %v4497, %v4145
    %v4506 = vmul.f32 %v4498, %v4146
    %v4507 = vmul.f32 %v4499, %v4147
    %v4508 = vmul.f32 %v4500, %v4148
    %v4509 = vmul.f32 %v4501, %v4149
    %v4510 = vmul.f32 %v4502, %v4150
    %v4511 = vmul.f32 %v4503, %v4151
    %v4512 = vadd.f32 %v4488, %v4504
    %v4513 = vadd.f32 %v4489, %v4505
    %v4514 = vadd.f32 %v4490, %v4506
    %v4515 = vadd.f32 %v4491, %v4507
    %v4516 = vadd.f32 %v4492, %v4508
    %v4517 = vadd.f32 %v4493, %v4509
    %v4518 = vadd.f32 %v4494, %v4510
    %v4519 = vadd.f32 %v4495, %v4511
    %v4520 = vmul.f32 %v3189, 0.8333333
    %v4521 = vmul.f32 %v3191, 0.8333333
    %v4522 = vmul.f32 %v3194, 0.8333333
    %v4523 = vmul.f32 %v3196, 0.8333333
    %v4524 = vmul.f32 %v3199, 0.8333333
    %v4525 = vmul.f32 %v3201, 0.8333333
    %v4526 = vmul.f32 %v3204, 0.8333333
    %v4527 = vmul.f32 %v3206, 0.8333333
    %v4528 = vsub.f32 %v4520, -1.8333334
    %v4529 = vsub.f32 %v4521, -1.8333334
    %v4530 = vsub.f32 %v4522, -1.8333334
    %v4531 = vsub.f32 %v4523, -1.8333334
    %v4532 = vsub.f32 %v4524, -1.8333334
    %v4533 = vsub.f32 %v4525, -1.8333334
    %v4534 = vsub.f32 %v4526, -1.8333334
    %v4535 = vsub.f32 %v4527, -1.8333334
    %v4536 = vmul.f32 %v4528, %v4192
    %v4537 = vmul.f32 %v4529, %v4193
    %v4538 = vmul.f32 %v4530, %v4194
    %v4539 = vmul.f32 %v4531, %v4195
    %v4540 = vmul.f32 %v4532, %v4196
    %v4541 = vmul.f32 %v4533, %v4197
    %v4542 = vmul.f32 %v4534, %v4198
    %v4543 = vmul.f32 %v4535, %v4199
    %v4544 = vsub.f32 -0.5, %v4520
    %v4545 = vsub.f32 -0.5, %v4521
    %v4546 = vsub.f32 -0.5, %v4522
    %v4547 = vsub.f32 -0.5, %v4523
    %v4548 = vsub.f32 -0.5, %v4524
    %v4549 = vsub.f32 -0.5, %v4525
    %v4550 = vsub.f32 -0.5, %v4526
    %v4551 = vsub.f32 -0.5, %v4527
    %v4552 = vmul.f32 %v4544, %v4232
    %v4553 = vmul.f32 %v4545, %v4233
    %v4554 = vmul.f32 %v4546, %v4234
    %v4555 = vmul.f32 %v4547, %v4235
    %v4556 = vmul.f32 %v4548, %v4236
    %v4557 = vmul.f32 %v4549, %v4237
    %v4558 = vmul.f32 %v4550, %v4238
    %v4559 = vmul.f32 %v4551, %v4239
    %v4560 = vadd.f32 %v4536, %v4552
    %v4561 = vadd.f32 %v4537, %v4553
    %v4562 = vadd.f32 %v4538, %v4554
    %v4563 = vadd.f32 %v4539, %v4555
    %v4564 = vadd.f32 %v4540, %v4556
    %v4565 = vadd.f32 %v4541, %v4557
    %v4566 = vadd.f32 %v4542, %v4558
    %v4567 = vadd.f32 %v4543, %v4559
    %v4568 = vsub.f32 %v4520, -1.4999999
    %v4569 = vsub.f32 %v4521, -1.4999999
    %v4570 = vsub.f32 %v4522, -1.4999999
    %v4571 = vsub.f32 %v4523, -1.4999999
    %v4572 = vsub.f32 %v4524, -1.4999999
    %v4573 = vsub.f32 %v4525, -1.4999999
    %v4574 = vsub.f32 %v4526, -1.4999999
    %v4575 = vsub.f32 %v4527, -1.4999999
    %v4576 = vmul.f32 %v4568, %v4232
    %v4577 = vmul.f32 %v4569, %v4233
    %v4578 = vmul.f32 %v4570, %v4234
    %v4579 = vmul.f32 %v4571, %v4235
    %v4580 = vmul.f32 %v4572, %v4236
    %v4581 = vmul.f32 %v4573, %v4237
    %v4582 = vmul.f32 %v4574, %v4238
    %v4583 = vmul.f32 %v4575, %v4239
    %v4584 = vsub.f32 -0.16666666, %v4520
    %v4585 = vsub.f32 -0.16666666, %v4521
    %v4586 = vsub.f32 -0.16666666, %v4522
    %v4587 = vsub.f32 -0.16666666, %v4523
    %v4588 = vsub.f32 -0.16666666, %v4524
    %v4589 = vsub.f32 -0.16666666, %v4525
    %v4590 = vsub.f32 -0.16666666, %v4526
    %v4591 = vsub.f32 -0.16666666, %v4527
    %v4592 = vmul.f32 %v4584, %v4272
    %v4593 = vmul.f32 %v4585, %v4273
    %v4594 = vmul.f32 %v4586, %v4274
    %v4595 = vmul.f32 %v4587, %v4275
    %v4596 = vmul.f32 %v4588, %v4276
    %v4597 = vmul.f32 %v4589, %v4277
    %v4598 = vmul.f32 %v4590, %v4278
    %v4599 = vmul.f32 %v4591, %v4279
    %v4600 = vadd.f32 %v4576, %v4592
    %v4601 = vadd.f32 %v4577, %v4593
    %v4602 = vadd.f32 %v4578, %v4594
    %v4603 = vadd.f32 %v4579, %v4595
    %v4604 = vadd.f32 %v4580, %v4596
    %v4605 = vadd.f32 %v4581, %v4597
    %v4606 = vadd.f32 %v4582, %v4598
    %v4607 = vadd.f32 %v4583, %v4599
    %v4608 = vsub.f32 %v4520, -1.1666666
    %v4609 = vsub.f32 %v4521, -1.1666666
    %v4610 = vsub.f32 %v4522, -1.1666666
    %v4611 = vsub.f32 %v4523, -1.1666666
    %v4612 = vsub.f32 %v4524, -1.1666666
    %v4613 = vsub.f32 %v4525, -1.1666666
    %v4614 = vsub.f32 %v4526, -1.1666666
    %v4615 = vsub.f32 %v4527, -1.1666666
    %v4616 = vmul.f32 %v4608, %v4272
    %v4617 = vmul.f32 %v4609, %v4273
    %v4618 = vmul.f32 %v4610, %v4274
    %v4619 = vmul.f32 %v4611, %v4275
    %v4620 = vmul.f32 %v4612, %v4276
    %v4621 = vmul.f32 %v4613, %v4277
    %v4622 = vmul.f32 %v4614, %v4278
    %v4623 = vmul.f32 %v4615, %v4279
    %v4624 = vsub.f32 0.1666667, %v4520
    %v4625 = vsub.f32 0.1666667, %v4521
    %v4626 = vsub.f32 0.1666667, %v4522
    %v4627 = vsub.f32 0.1666667, %v4523
    %v4628 = vsub.f32 0.1666667, %v4524
    %v4629 = vsub.f32 0.1666667, %v4525
    %v4630 = vsub.f32 0.1666667, %v4526
    %v4631 = vsub.f32 0.1666667, %v4527
    %v4632 = vmul.f32 %v4624, %v4312
    %v4633 = vmul.f32 %v4625, %v4313
    %v4634 = vmul.f32 %v4626, %v4314
    %v4635 = vmul.f32 %v4627, %v4315
    %v4636 = vmul.f32 %v4628, %v4316
    %v4637 = vmul.f32 %v4629, %v4317
    %v4638 = vmul.f32 %v4630, %v4318
    %v4639 = vmul.f32 %v4631, %v4319
    %v4640 = vadd.f32 %v4616, %v4632
    %v4641 = vadd.f32 %v4617, %v4633
    %v4642 = vadd.f32 %v4618, %v4634
    %v4643 = vadd.f32 %v4619, %v4635
    %v4644 = vadd.f32 %v4620, %v4636
    %v4645 = vadd.f32 %v4621, %v4637
    %v4646 = vadd.f32 %v4622, %v4638
    %v4647 = vadd.f32 %v4623, %v4639
    %v4648 = vsub.f32 %v4520, -0.8333333
    %v4649 = vsub.f32 %v4521, -0.8333333
    %v4650 = vsub.f32 %v4522, -0.8333333
    %v4651 = vsub.f32 %v4523, -0.8333333
    %v4652 = vsub.f32 %v4524, -0.8333333
    %v4653 = vsub.f32 %v4525, -0.8333333
    %v4654 = vsub.f32 %v4526, -0.8333333
    %v4655 = vsub.f32 %v4527, -0.8333333
    %v4656 = vmul.f32 %v4648, %v4312
    %v4657 = vmul.f32 %v4649, %v4313
    %v4658 = vmul.f32 %v4650, %v4314
    %v4659 = vmul.f32 %v4651, %v4315
    %v4660 = vmul.f32 %v4652, %v4316
    %v4661 = vmul.f32 %v4653, %v4317
    %v4662 = vmul.f32 %v4654, %v4318
    %v4663 = vmul.f32 %v4655, %v4319
    %v4664 = vsub.f32 0.5, %v4520
    %v4665 = vsub.f32 0.5, %v4521
    %v4666 = vsub.f32 0.5, %v4522
    %v4667 = vsub.f32 0.5, %v4523
    %v4668 = vsub.f32 0.5, %v4524
    %v4669 = vsub.f32 0.5, %v4525
    %v4670 = vsub.f32 0.5, %v4526
    %v4671 = vsub.f32 0.5, %v4527
    %v4672 = vmul.f32 %v4664, %v4352
    %v4673 = vmul.f32 %v4665, %v4353
    %v4674 = vmul.f32 %v4666, %v4354
    %v4675 = vmul.f32 %v4667, %v4355
    %v4676 = vmul.f32 %v4668, %v4356
    %v4677 = vmul.f32 %v4669, %v4357
    %v4678 = vmul.f32 %v4670, %v4358
    %v4679 = vmul.f32 %v4671, %v4359
    %v4680 = vadd.f32 %v4656, %v4672
    %v4681 = vadd.f32 %v4657, %v4673
    %v4682 = vadd.f32 %v4658, %v4674
    %v4683 = vadd.f32 %v4659, %v4675
    %v4684 = vadd.f32 %v4660, %v4676
    %v4685 = vadd.f32 %v4661, %v4677
    %v4686 = vadd.f32 %v4662, %v4678
    %v4687 = vadd.f32 %v4663, %v4679
    %v4688 = vsub.f32 %v4520, -0.5
    %v4689 = vsub.f32 %v4521, -0.5
    %v4690 = vsub.f32 %v4522, -0.5
    %v4691 = vsub.f32 %v4523, -0.5
    %v4692 = vsub.f32 %v4524, -0.5
    %v4693 = vsub.f32 %v4525, -0.5
    %v4694 = vsub.f32 %v4526, -0.5
    %v4695 = vsub.f32 %v4527, -0.5
    %v4696 = vmul.f32 %v4688, %v4352
    %v4697 = vmul.f32 %v4689, %v4353
    %v4698 = vmul.f32 %v4690, %v4354
    %v4699 = vmul.f32 %v4691, %v4355
    %v4700 = vmul.f32 %v4692, %v4356
    %v4701 = vmul.f32 %v4693, %v4357
    %v4702 = vmul.f32 %v4694, %v4358
    %v4703 = vmul.f32 %v4695, %v4359
    %v4704 = vsub.f32 0.8333333, %v4520
    %v4705 = vsub.f32 0.8333333, %v4521
    %v4706 = vsub.f32 0.8333333, %v4522
    %v4707 = vsub.f32 0.8333333, %v4523
    %v4708 = vsub.f32 0.8333333, %v4524
    %v4709 = vsub.f32 0.8333333, %v4525
    %v4710 = vsub.f32 0.8333333, %v4526
    %v4711 = vsub.f32 0.8333333, %v4527
    %v4712 = vmul.f32 %v4704, %v4392
    %v4713 = vmul.f32 %v4705, %v4393
    %v4714 = vmul.f32 %v4706, %v4394
    %v4715 = vmul.f32 %v4707, %v4395
    %v4716 = vmul.f32 %v4708, %v4396
    %v4717 = vmul.f32 %v4709, %v4397
    %v4718 = vmul.f32 %v4710, %v4398
    %v4719 = vmul.f32 %v4711, %v4399
    %v4720 = vadd.f32 %v4696, %v4712
    %v4721 = vadd.f32 %v4697, %v4713
    %v4722 = vadd.f32 %v4698, %v4714
    %v4723 = vadd.f32 %v4699, %v4715
    %v4724 = vadd.f32 %v4700, %v4716
    %v4725 = vadd.f32 %v4701, %v4717
    %v4726 = vadd.f32 %v4702, %v4718
    %v4727 = vadd.f32 %v4703, %v4719
    %v4728 = vsub.f32 %v4520, -0.16666666
    %v4729 = vsub.f32 %v4521, -0.16666666
    %v4730 = vsub.f32 %v4522, -0.16666666
    %v4731 = vsub.f32 %v4523, -0.16666666
    %v4732 = vsub.f32 %v4524, -0.16666666
    %v4733 = vsub.f32 %v4525, -0.16666666
    %v4734 = vsub.f32 %v4526, -0.16666666
    %v4735 = vsub.f32 %v4527, -0.16666666
    %v4736 = vmul.f32 %v4728, %v4392
    %v4737 = vmul.f32 %v4729, %v4393
    %v4738 = vmul.f32 %v4730, %v4394
    %v4739 = vmul.f32 %v4731, %v4395
    %v4740 = vmul.f32 %v4732, %v4396
    %v4741 = vmul.f32 %v4733, %v4397
    %v4742 = vmul.f32 %v4734, %v4398
    %v4743 = vmul.f32 %v4735, %v4399
    %v4744 = vsub.f32 1.1666667, %v4520
    %v4745 = vsub.f32 1.1666667, %v4521
    %v4746 = vsub.f32 1.1666667, %v4522
    %v4747 = vsub.f32 1.1666667, %v4523
    %v4748 = vsub.f32 1.1666667, %v4524
    %v4749 = vsub.f32 1.1666667, %v4525
    %v4750 = vsub.f32 1.1666667, %v4526
    %v4751 = vsub.f32 1.1666667, %v4527
    %v4752 = vmul.f32 %v4744, %v4432
    %v4753 = vmul.f32 %v4745, %v4433
    %v4754 = vmul.f32 %v4746, %v4434
    %v4755 = vmul.f32 %v4747, %v4435
    %v4756 = vmul.f32 %v4748, %v4436
    %v4757 = vmul.f32 %v4749, %v4437
    %v4758 = vmul.f32 %v4750, %v4438
    %v4759 = vmul.f32 %v4751, %v4439
    %v4760 = vadd.f32 %v4736, %v4752
    %v4761 = vadd.f32 %v4737, %v4753
    %v4762 = vadd.f32 %v4738, %v4754
    %v4763 = vadd.f32 %v4739, %v4755
    %v4764 = vadd.f32 %v4740, %v4756
    %v4765 = vadd.f32 %v4741, %v4757
    %v4766 = vadd.f32 %v4742, %v4758
    %v4767 = vadd.f32 %v4743, %v4759
    %v4768 = vsub.f32 %v4520, 0.1666667
    %v4769 = vsub.f32 %v4521, 0.1666667
    %v4770 = vsub.f32 %v4522, 0.1666667
    %v4771 = vsub.f32 %v4523, 0.1666667
    %v4772 = vsub.f32 %v4524, 0.1666667
    %v4773 = vsub.f32 %v4525, 0.1666667
    %v4774 = vsub.f32 %v4526, 0.1666667
    %v4775 = vsub.f32 %v4527, 0.1666667
    %v4776 = vmul.f32 %v4768, %v4432
    %v4777 = vmul.f32 %v4769, %v4433
    %v4778 = vmul.f32 %v4770, %v4434
    %v4779 = vmul.f32 %v4771, %v4435
    %v4780 = vmul.f32 %v4772, %v4436
    %v4781 = vmul.f32 %v4773, %v4437
    %v4782 = vmul.f32 %v4774, %v4438
    %v4783 = vmul.f32 %v4775, %v4439
    %v4784 = vsub.f32 1.4999999, %v4520
    %v4785 = vsub.f32 1.4999999, %v4521
    %v4786 = vsub.f32 1.4999999, %v4522
    %v4787 = vsub.f32 1.4999999, %v4523
    %v4788 = vsub.f32 1.4999999, %v4524
    %v4789 = vsub.f32 1.4999999, %v4525
    %v4790 = vsub.f32 1.4999999, %v4526
    %v4791 = vsub.f32 1.4999999, %v4527
    %v4792 = vmul.f32 %v4784, %v4472
    %v4793 = vmul.f32 %v4785, %v4473
    %v4794 = vmul.f32 %v4786, %v4474
    %v4795 = vmul.f32 %v4787, %v4475
    %v4796 = vmul.f32 %v4788, %v4476
    %v4797 = vmul.f32 %v4789, %v4477
    %v4798 = vmul.f32 %v4790, %v4478
    %v4799 = vmul.f32 %v4791, %v4479
    %v4800 = vadd.f32 %v4776, %v4792
    %v4801 = vadd.f32 %v4777, %v4793
    %v4802 = vadd.f32 %v4778, %v4794
    %v4803 = vadd.f32 %v4779, %v4795
    %v4804 = vadd.f32 %v4780, %v4796
    %v4805 = vadd.f32 %v4781, %v4797
    %v4806 = vadd.f32 %v4782, %v4798
    %v4807 = vadd.f32 %v4783, %v4799
    %v4808 = vsub.f32 %v4520, 0.5
    %v4809 = vsub.f32 %v4521, 0.5
    %v4810 = vsub.f32 %v4522, 0.5
    %v4811 = vsub.f32 %v4523, 0.5
    %v4812 = vsub.f32 %v4524, 0.5
    %v4813 = vsub.f32 %v4525, 0.5
    %v4814 = vsub.f32 %v4526, 0.5
    %v4815 = vsub.f32 %v4527, 0.5
    %v4816 = vmul.f32 %v4808, %v4472
    %v4817 = vmul.f32 %v4809, %v4473
    %v4818 = vmul.f32 %v4810, %v4474
    %v4819 = vmul.f32 %v4811, %v4475
    %v4820 = vmul.f32 %v4812, %v4476
    %v4821 = vmul.f32 %v4813, %v4477
    %v4822 = vmul.f32 %v4814, %v4478
    %v4823 = vmul.f32 %v4815, %v4479
    %v4824 = vsub.f32 1.8333334, %v4520
    %v4825 = vsub.f32 1.8333334, %v4521
    %v4826 = vsub.f32 1.8333334, %v4522
    %v4827 = vsub.f32 1.8333334, %v4523
    %v4828 = vsub.f32 1.8333334, %v4524
    %v4829 = vsub.f32 1.8333334, %v4525
    %v4830 = vsub.f32 1.8333334, %v4526
    %v4831 = vsub.f32 1.8333334, %v4527
    %v4832 = vmul.f32 %v4824, %v4512
    %v4833 = vmul.f32 %v4825, %v4513
    %v4834 = vmul.f32 %v4826, %v4514
    %v4835 = vmul.f32 %v4827, %v4515
    %v4836 = vmul.f32 %v4828, %v4516
    %v4837 = vmul.f32 %v4829, %v4517
    %v4838 = vmul.f32 %v4830, %v4518
    %v4839 = vmul.f32 %v4831, %v4519
    %v4840 = vadd.f32 %v4816, %v4832
    %v4841 = vadd.f32 %v4817, %v4833
    %v4842 = vadd.f32 %v4818, %v4834
    %v4843 = vadd.f32 %v4819, %v4835
    %v4844 = vadd.f32 %v4820, %v4836
    %v4845 = vadd.f32 %v4821, %v4837
    %v4846 = vadd.f32 %v4822, %v4838
    %v4847 = vadd.f32 %v4823, %v4839
    %v4848 = vpack.c.bf16 %v3361, %v3360
    %v4849 = vpack.c.bf16 %v3363, %v3362
    %v4850 = vpack.c.bf16 %v3365, %v3364
    %v4851 = vpack.c.bf16 %v3367, %v3366
    %v4852 = vpack.c.bf16 %v4561, %v4560
    %v4853 = vpack.c.bf16 %v4563, %v4562
    %v4854 = vpack.c.bf16 %v4565, %v4564
    %v4855 = vpack.c.bf16 %v4567, %v4566
    %v4856 = vpack.c.bf16 %v4601, %v4600
    %v4857 = vpack.c.bf16 %v4603, %v4602
    %v4858 = vpack.c.bf16 %v4605, %v4604
    %v4859 = vpack.c.bf16 %v4607, %v4606
    %v4860 = vpack.c.bf16 %v4641, %v4640
    %v4861 = vpack.c.bf16 %v4643, %v4642
    %v4862 = vpack.c.bf16 %v4645, %v4644
    %v4863 = vpack.c.bf16 %v4647, %v4646
    %v4864 = vpack.c.bf16 %v4681, %v4680
    %v4865 = vpack.c.bf16 %v4683, %v4682
    %v4866 = vpack.c.bf16 %v4685, %v4684
    %v4867 = vpack.c.bf16 %v4687, %v4686
    %v4868 = vpack.c.bf16 %v4721, %v4720
    %v4869 = vpack.c.bf16 %v4723, %v4722
    %v4870 = vpack.c.bf16 %v4725, %v4724
    %v4871 = vpack.c.bf16 %v4727, %v4726
    %v4872 = vpack.c.bf16 %v4761, %v4760
    %v4873 = vpack.c.bf16 %v4763, %v4762
    %v4874 = vpack.c.bf16 %v4765, %v4764
    %v4875 = vpack.c.bf16 %v4767, %v4766
    %v4876 = vpack.c.bf16 %v4801, %v4800
    %v4877 = vpack.c.bf16 %v4803, %v4802
    %v4878 = vpack.c.bf16 %v4805, %v4804
    %v4879 = vpack.c.bf16 %v4807, %v4806
    %v4880 = vpack.c.bf16 %v4841, %v4840
    %v4881 = vpack.c.bf16 %v4843, %v4842
    %v4882 = vpack.c.bf16 %v4845, %v4844
    %v4883 = vpack.c.bf16 %v4847, %v4846
    %v4884 = vld [vmem:[%s4] sm:$0x1f]
    %4886 = vst [vmem:[#allocation1] ss:$9 sm:$0xff] %v4884
    %v4887 = vld [vmem:[#allocation1] sm:$0xff]
    %v4888 = vld [vmem:[#allocation1 + $0x9] sm:$0xff]
    %v4889 = vld [vmem:[#allocation1 + $0x12] sm:$0xff]
    %v4890 = vld [vmem:[#allocation1 + $0x1b] sm:$0xff]
    %v4891 = vld [vmem:[#allocation1 + $0x24] sm:$0xff]
    %v4896 = vsel %vm2092, %v4891, 0
    %4898 = vmatpush.bf16.msra.mxu0 %v4855
    %4899 = vmatpush.bf16.msra.mxu0 %v4854
    %4900 = vmatpush.bf16.msra.mxu0 %v4853
    %4901 = vmatpush.bf16.msra.mxu0 %v4852
    %4902 = vmatpush.bf16.msra.mxu0 %v4851
    %4903 = vmatpush.bf16.msra.mxu0 %v4850
    %4904 = vmatpush.bf16.msra.mxu0 %v4849
    %4905 = vmatpush.bf16.msra.mxu0 %v4848
    %4906 = vmatmul.bf16.gmra.mxu0 %v4887
    %v4907 = vpop.f32.mrf.mxu0
    %v4908 = vadd.f32 0.0, %v4907
    %v4909 = vpop.f32.mrf.mxu0
    %4910 = vdwg.mxu0
    %4911 = vmatpush.bf16.msra.mxu0 %v4863
    %4912 = vmatpush.bf16.msra.mxu0 %v4862
    %4913 = vmatpush.bf16.msra.mxu0 %v4861
    %4914 = vmatpush.bf16.msra.mxu0 %v4860
    %4915 = vmatpush.bf16.msra.mxu0 %v4859
    %4916 = vmatpush.bf16.msra.mxu0 %v4858
    %4917 = vmatpush.bf16.msra.mxu0 %v4857
    %4918 = vmatpush.bf16.msra.mxu0 %v4856
    %4919 = vmatmul.bf16.gmra.mxu0 %v4888
    %v4920 = vpop.f32.mrf.mxu0
    %v4921 = vadd.f32 %v4908, %v4920
    %v4922 = vpop.f32.mrf.mxu0
    %4923 = vdwg.mxu0
    %4924 = vmatpush.bf16.msra.mxu0 %v4871
    %4925 = vmatpush.bf16.msra.mxu0 %v4870
    %4926 = vmatpush.bf16.msra.mxu0 %v4869
    %4927 = vmatpush.bf16.msra.mxu0 %v4868
    %4928 = vmatpush.bf16.msra.mxu0 %v4867
    %4929 = vmatpush.bf16.msra.mxu0 %v4866
    %4930 = vmatpush.bf16.msra.mxu0 %v4865
    %4931 = vmatpush.bf16.msra.mxu0 %v4864
    %4932 = vmatmul.bf16.gmra.mxu0 %v4889
    %v4933 = vpop.f32.mrf.mxu0
    %v4934 = vadd.f32 %v4921, %v4933
    %v4935 = vpop.f32.mrf.mxu0
    %4936 = vdwg.mxu0
    %4937 = vmatpush.bf16.msra.mxu0 %v4879
    %4938 = vmatpush.bf16.msra.mxu0 %v4878
    %4939 = vmatpush.bf16.msra.mxu0 %v4877
    %4940 = vmatpush.bf16.msra.mxu0 %v4876
    %4941 = vmatpush.bf16.msra.mxu0 %v4875
    %4942 = vmatpush.bf16.msra.mxu0 %v4874
    %4943 = vmatpush.bf16.msra.mxu0 %v4873
    %4944 = vmatpush.bf16.msra.mxu0 %v4872
    %4945 = vmatmul.bf16.gmra.mxu0 %v4890
    %v4946 = vpop.f32.mrf.mxu0
    %v4947 = vadd.f32 %v4934, %v4946
    %v4948 = vpop.f32.mrf.mxu0
    %4949 = vdwg.mxu0
    %4950 = vmatpush.bf16.msra.mxu0 0
    %4951 = vmatpush.bf16.msra.mxu0 0
    %4952 = vmatpush.bf16.msra.mxu0 0
    %4953 = vmatpush.bf16.msra.mxu0 0
    %4954 = vmatpush.bf16.msra.mxu0 %v4883
    %4955 = vmatpush.bf16.msra.mxu0 %v4882
    %4956 = vmatpush.bf16.msra.mxu0 %v4881
    %4957 = vmatpush.bf16.msra.mxu0 %v4880
    %4958 = vmatmul.bf16.gmra.mxu0 %v4896
    %v4959 = vpop.f32.mrf.mxu0
    %v4960 = vadd.f32 %v4947, %v4959
    %v4961 = vpop.f32.mrf.mxu0
    %4962 = vdwg.mxu0
    %vm4963 = vcmask 24576
    %4964 = vst.msk [vmem:[#allocation8] sm:$0x1] %vm4963, %v4960
    // Predicated region
    $region34: #{kan_critic_forward.1} parent=1 // pred_check
      _
    $region35: #{kan_critic_forward.1} parent=1 // pred_check_branch
      %4966 = sbr.rel (0) target = $region37
    $region36: #{kan_critic_forward.1} parent=1 // pred_region
      %4968 = vsyncadd [#allocation4], 0
      %s4970 = sshll.u32 [#allocation8], 4
      %s4971 = int_to_ptr.vmem [resolvable:$true] %s4970
      %s4972 = sshll.u32 %s5, 4
      %s4973 = int_to_ptr.hbm [resolvable:$true] %s4972
      %4975 = dma.vmem_to_hbm [thread:$0]  %s4971, 16, %s4973, [#allocation4]
    $region37: #{kan_critic_forward.1} parent=1 // pred_fallthru
      _
    // Predicated region
    $region38: #{kan_critic_forward.1} parent=1 // pred_check
      _
    $region39: #{kan_critic_forward.1} parent=1 // pred_check_branch
      %4977 = sbr.rel (0) target = $region41
    $region40: #{kan_critic_forward.1} parent=1 // pred_region
      %4979 = dma.done [#allocation4], 16
    $region41: #{kan_critic_forward.1} parent=1 // pred_fallthru
      _
    %4980 = vsyncpa [#allocation3], 1
    %4981 = vsyncpa [#allocation6], 1
    %4982 = vsyncpa [#allocation4], 1

</llo_original>
